<compile_context>
chip_gen: v5e
topology: v5e:2x2
jax: 0.10.0
libtpu: 0.0.40
codegen_flags: <defaults>
</compile_context>

<pallas_src>
import math
from functools import partial

import jax
import jax.numpy as jnp
from jax import lax
from jax.experimental import pallas as pl
from jax.experimental.pallas import tpu as pltpu


def _encoder_layer_kernel(
    x_ref, pos_ref,
    wqk_ref, bqk_ref, wv_ref, bv_ref, wo_ref, bo_ref,
    w1_ref, b1_ref, w2_ref, b2_ref,
    g1_ref, be1_ref, g2_ref, be2_ref,
    o_ref,
    *, nhead: int, eps: float, compute_dtype,
):
    BT, S, E = x_ref.shape           # (batch_tile, S, E) block
    hd = E // nhead
    f32 = jnp.float32
    cdt = compute_dtype

    def mm(a, b):                    # standard matmul, MXU in `cdt`, f32 accumulation
        return jnp.dot(a.astype(cdt), b.astype(cdt), preferred_element_type=f32)

    def mm_bt(a, b):                 # A @ B.T without an explicit transpose
        return lax.dot_general(a.astype(cdt), b.astype(cdt),
                               dimension_numbers=(((1,), (1,)), ((), ())),
                               preferred_element_type=f32)

    # Collapse the batch tile into the row (sublane) axis: (BT, S, E) -> (BT*S, E).
    x = x_ref[...].reshape(BT * S, E)
    pos = pos_ref[...].reshape(BT * S, E)

    # ---- self-attention: q = k = src + pos, v = src ------------------------------------
    qk_in = x + pos
    qk = mm(qk_in, wqk_ref[...]) + bqk_ref[...]        # (R, 2E): [q | k], scale pre-folded
    v = mm(x, wv_ref[...]) + bv_ref[...]               # (R, E)

    attn_rows = []
    for b in range(BT):                                # static unroll over batch tile
        r0 = b * S
        acc = jnp.zeros((S, E), f32)                   # output-projected accumulator
        for h in range(nhead):                         # static unroll over heads
            c0 = h * hd
            qh = qk[r0:r0 + S, c0:c0 + hd]             # (S, hd)  (scale already applied)
            kh = qk[r0:r0 + S, E + c0:E + c0 + hd]     # (S, hd)
            vh = v[r0:r0 + S, c0:c0 + hd]              # (S, hd)

            s = mm_bt(qh, kh)                          # (S, S) scores, no k.T
            s = s - jnp.max(s, axis=-1, keepdims=True)
            p = jnp.exp(s)
            p = p * pl.reciprocal(jnp.sum(p, axis=-1, keepdims=True), approx=True)

            oh = mm(p, vh)                             # (S, hd)
            # Fold the output projection into the head loop: no lane-axis concat.
            acc = acc + mm(oh, wo_ref[c0:c0 + hd, :])  # (S, E)
        attn_rows.append(acc)
    attn = jnp.concatenate(attn_rows, axis=0) if BT > 1 else attn_rows[0]
    attn = attn + bo_ref[...]

    # ---- residual + LayerNorm1 (dropout1 = identity in eval) ---------------------------
    src = x + attn
    mu = jnp.mean(src, axis=-1, keepdims=True)
    var = jnp.mean(jnp.square(src - mu), axis=-1, keepdims=True)
    src = (src - mu) * lax.rsqrt(var + eps) * g1_ref[...] + be1_ref[...]

    # ---- feed-forward: linear1 -> relu -> linear2 (dropout = identity) -----------------
    h1 = jnp.maximum(mm(src, w1_ref[...]) + b1_ref[...], 0.0)
    ff = mm(h1, w2_ref[...]) + b2_ref[...]

    # ---- residual + LayerNorm2 (dropout2 = identity) -----------------------------------
    src2 = src + ff
    mu2 = jnp.mean(src2, axis=-1, keepdims=True)
    var2 = jnp.mean(jnp.square(src2 - mu2), axis=-1, keepdims=True)
    out = (src2 - mu2) * lax.rsqrt(var2 + eps) * g2_ref[...] + be2_ref[...]

    o_ref[...] = out.reshape(BT, S, E).astype(o_ref.dtype)


def _vmem_limit_bytes(S, E, dff, batch_tile, compute_dtype):
    """Explicit scoped-VMEM limit sized from the actual footprint (with headroom)."""
    wsz = jnp.dtype(compute_dtype).itemsize
    act = batch_tile * S * E * 4                                   # one f32 activation block
    weights = (2 * E * E + E * E + E * E + E * dff + dff * E) * wsz
    biases = (2 * E + E + E + dff + E + 4 * E) * 4
    scratch = batch_tile * (2 * S * S * 4 + 2 * S * dff * 4 + 6 * S * E * 4)
    est = 3 * act * 2 + 2 * (weights + biases) + scratch + (4 << 20)
    # Clamp to the smallest physical VMEM across targets (v7x: 64 MiB).
    return int(min(max(est, 16 << 20), 64 << 20))


def transformer_encoder_layer(src, pos, params, *, nhead,
                              compute_dtype=jnp.bfloat16,
                              batch_tile=None, eps=1e-5):
    """src, pos: (S, N, E) (PyTorch seq-first convention). Returns (S, N, E) float32."""
    S, N, E = src.shape
    assert E % nhead == 0, "d_model must be divisible by nhead"
    hd = E // nhead
    dff = params["w1"].shape[0]
    f32 = jnp.float32

    if batch_tile is None:
        # Amortize per-grid-step overhead when the per-batch (S, E) tile is small.
        # (On v7x prefer grid >= 2 so both TensorCores stay busy.)
        batch_tile = 1
        for d in range(N, 0, -1):
            if N % d == 0 and d * S * E * 4 <= (1 << 20):
                batch_tile = d
                break
    assert N % batch_tile == 0

    # ---- pack weights: PyTorch layout -> row-major y = x @ W_T + b ----------------------
    ipw = params["in_proj_w"].astype(f32)
    ipb = params["in_proj_b"].astype(f32)
    scale = 1.0 / math.sqrt(hd)
    wq_t = ipw[:E].T * scale                      # fold 1/sqrt(hd) into Wq / bq
    wk_t = ipw[E:2 * E].T
    wqk_t = jnp.concatenate([wq_t, wk_t], axis=1).astype(compute_dtype)      # (E, 2E)
    bqk = jnp.concatenate([ipb[:E] * scale, ipb[E:2 * E]]).reshape(1, 2 * E)  # f32
    wv_t = ipw[2 * E:].T.astype(compute_dtype)                                # (E, E)
    bv = ipb[2 * E:].reshape(1, E)
    wo_t = params["out_proj_w"].astype(f32).T.astype(compute_dtype)           # (E, E)
    bo = params["out_proj_b"].astype(f32).reshape(1, E)
    w1_t = params["w1"].astype(f32).T.astype(compute_dtype)                   # (E, dff)
    b1 = params["b1"].astype(f32).reshape(1, dff)
    w2_t = params["w2"].astype(f32).T.astype(compute_dtype)                   # (dff, E)
    b2 = params["b2"].astype(f32).reshape(1, E)
    g1 = params["ln1_g"].astype(f32).reshape(1, E)
    be1 = params["ln1_b"].astype(f32).reshape(1, E)
    g2 = params["ln2_g"].astype(f32).reshape(1, E)
    be2 = params["ln2_b"].astype(f32).reshape(1, E)

    # (S, N, E) -> (N, S, E): one real HBM transpose each way (kept so each grid step sees
    # contiguous (S, E) tiles; the dead identity transpose of the old return path is gone).
    x = jnp.transpose(src, (1, 0, 2)).astype(f32)
    p = jnp.transpose(pos, (1, 0, 2)).astype(f32)

    io_spec = pl.BlockSpec((batch_tile, S, E), lambda b: (b, 0, 0))

    def shared_spec(shape, single_buffer):
        if single_buffer:
            # Weight block index never changes -> one VMEM buffer is enough (halves
            # weight residency; important on v7x's 64 MiB VMEM at production E/dff).
            return pl.BlockSpec(shape, lambda b: (0,) * len(shape),
                                pipeline_mode=pl.Buffered(1))
        return pl.BlockSpec(shape, lambda b: (0,) * len(shape))

    operands = (x, p, wqk_t, bqk, wv_t, bv, wo_t, bo,
                w1_t, b1, w2_t, b2, g1, be1, g2, be2)

    def run(single_buffer_weights):
        in_specs = [io_spec, io_spec] + [
            shared_spec(op.shape, single_buffer_weights) for op in operands[2:]
        ]
        return pl.pallas_call(
            partial(_encoder_layer_kernel, nhead=nhead, eps=eps,
                    compute_dtype=compute_dtype),
            out_shape=jax.ShapeDtypeStruct((N, S, E), f32),
            grid_spec=pltpu.PrefetchScalarGridSpec(
                num_scalar_prefetch=0,
                grid=(N // batch_tile,),
                in_specs=in_specs,
                out_specs=io_spec,
            ),
            compiler_params=pltpu.CompilerParams(
                dimension_semantics=("parallel",),
                vmem_limit_bytes=_vmem_limit_bytes(S, E, dff, batch_tile, compute_dtype),
            ),
        )(*operands)

    if hasattr(pl, "Buffered"):
        try:
            out = run(True)
        except Exception:
            # Older Pallas without single-buffered pipeline_mode support: fall back to
            # the default double-buffered weight blocks (correctness identical).
            out = run(False)
    else:
        out = run(False)

    return jnp.transpose(out, (1, 0, 2))            # (N, S, E) -> (S, N, E)


def init_params(key, d_model, nhead, dim_feedforward):
    """PyTorch-layout parameters for TransformerEncoderLayer."""
    E, dff = d_model, dim_feedforward
    ks = jax.random.split(key, 12)
    return {
        "in_proj_w": jax.random.normal(ks[0], (3 * E, E), jnp.float32) * 0.05,
        "in_proj_b": jax.random.normal(ks[1], (3 * E,), jnp.float32) * 0.05,
        "out_proj_w": jax.random.normal(ks[2], (E, E), jnp.float32) * 0.05,
        "out_proj_b": jax.random.normal(ks[3], (E,), jnp.float32) * 0.05,
        "w1": jax.random.normal(ks[4], (dff, E), jnp.float32) * 0.05,
        "b1": jax.random.normal(ks[5], (dff,), jnp.float32) * 0.05,
        "w2": jax.random.normal(ks[6], (E, dff), jnp.float32) * 0.05,
        "b2": jax.random.normal(ks[7], (E,), jnp.float32) * 0.05,
        "ln1_g": 1.0 + 0.1 * jax.random.normal(ks[8], (E,), jnp.float32),
        "ln1_b": 0.1 * jax.random.normal(ks[9], (E,), jnp.float32),
        "ln2_g": 1.0 + 0.1 * jax.random.normal(ks[10], (E,), jnp.float32),
        "ln2_b": 0.1 * jax.random.normal(ks[11], (E,), jnp.float32),
    }


def reference_jax(src, pos, params, *, nhead, eps=1e-5):
    """Pure-JAX f32 reference of forward_post in eval mode (mirrors PyTorch math)."""
    S, N, E = src.shape
    hd = E // nhead
    ipw, ipb = params["in_proj_w"], params["in_proj_b"]
    wq, wk, wv = ipw[:E], ipw[E:2 * E], ipw[2 * E:]
    bq, bk, bv = ipb[:E], ipb[E:2 * E], ipb[2 * E:]
    x = jnp.transpose(src, (1, 0, 2))
    p = jnp.transpose(pos, (1, 0, 2))
    qk_in = x + p
    q = qk_in @ wq.T + bq
    k = qk_in @ wk.T + bk
    v = x @ wv.T + bv
    q = q.reshape(N, S, nhead, hd).transpose(0, 2, 1, 3) / math.sqrt(hd)
    k = k.reshape(N, S, nhead, hd).transpose(0, 2, 1, 3)
    v = v.reshape(N, S, nhead, hd).transpose(0, 2, 1, 3)
    s = jnp.einsum("nhqd,nhkd->nhqk", q, k)
    a = jax.nn.softmax(s, axis=-1)
    o = jnp.einsum("nhqk,nhkd->nhqd", a, v).transpose(0, 2, 1, 3).reshape(N, S, E)
    attn = o @ params["out_proj_w"].T + params["out_proj_b"]
    src1 = x + attn
    mu = src1.mean(-1, keepdims=True)
    var = ((src1 - mu) ** 2).mean(-1, keepdims=True)
    src1 = (src1 - mu) * jax.lax.rsqrt(var + eps) * params["ln1_g"] + params["ln1_b"]
    h1 = jnp.maximum(src1 @ params["w1"].T + params["b1"], 0.0)
    ff = h1 @ params["w2"].T + params["b2"]
    src2 = src1 + ff
    mu2 = src2.mean(-1, keepdims=True)
    var2 = ((src2 - mu2) ** 2).mean(-1, keepdims=True)
    out = (src2 - mu2) * jax.lax.rsqrt(var2 + eps) * params["ln2_g"] + params["ln2_b"]
    return out.transpose(1, 0, 2)


if __name__ == "__main__":
    S, N, E = 8, 2, 128          # seq len, batch, d_model (lane-dense last dim)
    NHEAD, DFF = 4, 256

    key = jax.random.PRNGKey(0)
    k_src, k_pos, k_par = jax.random.split(key, 3)
    src = jax.random.normal(k_src, (S, N, E), jnp.float32)
    pos = jax.random.normal(k_pos, (S, N, E), jnp.float32)
    params = init_params(k_par, E, NHEAD, DFF)

    ref = reference_jax(src, pos, params, nhead=NHEAD)

    # Exact-arithmetic path (f32 at the MXU), one batch element per grid step.
    out_f32 = transformer_encoder_layer(src, pos, params, nhead=NHEAD,
                                        compute_dtype=jnp.float32, batch_tile=1)
    out_f32 = jax.block_until_ready(out_f32)
    assert out_f32.shape == (S, N, E)
    err32 = float(jnp.max(jnp.abs(out_f32 - ref)))
    assert err32 < 5e-3, f"f32 path mismatch vs JAX reference: {err32}"

    # bf16-at-MXU path, batch-tiled (both batch elements in one grid step).
    out_bf16 = transformer_encoder_layer(src, pos, params, nhead=NHEAD,
                                         compute_dtype=jnp.bfloat16, batch_tile=2)
    out_bf16 = jax.block_until_ready(out_bf16)
    assert out_bf16.shape == (S, N, E)
    # Loose bound: expected bf16 quantization error only; the tight check is the f32 path.
    err16 = float(jnp.max(jnp.abs(out_bf16 - ref)))
    assert err16 < 1e-1, f"bf16 path mismatch vs JAX reference: {err16}"

    print("KERNEL_OK")
</pallas_src>

<mosaic_0001>
module attributes {stable_mosaic.version = 11 : i64} {
  func.func @_encoder_layer_kernel(%arg0: i32, %arg1: memref<1x8x128xf32, #tpu.memory_space<vmem>>, %arg2: memref<1x8x128xf32, #tpu.memory_space<vmem>>, %arg3: memref<128x256xf32, #tpu.memory_space<vmem>>, %arg4: memref<1x256xf32, #tpu.memory_space<vmem>>, %arg5: memref<128x128xf32, #tpu.memory_space<vmem>>, %arg6: memref<1x128xf32, #tpu.memory_space<vmem>>, %arg7: memref<128x128xf32, #tpu.memory_space<vmem>>, %arg8: memref<1x128xf32, #tpu.memory_space<vmem>>, %arg9: memref<128x256xf32, #tpu.memory_space<vmem>>, %arg10: memref<1x256xf32, #tpu.memory_space<vmem>>, %arg11: memref<256x128xf32, #tpu.memory_space<vmem>>, %arg12: memref<1x128xf32, #tpu.memory_space<vmem>>, %arg13: memref<1x128xf32, #tpu.memory_space<vmem>>, %arg14: memref<1x128xf32, #tpu.memory_space<vmem>>, %arg15: memref<1x128xf32, #tpu.memory_space<vmem>>, %arg16: memref<1x128xf32, #tpu.memory_space<vmem>>, %arg17: memref<1x8x128xf32, #tpu.memory_space<vmem>>) attributes {dimension_semantics = [#tpu.dimension_semantics<parallel>], iteration_bounds = array<i64: 2>, scalar_prefetch = 0 : i64, scratch_operands = 0 : i64, tpu.core_type = #tpu.core_type<tc>, window_params = [{transform_indices = @transform_0, window_bounds = array<i64: 1, 8, 128>}, {transform_indices = @transform_1, window_bounds = array<i64: 1, 8, 128>}, {pipeline_mode = #tpu.pipeline_mode<synchronous>, transform_indices = @transform_2, window_bounds = array<i64: 128, 256>}, {pipeline_mode = #tpu.pipeline_mode<synchronous>, transform_indices = @transform_3, window_bounds = array<i64: 1, 256>}, {pipeline_mode = #tpu.pipeline_mode<synchronous>, transform_indices = @transform_4, window_bounds = array<i64: 128, 128>}, {pipeline_mode = #tpu.pipeline_mode<synchronous>, transform_indices = @transform_5, window_bounds = array<i64: 1, 128>}, {pipeline_mode = #tpu.pipeline_mode<synchronous>, transform_indices = @transform_6, window_bounds = array<i64: 128, 128>}, {pipeline_mode = #tpu.pipeline_mode<synchronous>, transform_indices = @transform_7, window_bounds = array<i64: 1, 128>}, {pipeline_mode = #tpu.pipeline_mode<synchronous>, transform_indices = @transform_8, window_bounds = array<i64: 128, 256>}, {pipeline_mode = #tpu.pipeline_mode<synchronous>, transform_indices = @transform_9, window_bounds = array<i64: 1, 256>}, {pipeline_mode = #tpu.pipeline_mode<synchronous>, transform_indices = @transform_10, window_bounds = array<i64: 256, 128>}, {pipeline_mode = #tpu.pipeline_mode<synchronous>, transform_indices = @transform_11, window_bounds = array<i64: 1, 128>}, {pipeline_mode = #tpu.pipeline_mode<synchronous>, transform_indices = @transform_12, window_bounds = array<i64: 1, 128>}, {pipeline_mode = #tpu.pipeline_mode<synchronous>, transform_indices = @transform_13, window_bounds = array<i64: 1, 128>}, {pipeline_mode = #tpu.pipeline_mode<synchronous>, transform_indices = @transform_14, window_bounds = array<i64: 1, 128>}, {pipeline_mode = #tpu.pipeline_mode<synchronous>, transform_indices = @transform_15, window_bounds = array<i64: 1, 128>}, {transform_indices = @transform_16, window_bounds = array<i64: 1, 8, 128>}]} {
    %c0 = arith.constant 0 : index
    %c0_0 = arith.constant 0 : index
    %c0_1 = arith.constant 0 : index
    %0 = vector.load %arg1[%c0, %c0_0, %c0_1] : memref<1x8x128xf32, #tpu.memory_space<vmem>>, vector<1x8x128xf32>
    %1 = vector.shape_cast %0 : vector<1x8x128xf32> to vector<8x128xf32>
    %c0_2 = arith.constant 0 : index
    %c0_3 = arith.constant 0 : index
    %c0_4 = arith.constant 0 : index
    %2 = vector.load %arg2[%c0_2, %c0_3, %c0_4] : memref<1x8x128xf32, #tpu.memory_space<vmem>>, vector<1x8x128xf32>
    %3 = vector.shape_cast %2 : vector<1x8x128xf32> to vector<8x128xf32>
    %4 = arith.addf %1, %3 : vector<8x128xf32>
    %c0_5 = arith.constant 0 : index
    %c0_6 = arith.constant 0 : index
    %5 = vector.load %arg3[%c0_5, %c0_6] : memref<128x256xf32, #tpu.memory_space<vmem>>, vector<128x256xf32>
    %cst = arith.constant dense<0.000000e+00> : vector<8x256xf32>
    %6 = tpu.matmul %4, %5, %cst {dimension_numbers = #tpu.dot_dimension_numbers<[1], [0], [0], [1], [0, 0, 1, 1], [], []>} : vector<8x128xf32>, vector<128x256xf32>, vector<8x256xf32> -> vector<8x256xf32>
    %c0_7 = arith.constant 0 : index
    %c0_8 = arith.constant 0 : index
    %7 = vector.load %arg4[%c0_7, %c0_8] : memref<1x256xf32, #tpu.memory_space<vmem>>, vector<1x256xf32>
    %8 = vector.broadcast %7 : vector<1x256xf32> to vector<8x256xf32>
    %9 = arith.addf %6, %8 : vector<8x256xf32>
    %c0_9 = arith.constant 0 : index
    %c0_10 = arith.constant 0 : index
    %10 = vector.load %arg5[%c0_9, %c0_10] : memref<128x128xf32, #tpu.memory_space<vmem>>, vector<128x128xf32>
    %cst_11 = arith.constant dense<0.000000e+00> : vector<8x128xf32>
    %11 = tpu.matmul %1, %10, %cst_11 {dimension_numbers = #tpu.dot_dimension_numbers<[1], [0], [0], [1], [0, 0, 1, 1], [], []>} : vector<8x128xf32>, vector<128x128xf32>, vector<8x128xf32> -> vector<8x128xf32>
    %c0_12 = arith.constant 0 : index
    %c0_13 = arith.constant 0 : index
    %12 = vector.load %arg6[%c0_12, %c0_13] : memref<1x128xf32, #tpu.memory_space<vmem>>, vector<1x128xf32>
    %13 = vector.broadcast %12 : vector<1x128xf32> to vector<8x128xf32>
    %14 = arith.addf %11, %13 : vector<8x128xf32>
    %cst_14 = arith.constant 0.000000e+00 : f32
    %15 = vector.broadcast %cst_14 : f32 to vector<8x128xf32>
    %16 = vector.extract_strided_slice %9 {offsets = [0, 0], sizes = [8, 32], strides = [1, 1]} : vector<8x256xf32> to vector<8x32xf32>
    %17 = vector.extract_strided_slice %9 {offsets = [0, 128], sizes = [8, 32], strides = [1, 1]} : vector<8x256xf32> to vector<8x32xf32>
    %18 = vector.extract_strided_slice %14 {offsets = [0, 0], sizes = [8, 32], strides = [1, 1]} : vector<8x128xf32> to vector<8x32xf32>
    %cst_15 = arith.constant dense<0.000000e+00> : vector<8x8xf32>
    %19 = tpu.matmul %16, %17, %cst_15 {dimension_numbers = #tpu.dot_dimension_numbers<[1], [1], [0], [0], [0, 0, 1, 0], [], []>} : vector<8x32xf32>, vector<8x32xf32>, vector<8x8xf32> -> vector<8x8xf32>
    %cst_16 = arith.constant dense<0xFF800000> : vector<8xf32>
    %20 = vector.multi_reduction <maximumf>, %19, %cst_16 [1] : vector<8x8xf32> to vector<8xf32>
    %21 = vector.shape_cast %20 : vector<8xf32> to vector<8x1xf32>
    %22 = vector.broadcast %21 : vector<8x1xf32> to vector<8x8xf32>
    %23 = arith.subf %19, %22 : vector<8x8xf32>
    %24 = math.exp %23 : vector<8x8xf32>
    %cst_17 = arith.constant dense<0.000000e+00> : vector<8xf32>
    %25 = vector.multi_reduction <add>, %24, %cst_17 [1] : vector<8x8xf32> to vector<8xf32>
    %26 = vector.shape_cast %25 : vector<8xf32> to vector<8x1xf32>
    %27 = tpu.reciprocal %26 {approx = true} : vector<8x1xf32> -> vector<8x1xf32>
    %28 = vector.broadcast %27 : vector<8x1xf32> to vector<8x8xf32>
    %29 = arith.mulf %24, %28 : vector<8x8xf32>
    %cst_18 = arith.constant dense<0.000000e+00> : vector<8x32xf32>
    %30 = tpu.matmul %29, %18, %cst_18 {dimension_numbers = #tpu.dot_dimension_numbers<[1], [0], [0], [1], [0, 0, 1, 1], [], []>} : vector<8x8xf32>, vector<8x32xf32>, vector<8x32xf32> -> vector<8x32xf32>
    %c0_19 = arith.constant 0 : index
    %c0_20 = arith.constant 0 : index
    %31 = vector.load %arg7[%c0_19, %c0_20] : memref<128x128xf32, #tpu.memory_space<vmem>>, vector<32x128xf32>
    %cst_21 = arith.constant dense<0.000000e+00> : vector<8x128xf32>
    %32 = tpu.matmul %30, %31, %cst_21 {dimension_numbers = #tpu.dot_dimension_numbers<[1], [0], [0], [1], [0, 0, 1, 1], [], []>} : vector<8x32xf32>, vector<32x128xf32>, vector<8x128xf32> -> vector<8x128xf32>
    %33 = arith.addf %15, %32 : vector<8x128xf32>
    %34 = vector.extract_strided_slice %9 {offsets = [0, 32], sizes = [8, 32], strides = [1, 1]} : vector<8x256xf32> to vector<8x32xf32>
    %35 = vector.extract_strided_slice %9 {offsets = [0, 160], sizes = [8, 32], strides = [1, 1]} : vector<8x256xf32> to vector<8x32xf32>
    %36 = vector.extract_strided_slice %14 {offsets = [0, 32], sizes = [8, 32], strides = [1, 1]} : vector<8x128xf32> to vector<8x32xf32>
    %cst_22 = arith.constant dense<0.000000e+00> : vector<8x8xf32>
    %37 = tpu.matmul %34, %35, %cst_22 {dimension_numbers = #tpu.dot_dimension_numbers<[1], [1], [0], [0], [0, 0, 1, 0], [], []>} : vector<8x32xf32>, vector<8x32xf32>, vector<8x8xf32> -> vector<8x8xf32>
    %cst_23 = arith.constant dense<0xFF800000> : vector<8xf32>
    %38 = vector.multi_reduction <maximumf>, %37, %cst_23 [1] : vector<8x8xf32> to vector<8xf32>
    %39 = vector.shape_cast %38 : vector<8xf32> to vector<8x1xf32>
    %40 = vector.broadcast %39 : vector<8x1xf32> to vector<8x8xf32>
    %41 = arith.subf %37, %40 : vector<8x8xf32>
    %42 = math.exp %41 : vector<8x8xf32>
    %cst_24 = arith.constant dense<0.000000e+00> : vector<8xf32>
    %43 = vector.multi_reduction <add>, %42, %cst_24 [1] : vector<8x8xf32> to vector<8xf32>
    %44 = vector.shape_cast %43 : vector<8xf32> to vector<8x1xf32>
    %45 = tpu.reciprocal %44 {approx = true} : vector<8x1xf32> -> vector<8x1xf32>
    %46 = vector.broadcast %45 : vector<8x1xf32> to vector<8x8xf32>
    %47 = arith.mulf %42, %46 : vector<8x8xf32>
    %cst_25 = arith.constant dense<0.000000e+00> : vector<8x32xf32>
    %48 = tpu.matmul %47, %36, %cst_25 {dimension_numbers = #tpu.dot_dimension_numbers<[1], [0], [0], [1], [0, 0, 1, 1], [], []>} : vector<8x8xf32>, vector<8x32xf32>, vector<8x32xf32> -> vector<8x32xf32>
    %c32 = arith.constant 32 : index
    %c0_26 = arith.constant 0 : index
    %49 = vector.load %arg7[%c32, %c0_26] : memref<128x128xf32, #tpu.memory_space<vmem>>, vector<32x128xf32>
    %cst_27 = arith.constant dense<0.000000e+00> : vector<8x128xf32>
    %50 = tpu.matmul %48, %49, %cst_27 {dimension_numbers = #tpu.dot_dimension_numbers<[1], [0], [0], [1], [0, 0, 1, 1], [], []>} : vector<8x32xf32>, vector<32x128xf32>, vector<8x128xf32> -> vector<8x128xf32>
    %51 = arith.addf %33, %50 : vector<8x128xf32>
    %52 = vector.extract_strided_slice %9 {offsets = [0, 64], sizes = [8, 32], strides = [1, 1]} : vector<8x256xf32> to vector<8x32xf32>
    %53 = vector.extract_strided_slice %9 {offsets = [0, 192], sizes = [8, 32], strides = [1, 1]} : vector<8x256xf32> to vector<8x32xf32>
    %54 = vector.extract_strided_slice %14 {offsets = [0, 64], sizes = [8, 32], strides = [1, 1]} : vector<8x128xf32> to vector<8x32xf32>
    %cst_28 = arith.constant dense<0.000000e+00> : vector<8x8xf32>
    %55 = tpu.matmul %52, %53, %cst_28 {dimension_numbers = #tpu.dot_dimension_numbers<[1], [1], [0], [0], [0, 0, 1, 0], [], []>} : vector<8x32xf32>, vector<8x32xf32>, vector<8x8xf32> -> vector<8x8xf32>
    %cst_29 = arith.constant dense<0xFF800000> : vector<8xf32>
    %56 = vector.multi_reduction <maximumf>, %55, %cst_29 [1] : vector<8x8xf32> to vector<8xf32>
    %57 = vector.shape_cast %56 : vector<8xf32> to vector<8x1xf32>
    %58 = vector.broadcast %57 : vector<8x1xf32> to vector<8x8xf32>
    %59 = arith.subf %55, %58 : vector<8x8xf32>
    %60 = math.exp %59 : vector<8x8xf32>
    %cst_30 = arith.constant dense<0.000000e+00> : vector<8xf32>
    %61 = vector.multi_reduction <add>, %60, %cst_30 [1] : vector<8x8xf32> to vector<8xf32>
    %62 = vector.shape_cast %61 : vector<8xf32> to vector<8x1xf32>
    %63 = tpu.reciprocal %62 {approx = true} : vector<8x1xf32> -> vector<8x1xf32>
    %64 = vector.broadcast %63 : vector<8x1xf32> to vector<8x8xf32>
    %65 = arith.mulf %60, %64 : vector<8x8xf32>
    %cst_31 = arith.constant dense<0.000000e+00> : vector<8x32xf32>
    %66 = tpu.matmul %65, %54, %cst_31 {dimension_numbers = #tpu.dot_dimension_numbers<[1], [0], [0], [1], [0, 0, 1, 1], [], []>} : vector<8x8xf32>, vector<8x32xf32>, vector<8x32xf32> -> vector<8x32xf32>
    %c64 = arith.constant 64 : index
    %c0_32 = arith.constant 0 : index
    %67 = vector.load %arg7[%c64, %c0_32] : memref<128x128xf32, #tpu.memory_space<vmem>>, vector<32x128xf32>
    %cst_33 = arith.constant dense<0.000000e+00> : vector<8x128xf32>
    %68 = tpu.matmul %66, %67, %cst_33 {dimension_numbers = #tpu.dot_dimension_numbers<[1], [0], [0], [1], [0, 0, 1, 1], [], []>} : vector<8x32xf32>, vector<32x128xf32>, vector<8x128xf32> -> vector<8x128xf32>
    %69 = arith.addf %51, %68 : vector<8x128xf32>
    %70 = vector.extract_strided_slice %9 {offsets = [0, 96], sizes = [8, 32], strides = [1, 1]} : vector<8x256xf32> to vector<8x32xf32>
    %71 = vector.extract_strided_slice %9 {offsets = [0, 224], sizes = [8, 32], strides = [1, 1]} : vector<8x256xf32> to vector<8x32xf32>
    %72 = vector.extract_strided_slice %14 {offsets = [0, 96], sizes = [8, 32], strides = [1, 1]} : vector<8x128xf32> to vector<8x32xf32>
    %cst_34 = arith.constant dense<0.000000e+00> : vector<8x8xf32>
    %73 = tpu.matmul %70, %71, %cst_34 {dimension_numbers = #tpu.dot_dimension_numbers<[1], [1], [0], [0], [0, 0, 1, 0], [], []>} : vector<8x32xf32>, vector<8x32xf32>, vector<8x8xf32> -> vector<8x8xf32>
    %cst_35 = arith.constant dense<0xFF800000> : vector<8xf32>
    %74 = vector.multi_reduction <maximumf>, %73, %cst_35 [1] : vector<8x8xf32> to vector<8xf32>
    %75 = vector.shape_cast %74 : vector<8xf32> to vector<8x1xf32>
    %76 = vector.broadcast %75 : vector<8x1xf32> to vector<8x8xf32>
    %77 = arith.subf %73, %76 : vector<8x8xf32>
    %78 = math.exp %77 : vector<8x8xf32>
    %cst_36 = arith.constant dense<0.000000e+00> : vector<8xf32>
    %79 = vector.multi_reduction <add>, %78, %cst_36 [1] : vector<8x8xf32> to vector<8xf32>
    %80 = vector.shape_cast %79 : vector<8xf32> to vector<8x1xf32>
    %81 = tpu.reciprocal %80 {approx = true} : vector<8x1xf32> -> vector<8x1xf32>
    %82 = vector.broadcast %81 : vector<8x1xf32> to vector<8x8xf32>
    %83 = arith.mulf %78, %82 : vector<8x8xf32>
    %cst_37 = arith.constant dense<0.000000e+00> : vector<8x32xf32>
    %84 = tpu.matmul %83, %72, %cst_37 {dimension_numbers = #tpu.dot_dimension_numbers<[1], [0], [0], [1], [0, 0, 1, 1], [], []>} : vector<8x8xf32>, vector<8x32xf32>, vector<8x32xf32> -> vector<8x32xf32>
    %c96 = arith.constant 96 : index
    %c0_38 = arith.constant 0 : index
    %85 = vector.load %arg7[%c96, %c0_38] : memref<128x128xf32, #tpu.memory_space<vmem>>, vector<32x128xf32>
    %cst_39 = arith.constant dense<0.000000e+00> : vector<8x128xf32>
    %86 = tpu.matmul %84, %85, %cst_39 {dimension_numbers = #tpu.dot_dimension_numbers<[1], [0], [0], [1], [0, 0, 1, 1], [], []>} : vector<8x32xf32>, vector<32x128xf32>, vector<8x128xf32> -> vector<8x128xf32>
    %87 = arith.addf %69, %86 : vector<8x128xf32>
    %c0_40 = arith.constant 0 : index
    %c0_41 = arith.constant 0 : index
    %88 = vector.load %arg8[%c0_40, %c0_41] : memref<1x128xf32, #tpu.memory_space<vmem>>, vector<1x128xf32>
    %89 = vector.broadcast %88 : vector<1x128xf32> to vector<8x128xf32>
    %90 = arith.addf %87, %89 : vector<8x128xf32>
    %91 = arith.addf %1, %90 : vector<8x128xf32>
    %cst_42 = arith.constant dense<0.000000e+00> : vector<8xf32>
    %92 = vector.multi_reduction <add>, %91, %cst_42 [1] : vector<8x128xf32> to vector<8xf32>
    %93 = vector.shape_cast %92 : vector<8xf32> to vector<8x1xf32>
    %cst_43 = arith.constant 1.280000e+02 : f32
    %94 = vector.broadcast %cst_43 : f32 to vector<8x1xf32>
    %95 = arith.divf %93, %94 : vector<8x1xf32>
    %96 = vector.broadcast %95 : vector<8x1xf32> to vector<8x128xf32>
    %97 = arith.subf %91, %96 : vector<8x128xf32>
    %98 = arith.mulf %97, %97 : vector<8x128xf32>
    %cst_44 = arith.constant dense<0.000000e+00> : vector<8xf32>
    %99 = vector.multi_reduction <add>, %98, %cst_44 [1] : vector<8x128xf32> to vector<8xf32>
    %100 = vector.shape_cast %99 : vector<8xf32> to vector<8x1xf32>
    %cst_45 = arith.constant 1.280000e+02 : f32
    %101 = vector.broadcast %cst_45 : f32 to vector<8x1xf32>
    %102 = arith.divf %100, %101 : vector<8x1xf32>
    %103 = vector.broadcast %95 : vector<8x1xf32> to vector<8x128xf32>
    %104 = arith.subf %91, %103 : vector<8x128xf32>
    %cst_46 = arith.constant 9.99999974E-6 : f32
    %105 = vector.broadcast %cst_46 : f32 to vector<8x1xf32>
    %106 = arith.addf %102, %105 : vector<8x1xf32>
    %107 = math.rsqrt %106 : vector<8x1xf32>
    %108 = vector.broadcast %107 : vector<8x1xf32> to vector<8x128xf32>
    %109 = arith.mulf %104, %108 : vector<8x128xf32>
    %c0_47 = arith.constant 0 : index
    %c0_48 = arith.constant 0 : index
    %110 = vector.load %arg13[%c0_47, %c0_48] : memref<1x128xf32, #tpu.memory_space<vmem>>, vector<1x128xf32>
    %111 = vector.broadcast %110 : vector<1x128xf32> to vector<8x128xf32>
    %112 = arith.mulf %109, %111 : vector<8x128xf32>
    %c0_49 = arith.constant 0 : index
    %c0_50 = arith.constant 0 : index
    %113 = vector.load %arg14[%c0_49, %c0_50] : memref<1x128xf32, #tpu.memory_space<vmem>>, vector<1x128xf32>
    %114 = vector.broadcast %113 : vector<1x128xf32> to vector<8x128xf32>
    %115 = arith.addf %112, %114 : vector<8x128xf32>
    %c0_51 = arith.constant 0 : index
    %c0_52 = arith.constant 0 : index
    %116 = vector.load %arg9[%c0_51, %c0_52] : memref<128x256xf32, #tpu.memory_space<vmem>>, vector<128x256xf32>
    %cst_53 = arith.constant dense<0.000000e+00> : vector<8x256xf32>
    %117 = tpu.matmul %115, %116, %cst_53 {dimension_numbers = #tpu.dot_dimension_numbers<[1], [0], [0], [1], [0, 0, 1, 1], [], []>} : vector<8x128xf32>, vector<128x256xf32>, vector<8x256xf32> -> vector<8x256xf32>
    %c0_54 = arith.constant 0 : index
    %c0_55 = arith.constant 0 : index
    %118 = vector.load %arg10[%c0_54, %c0_55] : memref<1x256xf32, #tpu.memory_space<vmem>>, vector<1x256xf32>
    %119 = vector.broadcast %118 : vector<1x256xf32> to vector<8x256xf32>
    %120 = arith.addf %117, %119 : vector<8x256xf32>
    %cst_56 = arith.constant 0.000000e+00 : f32
    %121 = vector.broadcast %cst_56 : f32 to vector<8x256xf32>
    %122 = arith.maximumf %120, %121 : vector<8x256xf32>
    %c0_57 = arith.constant 0 : index
    %c0_58 = arith.constant 0 : index
    %123 = vector.load %arg11[%c0_57, %c0_58] : memref<256x128xf32, #tpu.memory_space<vmem>>, vector<256x128xf32>
    %cst_59 = arith.constant dense<0.000000e+00> : vector<8x128xf32>
    %124 = tpu.matmul %122, %123, %cst_59 {dimension_numbers = #tpu.dot_dimension_numbers<[1], [0], [0], [1], [0, 0, 1, 1], [], []>} : vector<8x256xf32>, vector<256x128xf32>, vector<8x128xf32> -> vector<8x128xf32>
    %c0_60 = arith.constant 0 : index
    %c0_61 = arith.constant 0 : index
    %125 = vector.load %arg12[%c0_60, %c0_61] : memref<1x128xf32, #tpu.memory_space<vmem>>, vector<1x128xf32>
    %126 = vector.broadcast %125 : vector<1x128xf32> to vector<8x128xf32>
    %127 = arith.addf %124, %126 : vector<8x128xf32>
    %128 = arith.addf %115, %127 : vector<8x128xf32>
    %cst_62 = arith.constant dense<0.000000e+00> : vector<8xf32>
    %129 = vector.multi_reduction <add>, %128, %cst_62 [1] : vector<8x128xf32> to vector<8xf32>
    %130 = vector.shape_cast %129 : vector<8xf32> to vector<8x1xf32>
    %cst_63 = arith.constant 1.280000e+02 : f32
    %131 = vector.broadcast %cst_63 : f32 to vector<8x1xf32>
    %132 = arith.divf %130, %131 : vector<8x1xf32>
    %133 = vector.broadcast %132 : vector<8x1xf32> to vector<8x128xf32>
    %134 = arith.subf %128, %133 : vector<8x128xf32>
    %135 = arith.mulf %134, %134 : vector<8x128xf32>
    %cst_64 = arith.constant dense<0.000000e+00> : vector<8xf32>
    %136 = vector.multi_reduction <add>, %135, %cst_64 [1] : vector<8x128xf32> to vector<8xf32>
    %137 = vector.shape_cast %136 : vector<8xf32> to vector<8x1xf32>
    %cst_65 = arith.constant 1.280000e+02 : f32
    %138 = vector.broadcast %cst_65 : f32 to vector<8x1xf32>
    %139 = arith.divf %137, %138 : vector<8x1xf32>
    %140 = vector.broadcast %132 : vector<8x1xf32> to vector<8x128xf32>
    %141 = arith.subf %128, %140 : vector<8x128xf32>
    %cst_66 = arith.constant 9.99999974E-6 : f32
    %142 = vector.broadcast %cst_66 : f32 to vector<8x1xf32>
    %143 = arith.addf %139, %142 : vector<8x1xf32>
    %144 = math.rsqrt %143 : vector<8x1xf32>
    %145 = vector.broadcast %144 : vector<8x1xf32> to vector<8x128xf32>
    %146 = arith.mulf %141, %145 : vector<8x128xf32>
    %c0_67 = arith.constant 0 : index
    %c0_68 = arith.constant 0 : index
    %147 = vector.load %arg15[%c0_67, %c0_68] : memref<1x128xf32, #tpu.memory_space<vmem>>, vector<1x128xf32>
    %148 = vector.broadcast %147 : vector<1x128xf32> to vector<8x128xf32>
    %149 = arith.mulf %146, %148 : vector<8x128xf32>
    %c0_69 = arith.constant 0 : index
    %c0_70 = arith.constant 0 : index
    %150 = vector.load %arg16[%c0_69, %c0_70] : memref<1x128xf32, #tpu.memory_space<vmem>>, vector<1x128xf32>
    %151 = vector.broadcast %150 : vector<1x128xf32> to vector<8x128xf32>
    %152 = arith.addf %149, %151 : vector<8x128xf32>
    %153 = vector.shape_cast %152 : vector<8x128xf32> to vector<1x8x128xf32>
    %c0_71 = arith.constant 0 : index
    %c0_72 = arith.constant 0 : index
    %c0_73 = arith.constant 0 : index
    %154 = vector.load %arg17[%c0_71, %c0_72, %c0_73] : memref<1x8x128xf32, #tpu.memory_space<vmem>>, vector<1x8x128xf32>
    tpu.vector_store %arg17[%c0_71, %c0_72, %c0_73], %153 {strides = array<i32>} : memref<1x8x128xf32, #tpu.memory_space<vmem>>, vector<1x8x128xf32>,
    return
  }
  func.func @transform_0(%arg0: i32) -> (i32, i32, i32) {
    %c0_i32 = arith.constant 0 : i32
    %c0_i32_0 = arith.constant 0 : i32
    %c0_i32_1 = arith.constant 0 : i32
    return %arg0, %c0_i32, %c0_i32_0 : i32, i32, i32
  }
  func.func @transform_1(%arg0: i32) -> (i32, i32, i32) {
    %c0_i32 = arith.constant 0 : i32
    %c0_i32_0 = arith.constant 0 : i32
    %c0_i32_1 = arith.constant 0 : i32
    return %arg0, %c0_i32, %c0_i32_0 : i32, i32, i32
  }
  func.func @transform_2(%arg0: i32) -> (i32, i32) {
    %c0_i32 = arith.constant 0 : i32
    %c0_i32_0 = arith.constant 0 : i32
    %c0_i32_1 = arith.constant 0 : i32
    return %c0_i32, %c0_i32_0 : i32, i32
  }
  func.func @transform_3(%arg0: i32) -> (i32, i32) {
    %c0_i32 = arith.constant 0 : i32
    %c0_i32_0 = arith.constant 0 : i32
    %c0_i32_1 = arith.constant 0 : i32
    return %c0_i32, %c0_i32_0 : i32, i32
  }
  func.func @transform_4(%arg0: i32) -> (i32, i32) {
    %c0_i32 = arith.constant 0 : i32
    %c0_i32_0 = arith.constant 0 : i32
    %c0_i32_1 = arith.constant 0 : i32
    return %c0_i32, %c0_i32_0 : i32, i32
  }
  func.func @transform_5(%arg0: i32) -> (i32, i32) {
    %c0_i32 = arith.constant 0 : i32
    %c0_i32_0 = arith.constant 0 : i32
    %c0_i32_1 = arith.constant 0 : i32
    return %c0_i32, %c0_i32_0 : i32, i32
  }
  func.func @transform_6(%arg0: i32) -> (i32, i32) {
    %c0_i32 = arith.constant 0 : i32
    %c0_i32_0 = arith.constant 0 : i32
    %c0_i32_1 = arith.constant 0 : i32
    return %c0_i32, %c0_i32_0 : i32, i32
  }
  func.func @transform_7(%arg0: i32) -> (i32, i32) {
    %c0_i32 = arith.constant 0 : i32
    %c0_i32_0 = arith.constant 0 : i32
    %c0_i32_1 = arith.constant 0 : i32
    return %c0_i32, %c0_i32_0 : i32, i32
  }
  func.func @transform_8(%arg0: i32) -> (i32, i32) {
    %c0_i32 = arith.constant 0 : i32
    %c0_i32_0 = arith.constant 0 : i32
    %c0_i32_1 = arith.constant 0 : i32
    return %c0_i32, %c0_i32_0 : i32, i32
  }
  func.func @transform_9(%arg0: i32) -> (i32, i32) {
    %c0_i32 = arith.constant 0 : i32
    %c0_i32_0 = arith.constant 0 : i32
    %c0_i32_1 = arith.constant 0 : i32
    return %c0_i32, %c0_i32_0 : i32, i32
  }
  func.func @transform_10(%arg0: i32) -> (i32, i32) {
    %c0_i32 = arith.constant 0 : i32
    %c0_i32_0 = arith.constant 0 : i32
    %c0_i32_1 = arith.constant 0 : i32
    return %c0_i32, %c0_i32_0 : i32, i32
  }
  func.func @transform_11(%arg0: i32) -> (i32, i32) {
    %c0_i32 = arith.constant 0 : i32
    %c0_i32_0 = arith.constant 0 : i32
    %c0_i32_1 = arith.constant 0 : i32
    return %c0_i32, %c0_i32_0 : i32, i32
  }
  func.func @transform_12(%arg0: i32) -> (i32, i32) {
    %c0_i32 = arith.constant 0 : i32
    %c0_i32_0 = arith.constant 0 : i32
    %c0_i32_1 = arith.constant 0 : i32
    return %c0_i32, %c0_i32_0 : i32, i32
  }
  func.func @transform_13(%arg0: i32) -> (i32, i32) {
    %c0_i32 = arith.constant 0 : i32
    %c0_i32_0 = arith.constant 0 : i32
    %c0_i32_1 = arith.constant 0 : i32
    return %c0_i32, %c0_i32_0 : i32, i32
  }
  func.func @transform_14(%arg0: i32) -> (i32, i32) {
    %c0_i32 = arith.constant 0 : i32
    %c0_i32_0 = arith.constant 0 : i32
    %c0_i32_1 = arith.constant 0 : i32
    return %c0_i32, %c0_i32_0 : i32, i32
  }
  func.func @transform_15(%arg0: i32) -> (i32, i32) {
    %c0_i32 = arith.constant 0 : i32
    %c0_i32_0 = arith.constant 0 : i32
    %c0_i32_1 = arith.constant 0 : i32
    return %c0_i32, %c0_i32_0 : i32, i32
  }
  func.func @transform_16(%arg0: i32) -> (i32, i32, i32) {
    %c0_i32 = arith.constant 0 : i32
    %c0_i32_0 = arith.constant 0 : i32
    %c0_i32_1 = arith.constant 0 : i32
    return %arg0, %c0_i32, %c0_i32_0 : i32, i32, i32
  }
}

module attributes {stable_mosaic.version = 11 : i64} {
  func.func @_encoder_layer_kernel(%arg0: i32, %arg1: memref<1x8x128xf32, #tpu.memory_space<vmem>>, %arg2: memref<1x8x128xf32, #tpu.memory_space<vmem>>, %arg3: memref<128x256xf32, #tpu.memory_space<vmem>>, %arg4: memref<1x256xf32, #tpu.memory_space<vmem>>, %arg5: memref<128x128xf32, #tpu.memory_space<vmem>>, %arg6: memref<1x128xf32, #tpu.memory_space<vmem>>, %arg7: memref<128x128xf32, #tpu.memory_space<vmem>>, %arg8: memref<1x128xf32, #tpu.memory_space<vmem>>, %arg9: memref<128x256xf32, #tpu.memory_space<vmem>>, %arg10: memref<1x256xf32, #tpu.memory_space<vmem>>, %arg11: memref<256x128xf32, #tpu.memory_space<vmem>>, %arg12: memref<1x128xf32, #tpu.memory_space<vmem>>, %arg13: memref<1x128xf32, #tpu.memory_space<vmem>>, %arg14: memref<1x128xf32, #tpu.memory_space<vmem>>, %arg15: memref<1x128xf32, #tpu.memory_space<vmem>>, %arg16: memref<1x128xf32, #tpu.memory_space<vmem>>, %arg17: memref<1x8x128xf32, #tpu.memory_space<vmem>>) attributes {dimension_semantics = [#tpu.dimension_semantics<parallel>], iteration_bounds = array<i64: 2>, scalar_prefetch = 0 : i64, scratch_operands = 0 : i64, tpu.core_type = #tpu.core_type<tc>, window_params = [{transform_indices = @transform_0, window_bounds = array<i64: 1, 8, 128>}, {transform_indices = @transform_1, window_bounds = array<i64: 1, 8, 128>}, {pipeline_mode = #tpu.pipeline_mode<synchronous>, transform_indices = @transform_2, window_bounds = array<i64: 128, 256>}, {pipeline_mode = #tpu.pipeline_mode<synchronous>, transform_indices = @transform_3, window_bounds = array<i64: 1, 256>}, {pipeline_mode = #tpu.pipeline_mode<synchronous>, transform_indices = @transform_4, window_bounds = array<i64: 128, 128>}, {pipeline_mode = #tpu.pipeline_mode<synchronous>, transform_indices = @transform_5, window_bounds = array<i64: 1, 128>}, {pipeline_mode = #tpu.pipeline_mode<synchronous>, transform_indices = @transform_6, window_bounds = array<i64: 128, 128>}, {pipeline_mode = #tpu.pipeline_mode<synchronous>, transform_indices = @transform_7, window_bounds = array<i64: 1, 128>}, {pipeline_mode = #tpu.pipeline_mode<synchronous>, transform_indices = @transform_8, window_bounds = array<i64: 128, 256>}, {pipeline_mode = #tpu.pipeline_mode<synchronous>, transform_indices = @transform_9, window_bounds = array<i64: 1, 256>}, {pipeline_mode = #tpu.pipeline_mode<synchronous>, transform_indices = @transform_10, window_bounds = array<i64: 256, 128>}, {pipeline_mode = #tpu.pipeline_mode<synchronous>, transform_indices = @transform_11, window_bounds = array<i64: 1, 128>}, {pipeline_mode = #tpu.pipeline_mode<synchronous>, transform_indices = @transform_12, window_bounds = array<i64: 1, 128>}, {pipeline_mode = #tpu.pipeline_mode<synchronous>, transform_indices = @transform_13, window_bounds = array<i64: 1, 128>}, {pipeline_mode = #tpu.pipeline_mode<synchronous>, transform_indices = @transform_14, window_bounds = array<i64: 1, 128>}, {pipeline_mode = #tpu.pipeline_mode<synchronous>, transform_indices = @transform_15, window_bounds = array<i64: 1, 128>}, {transform_indices = @transform_16, window_bounds = array<i64: 1, 8, 128>}]} {
    %c0 = arith.constant 0 : index
    %c0_0 = arith.constant 0 : index
    %c0_1 = arith.constant 0 : index
    %0 = vector.load %arg1[%c0, %c0_0, %c0_1] : memref<1x8x128xf32, #tpu.memory_space<vmem>>, vector<1x8x128xf32>
    %1 = vector.shape_cast %0 : vector<1x8x128xf32> to vector<8x128xf32>
    %c0_2 = arith.constant 0 : index
    %c0_3 = arith.constant 0 : index
    %c0_4 = arith.constant 0 : index
    %2 = vector.load %arg2[%c0_2, %c0_3, %c0_4] : memref<1x8x128xf32, #tpu.memory_space<vmem>>, vector<1x8x128xf32>
    %3 = vector.shape_cast %2 : vector<1x8x128xf32> to vector<8x128xf32>
    %4 = arith.addf %1, %3 : vector<8x128xf32>
    %c0_5 = arith.constant 0 : index
    %c0_6 = arith.constant 0 : index
    %5 = vector.load %arg3[%c0_5, %c0_6] : memref<128x256xf32, #tpu.memory_space<vmem>>, vector<128x256xf32>
    %cst = arith.constant dense<0.000000e+00> : vector<8x256xf32>
    %6 = tpu.matmul %4, %5, %cst {dimension_numbers = #tpu.dot_dimension_numbers<[1], [0], [0], [1], [0, 0, 1, 1], [], []>} : vector<8x128xf32>, vector<128x256xf32>, vector<8x256xf32> -> vector<8x256xf32>
    %c0_7 = arith.constant 0 : index
    %c0_8 = arith.constant 0 : index
    %7 = vector.load %arg4[%c0_7, %c0_8] : memref<1x256xf32, #tpu.memory_space<vmem>>, vector<1x256xf32>
    %8 = vector.broadcast %7 : vector<1x256xf32> to vector<8x256xf32>
    %9 = arith.addf %6, %8 : vector<8x256xf32>
    %c0_9 = arith.constant 0 : index
    %c0_10 = arith.constant 0 : index
    %10 = vector.load %arg5[%c0_9, %c0_10] : memref<128x128xf32, #tpu.memory_space<vmem>>, vector<128x128xf32>
    %cst_11 = arith.constant dense<0.000000e+00> : vector<8x128xf32>
    %11 = tpu.matmul %1, %10, %cst_11 {dimension_numbers = #tpu.dot_dimension_numbers<[1], [0], [0], [1], [0, 0, 1, 1], [], []>} : vector<8x128xf32>, vector<128x128xf32>, vector<8x128xf32> -> vector<8x128xf32>
    %c0_12 = arith.constant 0 : index
    %c0_13 = arith.constant 0 : index
    %12 = vector.load %arg6[%c0_12, %c0_13] : memref<1x128xf32, #tpu.memory_space<vmem>>, vector<1x128xf32>
    %13 = vector.broadcast %12 : vector<1x128xf32> to vector<8x128xf32>
    %14 = arith.addf %11, %13 : vector<8x128xf32>
    %cst_14 = arith.constant 0.000000e+00 : f32
    %15 = vector.broadcast %cst_14 : f32 to vector<8x128xf32>
    %16 = vector.extract_strided_slice %9 {offsets = [0, 0], sizes = [8, 32], strides = [1, 1]} : vector<8x256xf32> to vector<8x32xf32>
    %17 = vector.extract_strided_slice %9 {offsets = [0, 128], sizes = [8, 32], strides = [1, 1]} : vector<8x256xf32> to vector<8x32xf32>
    %18 = vector.extract_strided_slice %14 {offsets = [0, 0], sizes = [8, 32], strides = [1, 1]} : vector<8x128xf32> to vector<8x32xf32>
    %cst_15 = arith.constant dense<0.000000e+00> : vector<8x8xf32>
    %19 = tpu.matmul %16, %17, %cst_15 {dimension_numbers = #tpu.dot_dimension_numbers<[1], [1], [0], [0], [0, 0, 1, 0], [], []>} : vector<8x32xf32>, vector<8x32xf32>, vector<8x8xf32> -> vector<8x8xf32>
    %cst_16 = arith.constant dense<0xFF800000> : vector<8xf32>
    %20 = vector.multi_reduction <maximumf>, %19, %cst_16 [1] : vector<8x8xf32> to vector<8xf32>
    %21 = vector.shape_cast %20 : vector<8xf32> to vector<8x1xf32>
    %22 = vector.broadcast %21 : vector<8x1xf32> to vector<8x8xf32>
    %23 = arith.subf %19, %22 : vector<8x8xf32>
    %24 = math.exp %23 : vector<8x8xf32>
    %cst_17 = arith.constant dense<0.000000e+00> : vector<8xf32>
    %25 = vector.multi_reduction <add>, %24, %cst_17 [1] : vector<8x8xf32> to vector<8xf32>
    %26 = vector.shape_cast %25 : vector<8xf32> to vector<8x1xf32>
    %27 = tpu.reciprocal %26 {approx = true} : vector<8x1xf32> -> vector<8x1xf32>
    %28 = vector.broadcast %27 : vector<8x1xf32> to vector<8x8xf32>
    %29 = arith.mulf %24, %28 : vector<8x8xf32>
    %cst_18 = arith.constant dense<0.000000e+00> : vector<8x32xf32>
    %30 = tpu.matmul %29, %18, %cst_18 {dimension_numbers = #tpu.dot_dimension_numbers<[1], [0], [0], [1], [0, 0, 1, 1], [], []>} : vector<8x8xf32>, vector<8x32xf32>, vector<8x32xf32> -> vector<8x32xf32>
    %c0_19 = arith.constant 0 : index
    %c0_20 = arith.constant 0 : index
    %31 = vector.load %arg7[%c0_19, %c0_20] : memref<128x128xf32, #tpu.memory_space<vmem>>, vector<32x128xf32>
    %cst_21 = arith.constant dense<0.000000e+00> : vector<8x128xf32>
    %32 = tpu.matmul %30, %31, %cst_21 {dimension_numbers = #tpu.dot_dimension_numbers<[1], [0], [0], [1], [0, 0, 1, 1], [], []>} : vector<8x32xf32>, vector<32x128xf32>, vector<8x128xf32> -> vector<8x128xf32>
    %33 = arith.addf %15, %32 : vector<8x128xf32>
    %34 = vector.extract_strided_slice %9 {offsets = [0, 32], sizes = [8, 32], strides = [1, 1]} : vector<8x256xf32> to vector<8x32xf32>
    %35 = vector.extract_strided_slice %9 {offsets = [0, 160], sizes = [8, 32], strides = [1, 1]} : vector<8x256xf32> to vector<8x32xf32>
    %36 = vector.extract_strided_slice %14 {offsets = [0, 32], sizes = [8, 32], strides = [1, 1]} : vector<8x128xf32> to vector<8x32xf32>
    %cst_22 = arith.constant dense<0.000000e+00> : vector<8x8xf32>
    %37 = tpu.matmul %34, %35, %cst_22 {dimension_numbers = #tpu.dot_dimension_numbers<[1], [1], [0], [0], [0, 0, 1, 0], [], []>} : vector<8x32xf32>, vector<8x32xf32>, vector<8x8xf32> -> vector<8x8xf32>
    %cst_23 = arith.constant dense<0xFF800000> : vector<8xf32>
    %38 = vector.multi_reduction <maximumf>, %37, %cst_23 [1] : vector<8x8xf32> to vector<8xf32>
    %39 = vector.shape_cast %38 : vector<8xf32> to vector<8x1xf32>
    %40 = vector.broadcast %39 : vector<8x1xf32> to vector<8x8xf32>
    %41 = arith.subf %37, %40 : vector<8x8xf32>
    %42 = math.exp %41 : vector<8x8xf32>
    %cst_24 = arith.constant dense<0.000000e+00> : vector<8xf32>
    %43 = vector.multi_reduction <add>, %42, %cst_24 [1] : vector<8x8xf32> to vector<8xf32>
    %44 = vector.shape_cast %43 : vector<8xf32> to vector<8x1xf32>
    %45 = tpu.reciprocal %44 {approx = true} : vector<8x1xf32> -> vector<8x1xf32>
    %46 = vector.broadcast %45 : vector<8x1xf32> to vector<8x8xf32>
    %47 = arith.mulf %42, %46 : vector<8x8xf32>
    %cst_25 = arith.constant dense<0.000000e+00> : vector<8x32xf32>
    %48 = tpu.matmul %47, %36, %cst_25 {dimension_numbers = #tpu.dot_dimension_numbers<[1], [0], [0], [1], [0, 0, 1, 1], [], []>} : vector<8x8xf32>, vector<8x32xf32>, vector<8x32xf32> -> vector<8x32xf32>
    %c32 = arith.constant 32 : index
    %c0_26 = arith.constant 0 : index
    %49 = vector.load %arg7[%c32, %c0_26] : memref<128x128xf32, #tpu.memory_space<vmem>>, vector<32x128xf32>
    %cst_27 = arith.constant dense<0.000000e+00> : vector<8x128xf32>
    %50 = tpu.matmul %48, %49, %cst_27 {dimension_numbers = #tpu.dot_dimension_numbers<[1], [0], [0], [1], [0, 0, 1, 1], [], []>} : vector<8x32xf32>, vector<32x128xf32>, vector<8x128xf32> -> vector<8x128xf32>
    %51 = arith.addf %33, %50 : vector<8x128xf32>
    %52 = vector.extract_strided_slice %9 {offsets = [0, 64], sizes = [8, 32], strides = [1, 1]} : vector<8x256xf32> to vector<8x32xf32>
    %53 = vector.extract_strided_slice %9 {offsets = [0, 192], sizes = [8, 32], strides = [1, 1]} : vector<8x256xf32> to vector<8x32xf32>
    %54 = vector.extract_strided_slice %14 {offsets = [0, 64], sizes = [8, 32], strides = [1, 1]} : vector<8x128xf32> to vector<8x32xf32>
    %cst_28 = arith.constant dense<0.000000e+00> : vector<8x8xf32>
    %55 = tpu.matmul %52, %53, %cst_28 {dimension_numbers = #tpu.dot_dimension_numbers<[1], [1], [0], [0], [0, 0, 1, 0], [], []>} : vector<8x32xf32>, vector<8x32xf32>, vector<8x8xf32> -> vector<8x8xf32>
    %cst_29 = arith.constant dense<0xFF800000> : vector<8xf32>
    %56 = vector.multi_reduction <maximumf>, %55, %cst_29 [1] : vector<8x8xf32> to vector<8xf32>
    %57 = vector.shape_cast %56 : vector<8xf32> to vector<8x1xf32>
    %58 = vector.broadcast %57 : vector<8x1xf32> to vector<8x8xf32>
    %59 = arith.subf %55, %58 : vector<8x8xf32>
    %60 = math.exp %59 : vector<8x8xf32>
    %cst_30 = arith.constant dense<0.000000e+00> : vector<8xf32>
    %61 = vector.multi_reduction <add>, %60, %cst_30 [1] : vector<8x8xf32> to vector<8xf32>
    %62 = vector.shape_cast %61 : vector<8xf32> to vector<8x1xf32>
    %63 = tpu.reciprocal %62 {approx = true} : vector<8x1xf32> -> vector<8x1xf32>
    %64 = vector.broadcast %63 : vector<8x1xf32> to vector<8x8xf32>
    %65 = arith.mulf %60, %64 : vector<8x8xf32>
    %cst_31 = arith.constant dense<0.000000e+00> : vector<8x32xf32>
    %66 = tpu.matmul %65, %54, %cst_31 {dimension_numbers = #tpu.dot_dimension_numbers<[1], [0], [0], [1], [0, 0, 1, 1], [], []>} : vector<8x8xf32>, vector<8x32xf32>, vector<8x32xf32> -> vector<8x32xf32>
    %c64 = arith.constant 64 : index
    %c0_32 = arith.constant 0 : index
    %67 = vector.load %arg7[%c64, %c0_32] : memref<128x128xf32, #tpu.memory_space<vmem>>, vector<32x128xf32>
    %cst_33 = arith.constant dense<0.000000e+00> : vector<8x128xf32>
    %68 = tpu.matmul %66, %67, %cst_33 {dimension_numbers = #tpu.dot_dimension_numbers<[1], [0], [0], [1], [0, 0, 1, 1], [], []>} : vector<8x32xf32>, vector<32x128xf32>, vector<8x128xf32> -> vector<8x128xf32>
    %69 = arith.addf %51, %68 : vector<8x128xf32>
    %70 = vector.extract_strided_slice %9 {offsets = [0, 96], sizes = [8, 32], strides = [1, 1]} : vector<8x256xf32> to vector<8x32xf32>
    %71 = vector.extract_strided_slice %9 {offsets = [0, 224], sizes = [8, 32], strides = [1, 1]} : vector<8x256xf32> to vector<8x32xf32>
    %72 = vector.extract_strided_slice %14 {offsets = [0, 96], sizes = [8, 32], strides = [1, 1]} : vector<8x128xf32> to vector<8x32xf32>
    %cst_34 = arith.constant dense<0.000000e+00> : vector<8x8xf32>
    %73 = tpu.matmul %70, %71, %cst_34 {dimension_numbers = #tpu.dot_dimension_numbers<[1], [1], [0], [0], [0, 0, 1, 0], [], []>} : vector<8x32xf32>, vector<8x32xf32>, vector<8x8xf32> -> vector<8x8xf32>
    %cst_35 = arith.constant dense<0xFF800000> : vector<8xf32>
    %74 = vector.multi_reduction <maximumf>, %73, %cst_35 [1] : vector<8x8xf32> to vector<8xf32>
    %75 = vector.shape_cast %74 : vector<8xf32> to vector<8x1xf32>
    %76 = vector.broadcast %75 : vector<8x1xf32> to vector<8x8xf32>
    %77 = arith.subf %73, %76 : vector<8x8xf32>
    %78 = math.exp %77 : vector<8x8xf32>
    %cst_36 = arith.constant dense<0.000000e+00> : vector<8xf32>
    %79 = vector.multi_reduction <add>, %78, %cst_36 [1] : vector<8x8xf32> to vector<8xf32>
    %80 = vector.shape_cast %79 : vector<8xf32> to vector<8x1xf32>
    %81 = tpu.reciprocal %80 {approx = true} : vector<8x1xf32> -> vector<8x1xf32>
    %82 = vector.broadcast %81 : vector<8x1xf32> to vector<8x8xf32>
    %83 = arith.mulf %78, %82 : vector<8x8xf32>
    %cst_37 = arith.constant dense<0.000000e+00> : vector<8x32xf32>
    %84 = tpu.matmul %83, %72, %cst_37 {dimension_numbers = #tpu.dot_dimension_numbers<[1], [0], [0], [1], [0, 0, 1, 1], [], []>} : vector<8x8xf32>, vector<8x32xf32>, vector<8x32xf32> -> vector<8x32xf32>
    %c96 = arith.constant 96 : index
    %c0_38 = arith.constant 0 : index
    %85 = vector.load %arg7[%c96, %c0_38] : memref<128x128xf32, #tpu.memory_space<vmem>>, vector<32x128xf32>
    %cst_39 = arith.constant dense<0.000000e+00> : vector<8x128xf32>
    %86 = tpu.matmul %84, %85, %cst_39 {dimension_numbers = #tpu.dot_dimension_numbers<[1], [0], [0], [1], [0, 0, 1, 1], [], []>} : vector<8x32xf32>, vector<32x128xf32>, vector<8x128xf32> -> vector<8x128xf32>
    %87 = arith.addf %69, %86 : vector<8x128xf32>
    %c0_40 = arith.constant 0 : index
    %c0_41 = arith.constant 0 : index
    %88 = vector.load %arg8[%c0_40, %c0_41] : memref<1x128xf32, #tpu.memory_space<vmem>>, vector<1x128xf32>
    %89 = vector.broadcast %88 : vector<1x128xf32> to vector<8x128xf32>
    %90 = arith.addf %87, %89 : vector<8x128xf32>
    %91 = arith.addf %1, %90 : vector<8x128xf32>
    %cst_42 = arith.constant dense<0.000000e+00> : vector<8xf32>
    %92 = vector.multi_reduction <add>, %91, %cst_42 [1] : vector<8x128xf32> to vector<8xf32>
    %93 = vector.shape_cast %92 : vector<8xf32> to vector<8x1xf32>
    %cst_43 = arith.constant 1.280000e+02 : f32
    %94 = vector.broadcast %cst_43 : f32 to vector<8x1xf32>
    %95 = arith.divf %93, %94 : vector<8x1xf32>
    %96 = vector.broadcast %95 : vector<8x1xf32> to vector<8x128xf32>
    %97 = arith.subf %91, %96 : vector<8x128xf32>
    %98 = arith.mulf %97, %97 : vector<8x128xf32>
    %cst_44 = arith.constant dense<0.000000e+00> : vector<8xf32>
    %99 = vector.multi_reduction <add>, %98, %cst_44 [1] : vector<8x128xf32> to vector<8xf32>
    %100 = vector.shape_cast %99 : vector<8xf32> to vector<8x1xf32>
    %cst_45 = arith.constant 1.280000e+02 : f32
    %101 = vector.broadcast %cst_45 : f32 to vector<8x1xf32>
    %102 = arith.divf %100, %101 : vector<8x1xf32>
    %103 = vector.broadcast %95 : vector<8x1xf32> to vector<8x128xf32>
    %104 = arith.subf %91, %103 : vector<8x128xf32>
    %cst_46 = arith.constant 9.99999974E-6 : f32
    %105 = vector.broadcast %cst_46 : f32 to vector<8x1xf32>
    %106 = arith.addf %102, %105 : vector<8x1xf32>
    %107 = math.rsqrt %106 : vector<8x1xf32>
    %108 = vector.broadcast %107 : vector<8x1xf32> to vector<8x128xf32>
    %109 = arith.mulf %104, %108 : vector<8x128xf32>
    %c0_47 = arith.constant 0 : index
    %c0_48 = arith.constant 0 : index
    %110 = vector.load %arg13[%c0_47, %c0_48] : memref<1x128xf32, #tpu.memory_space<vmem>>, vector<1x128xf32>
    %111 = vector.broadcast %110 : vector<1x128xf32> to vector<8x128xf32>
    %112 = arith.mulf %109, %111 : vector<8x128xf32>
    %c0_49 = arith.constant 0 : index
    %c0_50 = arith.constant 0 : index
    %113 = vector.load %arg14[%c0_49, %c0_50] : memref<1x128xf32, #tpu.memory_space<vmem>>, vector<1x128xf32>
    %114 = vector.broadcast %113 : vector<1x128xf32> to vector<8x128xf32>
    %115 = arith.addf %112, %114 : vector<8x128xf32>
    %c0_51 = arith.constant 0 : index
    %c0_52 = arith.constant 0 : index
    %116 = vector.load %arg9[%c0_51, %c0_52] : memref<128x256xf32, #tpu.memory_space<vmem>>, vector<128x256xf32>
    %cst_53 = arith.constant dense<0.000000e+00> : vector<8x256xf32>
    %117 = tpu.matmul %115, %116, %cst_53 {dimension_numbers = #tpu.dot_dimension_numbers<[1], [0], [0], [1], [0, 0, 1, 1], [], []>} : vector<8x128xf32>, vector<128x256xf32>, vector<8x256xf32> -> vector<8x256xf32>
    %c0_54 = arith.constant 0 : index
    %c0_55 = arith.constant 0 : index
    %118 = vector.load %arg10[%c0_54, %c0_55] : memref<1x256xf32, #tpu.memory_space<vmem>>, vector<1x256xf32>
    %119 = vector.broadcast %118 : vector<1x256xf32> to vector<8x256xf32>
    %120 = arith.addf %117, %119 : vector<8x256xf32>
    %cst_56 = arith.constant 0.000000e+00 : f32
    %121 = vector.broadcast %cst_56 : f32 to vector<8x256xf32>
    %122 = arith.maximumf %120, %121 : vector<8x256xf32>
    %c0_57 = arith.constant 0 : index
    %c0_58 = arith.constant 0 : index
    %123 = vector.load %arg11[%c0_57, %c0_58] : memref<256x128xf32, #tpu.memory_space<vmem>>, vector<256x128xf32>
    %cst_59 = arith.constant dense<0.000000e+00> : vector<8x128xf32>
    %124 = tpu.matmul %122, %123, %cst_59 {dimension_numbers = #tpu.dot_dimension_numbers<[1], [0], [0], [1], [0, 0, 1, 1], [], []>} : vector<8x256xf32>, vector<256x128xf32>, vector<8x128xf32> -> vector<8x128xf32>
    %c0_60 = arith.constant 0 : index
    %c0_61 = arith.constant 0 : index
    %125 = vector.load %arg12[%c0_60, %c0_61] : memref<1x128xf32, #tpu.memory_space<vmem>>, vector<1x128xf32>
    %126 = vector.broadcast %125 : vector<1x128xf32> to vector<8x128xf32>
    %127 = arith.addf %124, %126 : vector<8x128xf32>
    %128 = arith.addf %115, %127 : vector<8x128xf32>
    %cst_62 = arith.constant dense<0.000000e+00> : vector<8xf32>
    %129 = vector.multi_reduction <add>, %128, %cst_62 [1] : vector<8x128xf32> to vector<8xf32>
    %130 = vector.shape_cast %129 : vector<8xf32> to vector<8x1xf32>
    %cst_63 = arith.constant 1.280000e+02 : f32
    %131 = vector.broadcast %cst_63 : f32 to vector<8x1xf32>
    %132 = arith.divf %130, %131 : vector<8x1xf32>
    %133 = vector.broadcast %132 : vector<8x1xf32> to vector<8x128xf32>
    %134 = arith.subf %128, %133 : vector<8x128xf32>
    %135 = arith.mulf %134, %134 : vector<8x128xf32>
    %cst_64 = arith.constant dense<0.000000e+00> : vector<8xf32>
    %136 = vector.multi_reduction <add>, %135, %cst_64 [1] : vector<8x128xf32> to vector<8xf32>
    %137 = vector.shape_cast %136 : vector<8xf32> to vector<8x1xf32>
    %cst_65 = arith.constant 1.280000e+02 : f32
    %138 = vector.broadcast %cst_65 : f32 to vector<8x1xf32>
    %139 = arith.divf %137, %138 : vector<8x1xf32>
    %140 = vector.broadcast %132 : vector<8x1xf32> to vector<8x128xf32>
    %141 = arith.subf %128, %140 : vector<8x128xf32>
    %cst_66 = arith.constant 9.99999974E-6 : f32
    %142 = vector.broadcast %cst_66 : f32 to vector<8x1xf32>
    %143 = arith.addf %139, %142 : vector<8x1xf32>
    %144 = math.rsqrt %143 : vector<8x1xf32>
    %145 = vector.broadcast %144 : vector<8x1xf32> to vector<8x128xf32>
    %146 = arith.mulf %141, %145 : vector<8x128xf32>
    %c0_67 = arith.constant 0 : index
    %c0_68 = arith.constant 0 : index
    %147 = vector.load %arg15[%c0_67, %c0_68] : memref<1x128xf32, #tpu.memory_space<vmem>>, vector<1x128xf32>
    %148 = vector.broadcast %147 : vector<1x128xf32> to vector<8x128xf32>
    %149 = arith.mulf %146, %148 : vector<8x128xf32>
    %c0_69 = arith.constant 0 : index
    %c0_70 = arith.constant 0 : index
    %150 = vector.load %arg16[%c0_69, %c0_70] : memref<1x128xf32, #tpu.memory_space<vmem>>, vector<1x128xf32>
    %151 = vector.broadcast %150 : vector<1x128xf32> to vector<8x128xf32>
    %152 = arith.addf %149, %151 : vector<8x128xf32>
    %153 = vector.shape_cast %152 : vector<8x128xf32> to vector<1x8x128xf32>
    %c0_71 = arith.constant 0 : index
    %c0_72 = arith.constant 0 : index
    %c0_73 = arith.constant 0 : index
    %154 = vector.load %arg17[%c0_71, %c0_72, %c0_73] : memref<1x8x128xf32, #tpu.memory_space<vmem>>, vector<1x8x128xf32>
    tpu.vector_store %arg17[%c0_71, %c0_72, %c0_73], %153 {strides = array<i32>} : memref<1x8x128xf32, #tpu.memory_space<vmem>>, vector<1x8x128xf32>,
    return
  }
  func.func @transform_0(%arg0: i32) -> (i32, i32, i32) {
    %c0_i32 = arith.constant 0 : i32
    %c0_i32_0 = arith.constant 0 : i32
    %c0_i32_1 = arith.constant 0 : i32
    return %arg0, %c0_i32, %c0_i32_0 : i32, i32, i32
  }
  func.func @transform_1(%arg0: i32) -> (i32, i32, i32) {
    %c0_i32 = arith.constant 0 : i32
    %c0_i32_0 = arith.constant 0 : i32
    %c0_i32_1 = arith.constant 0 : i32
    return %arg0, %c0_i32, %c0_i32_0 : i32, i32, i32
  }
  func.func @transform_2(%arg0: i32) -> (i32, i32) {
    %c0_i32 = arith.constant 0 : i32
    %c0_i32_0 = arith.constant 0 : i32
    %c0_i32_1 = arith.constant 0 : i32
    return %c0_i32, %c0_i32_0 : i32, i32
  }
  func.func @transform_3(%arg0: i32) -> (i32, i32) {
    %c0_i32 = arith.constant 0 : i32
    %c0_i32_0 = arith.constant 0 : i32
    %c0_i32_1 = arith.constant 0 : i32
    return %c0_i32, %c0_i32_0 : i32, i32
  }
  func.func @transform_4(%arg0: i32) -> (i32, i32) {
    %c0_i32 = arith.constant 0 : i32
    %c0_i32_0 = arith.constant 0 : i32
    %c0_i32_1 = arith.constant 0 : i32
    return %c0_i32, %c0_i32_0 : i32, i32
  }
  func.func @transform_5(%arg0: i32) -> (i32, i32) {
    %c0_i32 = arith.constant 0 : i32
    %c0_i32_0 = arith.constant 0 : i32
    %c0_i32_1 = arith.constant 0 : i32
    return %c0_i32, %c0_i32_0 : i32, i32
  }
  func.func @transform_6(%arg0: i32) -> (i32, i32) {
    %c0_i32 = arith.constant 0 : i32
    %c0_i32_0 = arith.constant 0 : i32
    %c0_i32_1 = arith.constant 0 : i32
    return %c0_i32, %c0_i32_0 : i32, i32
  }
  func.func @transform_7(%arg0: i32) -> (i32, i32) {
    %c0_i32 = arith.constant 0 : i32
    %c0_i32_0 = arith.constant 0 : i32
    %c0_i32_1 = arith.constant 0 : i32
    return %c0_i32, %c0_i32_0 : i32, i32
  }
  func.func @transform_8(%arg0: i32) -> (i32, i32) {
    %c0_i32 = arith.constant 0 : i32
    %c0_i32_0 = arith.constant 0 : i32
    %c0_i32_1 = arith.constant 0 : i32
    return %c0_i32, %c0_i32_0 : i32, i32
  }
  func.func @transform_9(%arg0: i32) -> (i32, i32) {
    %c0_i32 = arith.constant 0 : i32
    %c0_i32_0 = arith.constant 0 : i32
    %c0_i32_1 = arith.constant 0 : i32
    return %c0_i32, %c0_i32_0 : i32, i32
  }
  func.func @transform_10(%arg0: i32) -> (i32, i32) {
    %c0_i32 = arith.constant 0 : i32
    %c0_i32_0 = arith.constant 0 : i32
    %c0_i32_1 = arith.constant 0 : i32
    return %c0_i32, %c0_i32_0 : i32, i32
  }
  func.func @transform_11(%arg0: i32) -> (i32, i32) {
    %c0_i32 = arith.constant 0 : i32
    %c0_i32_0 = arith.constant 0 : i32
    %c0_i32_1 = arith.constant 0 : i32
    return %c0_i32, %c0_i32_0 : i32, i32
  }
  func.func @transform_12(%arg0: i32) -> (i32, i32) {
    %c0_i32 = arith.constant 0 : i32
    %c0_i32_0 = arith.constant 0 : i32
    %c0_i32_1 = arith.constant 0 : i32
    return %c0_i32, %c0_i32_0 : i32, i32
  }
  func.func @transform_13(%arg0: i32) -> (i32, i32) {
    %c0_i32 = arith.constant 0 : i32
    %c0_i32_0 = arith.constant 0 : i32
    %c0_i32_1 = arith.constant 0 : i32
    return %c0_i32, %c0_i32_0 : i32, i32
  }
  func.func @transform_14(%arg0: i32) -> (i32, i32) {
    %c0_i32 = arith.constant 0 : i32
    %c0_i32_0 = arith.constant 0 : i32
    %c0_i32_1 = arith.constant 0 : i32
    return %c0_i32, %c0_i32_0 : i32, i32
  }
  func.func @transform_15(%arg0: i32) -> (i32, i32) {
    %c0_i32 = arith.constant 0 : i32
    %c0_i32_0 = arith.constant 0 : i32
    %c0_i32_1 = arith.constant 0 : i32
    return %c0_i32, %c0_i32_0 : i32, i32
  }
  func.func @transform_16(%arg0: i32) -> (i32, i32, i32) {
    %c0_i32 = arith.constant 0 : i32
    %c0_i32_0 = arith.constant 0 : i32
    %c0_i32_1 = arith.constant 0 : i32
    return %arg0, %c0_i32, %c0_i32_0 : i32, i32, i32
  }
}

</mosaic_0001>

<llo_original>
// kernel: tpu_custom_call.1
$region0: #{tpu_custom_call.1}
  #allocation0 [shape = 'u32[]', space=smem, size = 0x4, offset = 0x4, fixed_abs, tag = 'smem constant byte address 0x4 - core index']
  #allocation1 [shape = 'u32[72,128]{1,0:T(1,128)}', space=vmem, size = 0x9000, scoped, tag = 'internal scratch']
  %s0 = inlined_call_operand.hbm [shape: f32[2,8,128], index: 0, kind: input, shape index: {}]
  %s1 = inlined_call_operand.hbm [shape: f32[2,8,128], index: 1, kind: input, shape index: {}]
  %s2 = inlined_call_operand.hbm [shape: f32[128,256], index: 2, kind: input, shape index: {}]
  %s3 = inlined_call_operand.vmem [shape: f32[1,256], index: 3, kind: input, shape index: {}]
  %s4 = inlined_call_operand.hbm [shape: f32[128,128], index: 4, kind: input, shape index: {}]
  %s5 = inlined_call_operand.hbm [shape: f32[1,128], index: 5, kind: input, shape index: {}]
  %s6 = inlined_call_operand.hbm [shape: f32[128,128], index: 6, kind: input, shape index: {}]
  %s7 = inlined_call_operand.vmem [shape: f32[1,128], index: 7, kind: input, shape index: {}]
  %s8 = inlined_call_operand.hbm [shape: f32[128,256], index: 8, kind: input, shape index: {}]
  %s9 = inlined_call_operand.vmem [shape: f32[1,256], index: 9, kind: input, shape index: {}]
  %s10 = inlined_call_operand.hbm [shape: f32[256,128], index: 10, kind: input, shape index: {}]
  %s11 = inlined_call_operand.vmem [shape: f32[1,128], index: 11, kind: input, shape index: {}]
  %s12 = inlined_call_operand.vmem [shape: f32[1,128], index: 12, kind: input, shape index: {}]
  %s13 = inlined_call_operand.vmem [shape: f32[1,128], index: 13, kind: input, shape index: {}]
  %s14 = inlined_call_operand.vmem [shape: f32[1,128], index: 14, kind: input, shape index: {}]
  %s15 = inlined_call_operand.vmem [shape: f32[1,128], index: 15, kind: input, shape index: {}]
  %s16 = inlined_call_operand.hbm [shape: f32[2,8,128], index: 16, kind: output, shape index: {}]
  %s17 = sld [smem:[#allocation0]]
  $region129: #{tpu_custom_call.1} parent=0
    _
  %s19 = ssub.s32 1, %s17
  %s20 = scalar_select 0, %s19, %s17
  $region1: #{tpu_custom_call.1} parent=0
    #allocation2 [shape = 'u8[8192]{0}', space=vmem, size = 0x2000, scoped, tag = 'input window, operand 0']
    #allocation3 [shape = 's32[2]{0}', space=sflag, size = 0x8, scoped, tag = 'scoped memory for tpu_custom_call.1']
    #allocation4 [shape = 's32[2]{0}', space=sflag, size = 0x8, scoped, tag = 'scoped memory for tpu_custom_call.1']
    #allocation5 [shape = 'u8[8192]{0}', space=vmem, size = 0x2000, scoped, tag = 'input window, operand 1']
    #allocation6 [shape = 's32[2]{0}', space=sflag, size = 0x8, scoped, tag = 'scoped memory for tpu_custom_call.1']
    #allocation7 [shape = 'u8[131072]{0}', space=vmem, size = 0x20000, scoped, tag = 'input window, operand 2, single buffered']
    #allocation8 [shape = 'u8[65536]{0}', space=vmem, size = 0x10000, scoped, tag = 'input window, operand 4, single buffered']
    #allocation9 [shape = 's32[1]{0}', space=sflag, size = 0x4, scoped, tag = 'scoped memory for tpu_custom_call.1']
    #allocation10 [shape = 'u8[512]{0}', space=vmem, size = 0x400, scoped, tag = 'input window, operand 5, single buffered']
    #allocation11 [shape = 'u8[65536]{0}', space=vmem, size = 0x10000, scoped, tag = 'input window, operand 6, single buffered']
    #allocation12 [shape = 's32[1]{0}', space=sflag, size = 0x4, scoped, tag = 'scoped memory for tpu_custom_call.1']
    #allocation13 [shape = 'u8[131072]{0}', space=vmem, size = 0x20000, scoped, tag = 'input window, operand 8, single buffered']
    #allocation14 [shape = 'u8[131072]{0}', space=vmem, size = 0x20000, scoped, tag = 'input window, operand 10, single buffered']
    #allocation15 [shape = 's32[1]{0}', space=sflag, size = 0x4, scoped, tag = 'scoped memory for tpu_custom_call.1']
    #allocation16 [shape = 'u8[8192]{0}', space=vmem, size = 0x2000, scoped, tag = 'output window, operand 0']
    %21 = vsyncpa [#allocation3], 0
    %s22 = scalar_lea.sflag [#allocation3], 1
    %23 = vsyncpa %s22, 0
    %24 = vsyncpa [#allocation6], 0
    %s25 = scalar_lea.sflag [#allocation6], 1
    %26 = vsyncpa %s25, 0
    %27 = vsyncpa [#allocation9], 0
    %28 = vsyncpa [#allocation12], 0
    %29 = vsyncpa [#allocation15], 0
    %30 = vsyncpa [#allocation4], 0
    %s31 = scalar_lea.sflag [#allocation4], 1
    %32 = vsyncpa %s31, 0
    loop: start=0, step=1, limit=4
    $region2: #{tpu_custom_call.1} parent=1 // loop_pre_header
      _
    $region3: #{tpu_custom_call.1} parent=1 // loop_header
      %s34 = sphi 0, %s38
      %p35 = scmp.ge.s32.totalorder %s34, 4
      %s44 = sphi 0, %s46
      %s47 = sphi 0, %s44
      %s48 = sphi 0, %s47
      %s64 = sphi 0, %s48
      %s70 = sphi 0, %s72
      %s73 = sphi 0, %s70
      %s74 = sphi 0, %s73
      %s90 = sphi 0, %s74
      %s94 = sphi 0, %s94
      %s96 = sphi 0, %s94
      %s97 = sphi 0, %s96
      %s111 = sphi 0, %s97
      %s115 = sphi 0, %s115
      %s117 = sphi 0, %s115
      %s118 = sphi 0, %s117
      %s132 = sphi 0, %s118
      %s136 = sphi 0, %s136
      %s138 = sphi 0, %s136
      %s139 = sphi 0, %s138
      %s153 = sphi 0, %s139
      %s157 = sphi 0, %s157
      %s159 = sphi 0, %s157
      %s160 = sphi 0, %s159
      %s174 = sphi 0, %s160
      %s178 = sphi 0, %s178
      %s180 = sphi 0, %s178
      %s181 = sphi 0, %s180
      %s195 = sphi 0, %s181
      %s199 = sphi 0, %s199
      %s201 = sphi 0, %s199
      %s202 = sphi 0, %s201
      %s216 = sphi 0, %s202
      %s220 = sphi 0, %s220
      %s222 = sphi 0, %s220
      %s223 = sphi 0, %s222
      %s237 = sphi 0, %s223
      %s241 = sphi 0, %s241
      %s243 = sphi 0, %s241
      %s244 = sphi 0, %s243
      %s258 = sphi 0, %s244
      %s262 = sphi 0, %s262
      %s264 = sphi 0, %s262
      %s265 = sphi 0, %s264
      %s279 = sphi 0, %s265
      %s283 = sphi 0, %s283
      %s285 = sphi 0, %s283
      %s286 = sphi 0, %s285
      %s300 = sphi 0, %s286
      %s304 = sphi 0, %s304
      %s306 = sphi 0, %s304
      %s307 = sphi 0, %s306
      %s321 = sphi 0, %s307
      %s325 = sphi 0, %s325
      %s327 = sphi 0, %s325
      %s328 = sphi 0, %s327
      %s342 = sphi 0, %s328
      %s346 = sphi 0, %s346
      %s348 = sphi 0, %s346
      %s349 = sphi 0, %s348
      %s363 = sphi 0, %s349
      %s367 = sphi 0, %s367
      %s369 = sphi 0, %s367
      %s370 = sphi 0, %s369
      %s384 = sphi 0, %s370
      %s390 = sphi 0, %s392
      %s393 = sphi 0, %s390
      %s394 = sphi 0, %s393
      %s410 = sphi 0, %s394
    $region4: #{tpu_custom_call.1} parent=1 // loop_header_branch
      %37 = sbr.rel (%p35) target = $region8
    $region5: #{tpu_custom_call.1} parent=1 // loop_body
      %s39 = ssub.s32 %s34, 1
      %s40 = ssub.s32 %s34, 2
      %s41 = sadd.s32 %s34, 1
      %s42 = ssub.s32 %s34, %s41
      %p43 = scmp.eq.s32.totalorder %s42, 0
      %s45 = sadd.s32 %s44, 1
      %s46 = scalar_select %p43, %s44, %s45
      %p49 = pneg %p43
      %p50 = scmp.eq.s32.totalorder %s34, 1
      %p51 = por %p49, %p50
      %p52 = scmp.ne.s32.totalorder %s44, %s47
      %p53 = scmp.eq.s32.totalorder %s34, 0
      %p54 = por %p52, %p53
      %p55 = scmp.ne.s32.totalorder %s44, %s47
      %p56 = scmp.eq.s32.totalorder %s39, 1
      %p57 = por %p55, %p56
      %p58 = scmp.ne.s32.totalorder %s47, %s48
      %p59 = scmp.eq.s32.totalorder %s39, 0
      %p60 = por %p58, %p59
      %p61 = scmp.ne.s32.totalorder %s47, %s48
      %p62 = scmp.eq.s32.totalorder %s40, 1
      %p63 = por %p61, %p62
      %p65 = scmp.ne.s32.totalorder %s48, %s64
      %p66 = scmp.eq.s32.totalorder %s40, 0
      %p67 = por %p65, %p66
      %s68 = ssub.s32 %s34, %s41
      %p69 = scmp.eq.s32.totalorder %s68, 0
      %s71 = sadd.s32 %s70, 1
      %s72 = scalar_select %p69, %s70, %s71
      %p75 = pneg %p69
      %p76 = scmp.eq.s32.totalorder %s34, 1
      %p77 = por %p75, %p76
      %p78 = scmp.ne.s32.totalorder %s70, %s73
      %p79 = scmp.eq.s32.totalorder %s34, 0
      %p80 = por %p78, %p79
      %p81 = scmp.ne.s32.totalorder %s70, %s73
      %p82 = scmp.eq.s32.totalorder %s39, 1
      %p83 = por %p81, %p82
      %p84 = scmp.ne.s32.totalorder %s73, %s74
      %p85 = scmp.eq.s32.totalorder %s39, 0
      %p86 = por %p84, %p85
      %p87 = scmp.ne.s32.totalorder %s73, %s74
      %p88 = scmp.eq.s32.totalorder %s40, 1
      %p89 = por %p87, %p88
      %p91 = scmp.ne.s32.totalorder %s74, %s90
      %p92 = scmp.eq.s32.totalorder %s40, 0
      %p93 = por %p91, %p92
      %s95 = sadd.s32 %s94, 1
      %p98 = scmp.eq.s32.totalorder %s34, 1
      %p99 = scmp.ne.s32.totalorder %s94, %s96
      %p100 = scmp.eq.s32.totalorder %s34, 0
      %p101 = por %p99, %p100
      %p102 = scmp.ne.s32.totalorder %s94, %s96
      %p103 = scmp.eq.s32.totalorder %s39, 1
      %p104 = por %p102, %p103
      %p105 = scmp.ne.s32.totalorder %s96, %s97
      %p106 = scmp.eq.s32.totalorder %s39, 0
      %p107 = por %p105, %p106
      %p108 = scmp.ne.s32.totalorder %s96, %s97
      %p109 = scmp.eq.s32.totalorder %s40, 1
      %p110 = por %p108, %p109
      %p112 = scmp.ne.s32.totalorder %s97, %s111
      %p113 = scmp.eq.s32.totalorder %s40, 0
      %p114 = por %p112, %p113
      %s116 = sadd.s32 %s115, 1
      %p119 = scmp.eq.s32.totalorder %s34, 1
      %p120 = scmp.ne.s32.totalorder %s115, %s117
      %p121 = scmp.eq.s32.totalorder %s34, 0
      %p122 = por %p120, %p121
      %p123 = scmp.ne.s32.totalorder %s115, %s117
      %p124 = scmp.eq.s32.totalorder %s39, 1
      %p125 = por %p123, %p124
      %p126 = scmp.ne.s32.totalorder %s117, %s118
      %p127 = scmp.eq.s32.totalorder %s39, 0
      %p128 = por %p126, %p127
      %p129 = scmp.ne.s32.totalorder %s117, %s118
      %p130 = scmp.eq.s32.totalorder %s40, 1
      %p131 = por %p129, %p130
      %p133 = scmp.ne.s32.totalorder %s118, %s132
      %p134 = scmp.eq.s32.totalorder %s40, 0
      %p135 = por %p133, %p134
      %s137 = sadd.s32 %s136, 1
      %p140 = scmp.eq.s32.totalorder %s34, 1
      %p141 = scmp.ne.s32.totalorder %s136, %s138
      %p142 = scmp.eq.s32.totalorder %s34, 0
      %p143 = por %p141, %p142
      %p144 = scmp.ne.s32.totalorder %s136, %s138
      %p145 = scmp.eq.s32.totalorder %s39, 1
      %p146 = por %p144, %p145
      %p147 = scmp.ne.s32.totalorder %s138, %s139
      %p148 = scmp.eq.s32.totalorder %s39, 0
      %p149 = por %p147, %p148
      %p150 = scmp.ne.s32.totalorder %s138, %s139
      %p151 = scmp.eq.s32.totalorder %s40, 1
      %p152 = por %p150, %p151
      %p154 = scmp.ne.s32.totalorder %s139, %s153
      %p155 = scmp.eq.s32.totalorder %s40, 0
      %p156 = por %p154, %p155
      %s158 = sadd.s32 %s157, 1
      %p161 = scmp.eq.s32.totalorder %s34, 1
      %p162 = scmp.ne.s32.totalorder %s157, %s159
      %p163 = scmp.eq.s32.totalorder %s34, 0
      %p164 = por %p162, %p163
      %p165 = scmp.ne.s32.totalorder %s157, %s159
      %p166 = scmp.eq.s32.totalorder %s39, 1
      %p167 = por %p165, %p166
      %p168 = scmp.ne.s32.totalorder %s159, %s160
      %p169 = scmp.eq.s32.totalorder %s39, 0
      %p170 = por %p168, %p169
      %p171 = scmp.ne.s32.totalorder %s159, %s160
      %p172 = scmp.eq.s32.totalorder %s40, 1
      %p173 = por %p171, %p172
      %p175 = scmp.ne.s32.totalorder %s160, %s174
      %p176 = scmp.eq.s32.totalorder %s40, 0
      %p177 = por %p175, %p176
      %s179 = sadd.s32 %s178, 1
      %p182 = scmp.eq.s32.totalorder %s34, 1
      %p183 = scmp.ne.s32.totalorder %s178, %s180
      %p184 = scmp.eq.s32.totalorder %s34, 0
      %p185 = por %p183, %p184
      %p186 = scmp.ne.s32.totalorder %s178, %s180
      %p187 = scmp.eq.s32.totalorder %s39, 1
      %p188 = por %p186, %p187
      %p189 = scmp.ne.s32.totalorder %s180, %s181
      %p190 = scmp.eq.s32.totalorder %s39, 0
      %p191 = por %p189, %p190
      %p192 = scmp.ne.s32.totalorder %s180, %s181
      %p193 = scmp.eq.s32.totalorder %s40, 1
      %p194 = por %p192, %p193
      %p196 = scmp.ne.s32.totalorder %s181, %s195
      %p197 = scmp.eq.s32.totalorder %s40, 0
      %p198 = por %p196, %p197
      %s200 = sadd.s32 %s199, 1
      %p203 = scmp.eq.s32.totalorder %s34, 1
      %p204 = scmp.ne.s32.totalorder %s199, %s201
      %p205 = scmp.eq.s32.totalorder %s34, 0
      %p206 = por %p204, %p205
      %p207 = scmp.ne.s32.totalorder %s199, %s201
      %p208 = scmp.eq.s32.totalorder %s39, 1
      %p209 = por %p207, %p208
      %p210 = scmp.ne.s32.totalorder %s201, %s202
      %p211 = scmp.eq.s32.totalorder %s39, 0
      %p212 = por %p210, %p211
      %p213 = scmp.ne.s32.totalorder %s201, %s202
      %p214 = scmp.eq.s32.totalorder %s40, 1
      %p215 = por %p213, %p214
      %p217 = scmp.ne.s32.totalorder %s202, %s216
      %p218 = scmp.eq.s32.totalorder %s40, 0
      %p219 = por %p217, %p218
      %s221 = sadd.s32 %s220, 1
      %p224 = scmp.eq.s32.totalorder %s34, 1
      %p225 = scmp.ne.s32.totalorder %s220, %s222
      %p226 = scmp.eq.s32.totalorder %s34, 0
      %p227 = por %p225, %p226
      %p228 = scmp.ne.s32.totalorder %s220, %s222
      %p229 = scmp.eq.s32.totalorder %s39, 1
      %p230 = por %p228, %p229
      %p231 = scmp.ne.s32.totalorder %s222, %s223
      %p232 = scmp.eq.s32.totalorder %s39, 0
      %p233 = por %p231, %p232
      %p234 = scmp.ne.s32.totalorder %s222, %s223
      %p235 = scmp.eq.s32.totalorder %s40, 1
      %p236 = por %p234, %p235
      %p238 = scmp.ne.s32.totalorder %s223, %s237
      %p239 = scmp.eq.s32.totalorder %s40, 0
      %p240 = por %p238, %p239
      %s242 = sadd.s32 %s241, 1
      %p245 = scmp.eq.s32.totalorder %s34, 1
      %p246 = scmp.ne.s32.totalorder %s241, %s243
      %p247 = scmp.eq.s32.totalorder %s34, 0
      %p248 = por %p246, %p247
      %p249 = scmp.ne.s32.totalorder %s241, %s243
      %p250 = scmp.eq.s32.totalorder %s39, 1
      %p251 = por %p249, %p250
      %p252 = scmp.ne.s32.totalorder %s243, %s244
      %p253 = scmp.eq.s32.totalorder %s39, 0
      %p254 = por %p252, %p253
      %p255 = scmp.ne.s32.totalorder %s243, %s244
      %p256 = scmp.eq.s32.totalorder %s40, 1
      %p257 = por %p255, %p256
      %p259 = scmp.ne.s32.totalorder %s244, %s258
      %p260 = scmp.eq.s32.totalorder %s40, 0
      %p261 = por %p259, %p260
      %s263 = sadd.s32 %s262, 1
      %p266 = scmp.eq.s32.totalorder %s34, 1
      %p267 = scmp.ne.s32.totalorder %s262, %s264
      %p268 = scmp.eq.s32.totalorder %s34, 0
      %p269 = por %p267, %p268
      %p270 = scmp.ne.s32.totalorder %s262, %s264
      %p271 = scmp.eq.s32.totalorder %s39, 1
      %p272 = por %p270, %p271
      %p273 = scmp.ne.s32.totalorder %s264, %s265
      %p274 = scmp.eq.s32.totalorder %s39, 0
      %p275 = por %p273, %p274
      %p276 = scmp.ne.s32.totalorder %s264, %s265
      %p277 = scmp.eq.s32.totalorder %s40, 1
      %p278 = por %p276, %p277
      %p280 = scmp.ne.s32.totalorder %s265, %s279
      %p281 = scmp.eq.s32.totalorder %s40, 0
      %p282 = por %p280, %p281
      %s284 = sadd.s32 %s283, 1
      %p287 = scmp.eq.s32.totalorder %s34, 1
      %p288 = scmp.ne.s32.totalorder %s283, %s285
      %p289 = scmp.eq.s32.totalorder %s34, 0
      %p290 = por %p288, %p289
      %p291 = scmp.ne.s32.totalorder %s283, %s285
      %p292 = scmp.eq.s32.totalorder %s39, 1
      %p293 = por %p291, %p292
      %p294 = scmp.ne.s32.totalorder %s285, %s286
      %p295 = scmp.eq.s32.totalorder %s39, 0
      %p296 = por %p294, %p295
      %p297 = scmp.ne.s32.totalorder %s285, %s286
      %p298 = scmp.eq.s32.totalorder %s40, 1
      %p299 = por %p297, %p298
      %p301 = scmp.ne.s32.totalorder %s286, %s300
      %p302 = scmp.eq.s32.totalorder %s40, 0
      %p303 = por %p301, %p302
      %s305 = sadd.s32 %s304, 1
      %p308 = scmp.eq.s32.totalorder %s34, 1
      %p309 = scmp.ne.s32.totalorder %s304, %s306
      %p310 = scmp.eq.s32.totalorder %s34, 0
      %p311 = por %p309, %p310
      %p312 = scmp.ne.s32.totalorder %s304, %s306
      %p313 = scmp.eq.s32.totalorder %s39, 1
      %p314 = por %p312, %p313
      %p315 = scmp.ne.s32.totalorder %s306, %s307
      %p316 = scmp.eq.s32.totalorder %s39, 0
      %p317 = por %p315, %p316
      %p318 = scmp.ne.s32.totalorder %s306, %s307
      %p319 = scmp.eq.s32.totalorder %s40, 1
      %p320 = por %p318, %p319
      %p322 = scmp.ne.s32.totalorder %s307, %s321
      %p323 = scmp.eq.s32.totalorder %s40, 0
      %p324 = por %p322, %p323
      %s326 = sadd.s32 %s325, 1
      %p329 = scmp.eq.s32.totalorder %s34, 1
      %p330 = scmp.ne.s32.totalorder %s325, %s327
      %p331 = scmp.eq.s32.totalorder %s34, 0
      %p332 = por %p330, %p331
      %p333 = scmp.ne.s32.totalorder %s325, %s327
      %p334 = scmp.eq.s32.totalorder %s39, 1
      %p335 = por %p333, %p334
      %p336 = scmp.ne.s32.totalorder %s327, %s328
      %p337 = scmp.eq.s32.totalorder %s39, 0
      %p338 = por %p336, %p337
      %p339 = scmp.ne.s32.totalorder %s327, %s328
      %p340 = scmp.eq.s32.totalorder %s40, 1
      %p341 = por %p339, %p340
      %p343 = scmp.ne.s32.totalorder %s328, %s342
      %p344 = scmp.eq.s32.totalorder %s40, 0
      %p345 = por %p343, %p344
      %s347 = sadd.s32 %s346, 1
      %p350 = scmp.eq.s32.totalorder %s34, 1
      %p351 = scmp.ne.s32.totalorder %s346, %s348
      %p352 = scmp.eq.s32.totalorder %s34, 0
      %p353 = por %p351, %p352
      %p354 = scmp.ne.s32.totalorder %s346, %s348
      %p355 = scmp.eq.s32.totalorder %s39, 1
      %p356 = por %p354, %p355
      %p357 = scmp.ne.s32.totalorder %s348, %s349
      %p358 = scmp.eq.s32.totalorder %s39, 0
      %p359 = por %p357, %p358
      %p360 = scmp.ne.s32.totalorder %s348, %s349
      %p361 = scmp.eq.s32.totalorder %s40, 1
      %p362 = por %p360, %p361
      %p364 = scmp.ne.s32.totalorder %s349, %s363
      %p365 = scmp.eq.s32.totalorder %s40, 0
      %p366 = por %p364, %p365
      %s368 = sadd.s32 %s367, 1
      %p371 = scmp.eq.s32.totalorder %s34, 1
      %p372 = scmp.ne.s32.totalorder %s367, %s369
      %p373 = scmp.eq.s32.totalorder %s34, 0
      %p374 = por %p372, %p373
      %p375 = scmp.ne.s32.totalorder %s367, %s369
      %p376 = scmp.eq.s32.totalorder %s39, 1
      %p377 = por %p375, %p376
      %p378 = scmp.ne.s32.totalorder %s369, %s370
      %p379 = scmp.eq.s32.totalorder %s39, 0
      %p380 = por %p378, %p379
      %p381 = scmp.ne.s32.totalorder %s369, %s370
      %p382 = scmp.eq.s32.totalorder %s40, 1
      %p383 = por %p381, %p382
      %p385 = scmp.ne.s32.totalorder %s370, %s384
      %p386 = scmp.eq.s32.totalorder %s40, 0
      %p387 = por %p385, %p386
      %s388 = ssub.s32 %s34, %s41
      %p389 = scmp.eq.s32.totalorder %s388, 0
      %s391 = sadd.s32 %s390, 1
      %s392 = scalar_select %p389, %s390, %s391
      %p395 = pneg %p389
      %p396 = scmp.eq.s32.totalorder %s34, 1
      %p397 = por %p395, %p396
      %p398 = scmp.ne.s32.totalorder %s390, %s393
      %p399 = scmp.eq.s32.totalorder %s34, 0
      %p400 = por %p398, %p399
      %p401 = scmp.ne.s32.totalorder %s390, %s393
      %p402 = scmp.eq.s32.totalorder %s39, 1
      %p403 = por %p401, %p402
      %p404 = scmp.ne.s32.totalorder %s393, %s394
      %p405 = scmp.eq.s32.totalorder %s39, 0
      %p406 = por %p404, %p405
      %p407 = scmp.ne.s32.totalorder %s393, %s394
      %p408 = scmp.eq.s32.totalorder %s40, 1
      %p409 = por %p407, %p408
      %p411 = scmp.ne.s32.totalorder %s394, %s410
      %p412 = scmp.eq.s32.totalorder %s40, 0
      %p413 = por %p411, %p412
      %p414 = scmp.le.s32.totalorder 1, %s34
      %p415 = scmp.lt.s32.totalorder %s34, 3
      %p416 = pnand %p414, %p415
      %p417 = pneg %p416
      // Predicated region
      $region9: #{tpu_custom_call.1} parent=5 // pred_check
        _
      $region10: #{tpu_custom_call.1} parent=5 // pred_check_branch
        %419 = sbr.rel (%p416) target = $region12
      $region11: #{tpu_custom_call.1} parent=5 // pred_region
        %s420 = ssub.s32 %s34, 1
        // Predicated region
        $region13: #{tpu_custom_call.1} parent=11 // pred_check
          %p421 = pneg %p107
        $region14: #{tpu_custom_call.1} parent=11 // pred_check_branch
          %423 = sbr.rel (%p421) target = $region16
        $region15: #{tpu_custom_call.1} parent=11 // pred_region
          %425 = vsyncadd [#allocation6], 0
          %s426 = sshll.u32 %s2, 4
          %s427 = int_to_ptr.hbm [resolvable:$true] %s426
          %s428 = sshll.u32 [#allocation7], 4
          %s429 = int_to_ptr.vmem [resolvable:$true] %s428
          %434 = dma.hbm_to_vmem [thread:$0]  %s427, 4096, %s429, [#allocation6], 256, 256, 16
        $region16: #{tpu_custom_call.1} parent=11 // pred_fallthru
          _
        // Predicated region
        $region17: #{tpu_custom_call.1} parent=11 // pred_check
          %p435 = pneg %p128
        $region18: #{tpu_custom_call.1} parent=11 // pred_check_branch
          %437 = sbr.rel (%p435) target = $region20
        $region19: #{tpu_custom_call.1} parent=11 // pred_region
          _
        $region20: #{tpu_custom_call.1} parent=11 // pred_fallthru
          _
        // Predicated region
        $region21: #{tpu_custom_call.1} parent=11 // pred_check
          %p438 = pneg %p149
        $region22: #{tpu_custom_call.1} parent=11 // pred_check_branch
          %440 = sbr.rel (%p438) target = $region24
        $region23: #{tpu_custom_call.1} parent=11 // pred_region
          %442 = vsyncadd [#allocation9], 0
          %s443 = sshll.u32 %s4, 4
          %s444 = int_to_ptr.hbm [resolvable:$true] %s443
          %s445 = sshll.u32 [#allocation8], 4
          %s446 = int_to_ptr.vmem [resolvable:$true] %s445
          %451 = dma.hbm_to_vmem [thread:$0]  %s444, 2048, %s446, [#allocation9], 128, 128, 8
        $region24: #{tpu_custom_call.1} parent=11 // pred_fallthru
          _
        // Predicated region
        $region25: #{tpu_custom_call.1} parent=11 // pred_check
          %p452 = pneg %p170
        $region26: #{tpu_custom_call.1} parent=11 // pred_check_branch
          %454 = sbr.rel (%p452) target = $region28
        $region27: #{tpu_custom_call.1} parent=11 // pred_region
          %456 = vsyncadd [#allocation9], 0
          %s458 = sshll.u32 %s5, 4
          %s459 = int_to_ptr.hbm [resolvable:$true] %s458
          %s460 = sshll.u32 [#allocation10], 4
          %s461 = int_to_ptr.vmem [resolvable:$true] %s460
          %463 = dma.hbm_to_vmem [thread:$0]  %s459, 16, %s461, [#allocation9]
        $region28: #{tpu_custom_call.1} parent=11 // pred_fallthru
          _
        // Predicated region
        $region29: #{tpu_custom_call.1} parent=11 // pred_check
          %p464 = pneg %p191
        $region30: #{tpu_custom_call.1} parent=11 // pred_check_branch
          %466 = sbr.rel (%p464) target = $region32
        $region31: #{tpu_custom_call.1} parent=11 // pred_region
          %468 = vsyncadd [#allocation12], 0
          %s469 = sshll.u32 %s6, 4
          %s470 = int_to_ptr.hbm [resolvable:$true] %s469
          %s471 = sshll.u32 [#allocation11], 4
          %s472 = int_to_ptr.vmem [resolvable:$true] %s471
          %477 = dma.hbm_to_vmem [thread:$0]  %s470, 2048, %s472, [#allocation12], 128, 128, 8
        $region32: #{tpu_custom_call.1} parent=11 // pred_fallthru
          _
        // Predicated region
        $region33: #{tpu_custom_call.1} parent=11 // pred_check
          %p478 = pneg %p212
        $region34: #{tpu_custom_call.1} parent=11 // pred_check_branch
          %480 = sbr.rel (%p478) target = $region36
        $region35: #{tpu_custom_call.1} parent=11 // pred_region
          _
        $region36: #{tpu_custom_call.1} parent=11 // pred_fallthru
          _
        // Predicated region
        $region37: #{tpu_custom_call.1} parent=11 // pred_check
          %p481 = pneg %p233
        $region38: #{tpu_custom_call.1} parent=11 // pred_check_branch
          %483 = sbr.rel (%p481) target = $region40
        $region39: #{tpu_custom_call.1} parent=11 // pred_region
          %485 = vsyncadd [#allocation12], 0
          %s486 = sshll.u32 %s8, 4
          %s487 = int_to_ptr.hbm [resolvable:$true] %s486
          %s488 = sshll.u32 [#allocation13], 4
          %s489 = int_to_ptr.vmem [resolvable:$true] %s488
          %494 = dma.hbm_to_vmem [thread:$0]  %s487, 4096, %s489, [#allocation12], 256, 256, 16
        $region40: #{tpu_custom_call.1} parent=11 // pred_fallthru
          _
        // Predicated region
        $region41: #{tpu_custom_call.1} parent=11 // pred_check
          %p495 = pneg %p254
        $region42: #{tpu_custom_call.1} parent=11 // pred_check_branch
          %497 = sbr.rel (%p495) target = $region44
        $region43: #{tpu_custom_call.1} parent=11 // pred_region
          _
        $region44: #{tpu_custom_call.1} parent=11 // pred_fallthru
          _
        // Predicated region
        $region45: #{tpu_custom_call.1} parent=11 // pred_check
          %p498 = pneg %p275
        $region46: #{tpu_custom_call.1} parent=11 // pred_check_branch
          %500 = sbr.rel (%p498) target = $region48
        $region47: #{tpu_custom_call.1} parent=11 // pred_region
          %502 = vsyncadd [#allocation15], 0
          %s503 = sshll.u32 %s10, 4
          %s504 = int_to_ptr.hbm [resolvable:$true] %s503
          %s505 = sshll.u32 [#allocation14], 4
          %s506 = int_to_ptr.vmem [resolvable:$true] %s505
          %511 = dma.hbm_to_vmem [thread:$0]  %s504, 4096, %s506, [#allocation15], 128, 128, 8
        $region48: #{tpu_custom_call.1} parent=11 // pred_fallthru
          _
        // Predicated region
        $region49: #{tpu_custom_call.1} parent=11 // pred_check
          %p512 = pneg %p296
        $region50: #{tpu_custom_call.1} parent=11 // pred_check_branch
          %514 = sbr.rel (%p512) target = $region52
        $region51: #{tpu_custom_call.1} parent=11 // pred_region
          _
        $region52: #{tpu_custom_call.1} parent=11 // pred_fallthru
          _
        // Predicated region
        $region53: #{tpu_custom_call.1} parent=11 // pred_check
          %p515 = pneg %p317
        $region54: #{tpu_custom_call.1} parent=11 // pred_check_branch
          %517 = sbr.rel (%p515) target = $region56
        $region55: #{tpu_custom_call.1} parent=11 // pred_region
          _
        $region56: #{tpu_custom_call.1} parent=11 // pred_fallthru
          _
        // Predicated region
        $region57: #{tpu_custom_call.1} parent=11 // pred_check
          %p518 = pneg %p338
        $region58: #{tpu_custom_call.1} parent=11 // pred_check_branch
          %520 = sbr.rel (%p518) target = $region60
        $region59: #{tpu_custom_call.1} parent=11 // pred_region
          _
        $region60: #{tpu_custom_call.1} parent=11 // pred_fallthru
          _
        // Predicated region
        $region61: #{tpu_custom_call.1} parent=11 // pred_check
          %p521 = pneg %p359
        $region62: #{tpu_custom_call.1} parent=11 // pred_check_branch
          %523 = sbr.rel (%p521) target = $region64
        $region63: #{tpu_custom_call.1} parent=11 // pred_region
          _
        $region64: #{tpu_custom_call.1} parent=11 // pred_fallthru
          _
        // Predicated region
        $region65: #{tpu_custom_call.1} parent=11 // pred_check
          %p524 = pneg %p380
        $region66: #{tpu_custom_call.1} parent=11 // pred_check_branch
          %526 = sbr.rel (%p524) target = $region68
        $region67: #{tpu_custom_call.1} parent=11 // pred_region
          _
        $region68: #{tpu_custom_call.1} parent=11 // pred_fallthru
          _
      $region12: #{tpu_custom_call.1} parent=5 // pred_fallthru
        _
      %p527 = scmp.lt.s32.totalorder %s34, 2
      // Predicated region
      $region69: #{tpu_custom_call.1} parent=5 // pred_check
        %p528 = pneg %p527
      $region70: #{tpu_custom_call.1} parent=5 // pred_check_branch
        %530 = sbr.rel (%p528) target = $region72
      $region71: #{tpu_custom_call.1} parent=5 // pred_region
        // Predicated region
        $region73: #{tpu_custom_call.1} parent=71 // pred_check
          %p531 = pneg %p54
        $region74: #{tpu_custom_call.1} parent=71 // pred_check_branch
          %533 = sbr.rel (%p531) target = $region76
        $region75: #{tpu_custom_call.1} parent=71 // pred_region
          %s534 = sand.u32 %s44, 1
          %s535 = scalar_lea.sflag [#allocation3], %s534
          %s536 = sand.u32 %s44, 1
          %s537 = smul.addr %s536, 8
          %s538 = scalar_lea.vmem [#allocation2], %s537
          %540 = vsyncadd %s535, 0
          %s541 = smul.addr %s34, 8
          %s542 = scalar_lea.hbm %s0, %s541
          %s544 = sshll.u32 %s542, 4
          %s545 = int_to_ptr.hbm [resolvable:$true] %s544
          %s546 = sshll.u32 %s538, 4
          %s547 = int_to_ptr.vmem [resolvable:$true] %s546
          %549 = dma.hbm_to_vmem [thread:$0]  %s545, 128, %s547, %s535
        $region76: #{tpu_custom_call.1} parent=71 // pred_fallthru
          _
        // Predicated region
        $region77: #{tpu_custom_call.1} parent=71 // pred_check
          %p550 = pneg %p80
        $region78: #{tpu_custom_call.1} parent=71 // pred_check_branch
          %552 = sbr.rel (%p550) target = $region80
        $region79: #{tpu_custom_call.1} parent=71 // pred_region
          %s553 = sand.u32 %s34, 1
          %s554 = scalar_lea.sflag [#allocation6], %s553
          %s555 = sand.u32 %s70, 1
          %s556 = smul.addr %s555, 8
          %s557 = scalar_lea.vmem [#allocation5], %s556
          %559 = vsyncadd %s554, 0
          %s560 = smul.addr %s34, 8
          %s561 = scalar_lea.hbm %s1, %s560
          %s563 = sshll.u32 %s561, 4
          %s564 = int_to_ptr.hbm [resolvable:$true] %s563
          %s565 = sshll.u32 %s557, 4
          %s566 = int_to_ptr.vmem [resolvable:$true] %s565
          %568 = dma.hbm_to_vmem [thread:$0]  %s564, 128, %s566, %s554
        $region80: #{tpu_custom_call.1} parent=71 // pred_fallthru
          _
      $region72: #{tpu_custom_call.1} parent=5 // pred_fallthru
        _
      %p569 = scmp.le.s32.totalorder 1, %s34
      %p570 = scmp.lt.s32.totalorder %s34, 3
      %p571 = pnand %p569, %p570
      %p572 = pneg %p571
      // Predicated region
      $region81: #{tpu_custom_call.1} parent=5 // pred_check
        _
      $region82: #{tpu_custom_call.1} parent=5 // pred_check_branch
        %574 = sbr.rel (%p571) target = $region84
      $region83: #{tpu_custom_call.1} parent=5 // pred_region
        %s575 = ssub.s32 %s34, 1
        %s576 = sand.u32 %s47, 1
        %s577 = scalar_lea.sflag [#allocation3], %s576
        %s578 = sand.u32 %s47, 1
        %s579 = smul.addr %s578, 8
        %s580 = scalar_lea.vmem [#allocation2], %s579
        // Predicated region
        $region85: #{tpu_custom_call.1} parent=83 // pred_check
          %p581 = pneg %p60
        $region86: #{tpu_custom_call.1} parent=83 // pred_check_branch
          %583 = sbr.rel (%p581) target = $region88
        $region87: #{tpu_custom_call.1} parent=83 // pred_region
          %585 = dma.done %s577, 128
        $region88: #{tpu_custom_call.1} parent=83 // pred_fallthru
          _
        %s586 = sand.u32 %s39, 1
        %s587 = scalar_lea.sflag [#allocation6], %s586
        %s588 = sand.u32 %s73, 1
        %s589 = smul.addr %s588, 8
        %s590 = scalar_lea.vmem [#allocation5], %s589
        // Predicated region
        $region89: #{tpu_custom_call.1} parent=83 // pred_check
          %p591 = pneg %p86
        $region90: #{tpu_custom_call.1} parent=83 // pred_check_branch
          %593 = sbr.rel (%p591) target = $region92
        $region91: #{tpu_custom_call.1} parent=83 // pred_region
          %595 = dma.done %s587, 128
        $region92: #{tpu_custom_call.1} parent=83 // pred_fallthru
          _
        // Predicated region
        $region93: #{tpu_custom_call.1} parent=83 // pred_check
          %p596 = pneg %p107
        $region94: #{tpu_custom_call.1} parent=83 // pred_check_branch
          %598 = sbr.rel (%p596) target = $region96
        $region95: #{tpu_custom_call.1} parent=83 // pred_region
          %600 = dma.done [#allocation6], 4096
        $region96: #{tpu_custom_call.1} parent=83 // pred_fallthru
          _
        // Predicated region
        $region97: #{tpu_custom_call.1} parent=83 // pred_check
          %p601 = pneg %p149
        $region98: #{tpu_custom_call.1} parent=83 // pred_check_branch
          %603 = sbr.rel (%p601) target = $region100
        $region99: #{tpu_custom_call.1} parent=83 // pred_region
          %605 = dma.done [#allocation9], 2048
        $region100: #{tpu_custom_call.1} parent=83 // pred_fallthru
          _
        // Predicated region
        $region101: #{tpu_custom_call.1} parent=83 // pred_check
          %p606 = pneg %p170
        $region102: #{tpu_custom_call.1} parent=83 // pred_check_branch
          %608 = sbr.rel (%p606) target = $region104
        $region103: #{tpu_custom_call.1} parent=83 // pred_region
          %610 = dma.done [#allocation9], 16
        $region104: #{tpu_custom_call.1} parent=83 // pred_fallthru
          _
        // Predicated region
        $region105: #{tpu_custom_call.1} parent=83 // pred_check
          %p611 = pneg %p191
        $region106: #{tpu_custom_call.1} parent=83 // pred_check_branch
          %613 = sbr.rel (%p611) target = $region108
        $region107: #{tpu_custom_call.1} parent=83 // pred_region
          %615 = dma.done [#allocation12], 2048
        $region108: #{tpu_custom_call.1} parent=83 // pred_fallthru
          _
        // Predicated region
        $region109: #{tpu_custom_call.1} parent=83 // pred_check
          %p616 = pneg %p233
        $region110: #{tpu_custom_call.1} parent=83 // pred_check_branch
          %618 = sbr.rel (%p616) target = $region112
        $region111: #{tpu_custom_call.1} parent=83 // pred_region
          %620 = dma.done [#allocation12], 4096
        $region112: #{tpu_custom_call.1} parent=83 // pred_fallthru
          _
        // Predicated region
        $region113: #{tpu_custom_call.1} parent=83 // pred_check
          %p621 = pneg %p275
        $region114: #{tpu_custom_call.1} parent=83 // pred_check_branch
          %623 = sbr.rel (%p621) target = $region116
        $region115: #{tpu_custom_call.1} parent=83 // pred_region
          %625 = dma.done [#allocation15], 4096
        $region116: #{tpu_custom_call.1} parent=83 // pred_fallthru
          _
        %s626 = sand.u32 %s47, 1
        %s627 = scalar_lea.sflag [#allocation3], %s626
        %s628 = sand.u32 %s47, 1
        %s629 = smul.addr %s628, 8
        %s630 = scalar_lea.vmem [#allocation2], %s629
        %p631 = pneg %p60
        %p632 = pneg %p57
        %s633 = sand.u32 %s39, 1
        %s634 = scalar_lea.sflag [#allocation6], %s633
        %s635 = sand.u32 %s73, 1
        %s636 = smul.addr %s635, 8
        %s637 = scalar_lea.vmem [#allocation5], %s636
        %p638 = pneg %p86
        %p639 = pneg %p83
        %p640 = pneg %p107
        %p641 = pneg %p104
        %p642 = pneg %p128
        %p643 = pneg %p125
        %p644 = pneg %p149
        %p645 = pneg %p146
        %p646 = pneg %p170
        %p647 = pneg %p167
        %p648 = pneg %p191
        %p649 = pneg %p188
        %p650 = pneg %p212
        %p651 = pneg %p209
        %p652 = pneg %p233
        %p653 = pneg %p230
        %p654 = pneg %p254
        %p655 = pneg %p251
        %p656 = pneg %p275
        %p657 = pneg %p272
        %p658 = pneg %p296
        %p659 = pneg %p293
        %p660 = pneg %p317
        %p661 = pneg %p314
        %p662 = pneg %p338
        %p663 = pneg %p335
        %p664 = pneg %p359
        %p665 = pneg %p356
        %p666 = pneg %p380
        %p667 = pneg %p377
        %p668 = pneg %p406
        %p669 = pneg %p403
        %s670 = sand.u32 %s393, 1
        %s671 = scalar_lea.sflag [#allocation4], %s670
        %s672 = sand.u32 %s393, 1
        %s673 = smul.addr %s672, 8
        %s674 = scalar_lea.vmem [#allocation16], %s673
        %v675 = vld [vmem:[%s580] sm:$0xff]
        %v676 = vld [vmem:[%s590] sm:$0xff]
        %v677 = vadd.f32 %v675, %v676
        %v678 = vld [vmem:[#allocation7] sm:$0xff]
        %v679 = vld [vmem:[#allocation7 + $0x8] sm:$0xff]
        %v680 = vld [vmem:[#allocation7 + $0x10] sm:$0xff]
        %v681 = vld [vmem:[#allocation7 + $0x18] sm:$0xff]
        %v682 = vld [vmem:[#allocation7 + $0x20] sm:$0xff]
        %v683 = vld [vmem:[#allocation7 + $0x28] sm:$0xff]
        %v684 = vld [vmem:[#allocation7 + $0x30] sm:$0xff]
        %v685 = vld [vmem:[#allocation7 + $0x38] sm:$0xff]
        %v686 = vld [vmem:[#allocation7 + $0x40] sm:$0xff]
        %v687 = vld [vmem:[#allocation7 + $0x48] sm:$0xff]
        %v688 = vld [vmem:[#allocation7 + $0x50] sm:$0xff]
        %v689 = vld [vmem:[#allocation7 + $0x58] sm:$0xff]
        %v690 = vld [vmem:[#allocation7 + $0x60] sm:$0xff]
        %v691 = vld [vmem:[#allocation7 + $0x68] sm:$0xff]
        %v692 = vld [vmem:[#allocation7 + $0x70] sm:$0xff]
        %v693 = vld [vmem:[#allocation7 + $0x78] sm:$0xff]
        %v694 = vld [vmem:[#allocation7 + $0x80] sm:$0xff]
        %v695 = vld [vmem:[#allocation7 + $0x88] sm:$0xff]
        %v696 = vld [vmem:[#allocation7 + $0x90] sm:$0xff]
        %v697 = vld [vmem:[#allocation7 + $0x98] sm:$0xff]
        %v698 = vld [vmem:[#allocation7 + $0xa0] sm:$0xff]
        %v699 = vld [vmem:[#allocation7 + $0xa8] sm:$0xff]
        %v700 = vld [vmem:[#allocation7 + $0xb0] sm:$0xff]
        %v701 = vld [vmem:[#allocation7 + $0xb8] sm:$0xff]
        %v702 = vld [vmem:[#allocation7 + $0xc0] sm:$0xff]
        %v703 = vld [vmem:[#allocation7 + $0xc8] sm:$0xff]
        %v704 = vld [vmem:[#allocation7 + $0xd0] sm:$0xff]
        %v705 = vld [vmem:[#allocation7 + $0xd8] sm:$0xff]
        %v706 = vld [vmem:[#allocation7 + $0xe0] sm:$0xff]
        %v707 = vld [vmem:[#allocation7 + $0xe8] sm:$0xff]
        %v708 = vld [vmem:[#allocation7 + $0xf0] sm:$0xff]
        %v709 = vld [vmem:[#allocation7 + $0xf8] sm:$0xff]
        %v710 = vld [vmem:[%s3] sm:$0x3]
        %v712 = vperm.slane %v710, 0
        %v713 = vperm.slane %v710, 1
        %716 = vmatpush.msra.mxu0 %v708
        %717 = vmatpush.msra.mxu0 %v706
        %718 = vmatpush.msra.mxu0 %v704
        %719 = vmatpush.msra.mxu0 %v702
        %720 = vmatpush.msra.mxu0 %v700
        %721 = vmatpush.msra.mxu0 %v698
        %722 = vmatpush.msra.mxu0 %v696
        %723 = vmatpush.msra.mxu0 %v694
        %724 = vmatpush.msra.mxu0 %v692
        %725 = vmatpush.msra.mxu0 %v690
        %726 = vmatpush.msra.mxu0 %v688
        %727 = vmatpush.msra.mxu0 %v686
        %728 = vmatpush.msra.mxu0 %v684
        %729 = vmatpush.msra.mxu0 %v682
        %730 = vmatpush.msra.mxu0 %v680
        %731 = vmatpush.msra.mxu0 %v678
        %732 = vmatmul.f32.gmra.mxu0 %v677
        %v733 = vpop.f32.mrf.mxu0
        %v734 = vadd.f32 %v712, %v733
        %735 = vdwg.mxu0
        %736 = vmatpush.msra.mxu0 %v709
        %737 = vmatpush.msra.mxu0 %v707
        %738 = vmatpush.msra.mxu0 %v705
        %739 = vmatpush.msra.mxu0 %v703
        %740 = vmatpush.msra.mxu0 %v701
        %741 = vmatpush.msra.mxu0 %v699
        %742 = vmatpush.msra.mxu0 %v697
        %743 = vmatpush.msra.mxu0 %v695
        %744 = vmatpush.msra.mxu0 %v693
        %745 = vmatpush.msra.mxu0 %v691
        %746 = vmatpush.msra.mxu0 %v689
        %747 = vmatpush.msra.mxu0 %v687
        %748 = vmatpush.msra.mxu0 %v685
        %749 = vmatpush.msra.mxu0 %v683
        %750 = vmatpush.msra.mxu0 %v681
        %751 = vmatpush.msra.mxu0 %v679
        %752 = vmatmul.f32.gmra.mxu0 %v677
        %v753 = vpop.f32.mrf.mxu0
        %v754 = vadd.f32 %v713, %v753
        %755 = vdwg.mxu0
        %v756 = vld [vmem:[#allocation8] sm:$0xff]
        %v757 = vld [vmem:[#allocation8 + $0x8] sm:$0xff]
        %v758 = vld [vmem:[#allocation8 + $0x10] sm:$0xff]
        %v759 = vld [vmem:[#allocation8 + $0x18] sm:$0xff]
        %v760 = vld [vmem:[#allocation8 + $0x20] sm:$0xff]
        %v761 = vld [vmem:[#allocation8 + $0x28] sm:$0xff]
        %v762 = vld [vmem:[#allocation8 + $0x30] sm:$0xff]
        %v763 = vld [vmem:[#allocation8 + $0x38] sm:$0xff]
        %v764 = vld [vmem:[#allocation8 + $0x40] sm:$0xff]
        %v765 = vld [vmem:[#allocation8 + $0x48] sm:$0xff]
        %v766 = vld [vmem:[#allocation8 + $0x50] sm:$0xff]
        %v767 = vld [vmem:[#allocation8 + $0x58] sm:$0xff]
        %v768 = vld [vmem:[#allocation8 + $0x60] sm:$0xff]
        %v769 = vld [vmem:[#allocation8 + $0x68] sm:$0xff]
        %v770 = vld [vmem:[#allocation8 + $0x70] sm:$0xff]
        %v771 = vld [vmem:[#allocation8 + $0x78] sm:$0xff]
        %v772 = vld [vmem:[#allocation10] sm:$0x1]
        %v774 = vperm.slane %v772, 0
        %776 = vmatpush.msra.mxu0 %v771
        %777 = vmatpush.msra.mxu0 %v770
        %778 = vmatpush.msra.mxu0 %v769
        %779 = vmatpush.msra.mxu0 %v768
        %780 = vmatpush.msra.mxu0 %v767
        %781 = vmatpush.msra.mxu0 %v766
        %782 = vmatpush.msra.mxu0 %v765
        %783 = vmatpush.msra.mxu0 %v764
        %784 = vmatpush.msra.mxu0 %v763
        %785 = vmatpush.msra.mxu0 %v762
        %786 = vmatpush.msra.mxu0 %v761
        %787 = vmatpush.msra.mxu0 %v760
        %788 = vmatpush.msra.mxu0 %v759
        %789 = vmatpush.msra.mxu0 %v758
        %790 = vmatpush.msra.mxu0 %v757
        %791 = vmatpush.msra.mxu0 %v756
        %792 = vmatmul.f32.gmra.mxu0 %v675
        %v793 = vpop.f32.mrf.mxu0
        %v794 = vadd.f32 %v774, %v793
        %795 = vdwg.mxu0
        %vm796 = vcmask 261120
        %v798 = vsel %vm796, %v734, 0
        %v801 = vsel %vm796, %v754, 0
        %803 = vmatpush.xpose.msra.mxu0 0.0
        %804 = vmatpush.xpose.msra.mxu0 0.0
        %805 = vmatpush.xpose.msra.mxu0 0.0
        %806 = vmatpush.xpose.msra.mxu0 0.0
        %807 = vmatpush.xpose.msra.mxu0 0.0
        %808 = vmatpush.xpose.msra.mxu0 0.0
        %809 = vmatpush.xpose.msra.mxu0 0.0
        %810 = vmatpush.xpose.msra.mxu0 0.0
        %811 = vmatpush.xpose.msra.mxu0 0.0
        %812 = vmatpush.xpose.msra.mxu0 0.0
        %813 = vmatpush.xpose.msra.mxu0 0.0
        %814 = vmatpush.xpose.msra.mxu0 0.0
        %815 = vmatpush.xpose.msra.mxu0 0.0
        %816 = vmatpush.xpose.msra.mxu0 0.0
        %817 = vmatpush.xpose.msra.mxu0 0.0
        %818 = vmatpush.xpose.msra.mxu0 %v801
        %819 = vmatmul.f32.gmra.mxu0 %v798
        %v820 = vpop.f32.mrf.mxu0
        %v821 = vadd.f32 0.0, %v820
        %822 = vdwg.mxu0
        %vm823 = vcmask 64512
        %v824 = vsel %vm823, %v821, -inf
        %825 = vmax.xlane.f32.xlu0 %v824
        %v826 = vpop.xlane.xlu0 %825
        %v827 = vsub.f32 %v821, %v826
        %v828 = vmul.f32 %v827, 1.442695
        %v829 = vpow.pop %v828
        %v830 = vsel %vm823, %v829, 0.0
        %831 = vadd.xlane.f32.xlu0 %v830
        %v832 = vpop.xlane.xlu0 %831
        %v833 = vrcp.pop %v832
        %v834 = vmul.f32 %v829, %v833
        %v836 = vsel %vm823, %v834, 0
        %838 = vmatpush.msra.mxu0 0.0
        %839 = vmatpush.msra.mxu0 0.0
        %840 = vmatpush.msra.mxu0 0.0
        %841 = vmatpush.msra.mxu0 0.0
        %842 = vmatpush.msra.mxu0 0.0
        %843 = vmatpush.msra.mxu0 0.0
        %844 = vmatpush.msra.mxu0 0.0
        %845 = vmatpush.msra.mxu0 0.0
        %846 = vmatpush.msra.mxu0 0.0
        %847 = vmatpush.msra.mxu0 0.0
        %848 = vmatpush.msra.mxu0 0.0
        %849 = vmatpush.msra.mxu0 0.0
        %850 = vmatpush.msra.mxu0 0.0
        %851 = vmatpush.msra.mxu0 0.0
        %852 = vmatpush.msra.mxu0 0.0
        %853 = vmatpush.msra.mxu0 %v794
        %854 = vmatmul.f32.gmra.mxu0 %v836
        %v855 = vpop.f32.mrf.mxu0
        %v856 = vadd.f32 0.0, %v855
        %857 = vdwg.mxu0
        %v858 = vld [vmem:[#allocation11] sm:$0xff]
        %v859 = vld [vmem:[#allocation11 + $0x8] sm:$0xff]
        %v860 = vld [vmem:[#allocation11 + $0x10] sm:$0xff]
        %v861 = vld [vmem:[#allocation11 + $0x18] sm:$0xff]
        %862 = vrot.lane.b32.xlu0 %v734, 96
        %v863 = vpop.permute.xlu0 %862
        %864 = vrot.lane.b32.xlu0 %v754, 96
        %v865 = vpop.permute.xlu0 %864
        %v866 = vsel %vm796, %v863, 0
        %v868 = vsel %vm796, %v865, 0
        %870 = vmatpush.xpose.msra.mxu0 0.0
        %871 = vmatpush.xpose.msra.mxu0 0.0
        %872 = vmatpush.xpose.msra.mxu0 0.0
        %873 = vmatpush.xpose.msra.mxu0 0.0
        %874 = vmatpush.xpose.msra.mxu0 0.0
        %875 = vmatpush.xpose.msra.mxu0 0.0
        %876 = vmatpush.xpose.msra.mxu0 0.0
        %877 = vmatpush.xpose.msra.mxu0 0.0
        %878 = vmatpush.xpose.msra.mxu0 0.0
        %879 = vmatpush.xpose.msra.mxu0 0.0
        %880 = vmatpush.xpose.msra.mxu0 0.0
        %881 = vmatpush.xpose.msra.mxu0 0.0
        %882 = vmatpush.xpose.msra.mxu0 0.0
        %883 = vmatpush.xpose.msra.mxu0 0.0
        %884 = vmatpush.xpose.msra.mxu0 0.0
        %885 = vmatpush.xpose.msra.mxu0 %v868
        %886 = vmatmul.f32.gmra.mxu0 %v866
        %v887 = vpop.f32.mrf.mxu0
        %v888 = vadd.f32 0.0, %v887
        %889 = vdwg.mxu0
        %v890 = vsel %vm823, %v888, -inf
        %891 = vmax.xlane.f32.xlu0 %v890
        %v892 = vpop.xlane.xlu0 %891
        %v893 = vsub.f32 %v888, %v892
        %v894 = vmul.f32 %v893, 1.442695
        %v895 = vpow.pop %v894
        %v896 = vsel %vm823, %v895, 0.0
        %897 = vadd.xlane.f32.xlu0 %v896
        %v898 = vpop.xlane.xlu0 %897
        %v899 = vrcp.pop %v898
        %v900 = vmul.f32 %v895, %v899
        %902 = vrot.lane.b32.xlu0 %v794, 96
        %v903 = vpop.permute.xlu0 %902
        %v906 = vsel %vm823, %v900, 0
        %908 = vmatpush.msra.mxu0 0.0
        %909 = vmatpush.msra.mxu0 0.0
        %910 = vmatpush.msra.mxu0 0.0
        %911 = vmatpush.msra.mxu0 0.0
        %912 = vmatpush.msra.mxu0 0.0
        %913 = vmatpush.msra.mxu0 0.0
        %914 = vmatpush.msra.mxu0 0.0
        %915 = vmatpush.msra.mxu0 0.0
        %916 = vmatpush.msra.mxu0 0.0
        %917 = vmatpush.msra.mxu0 0.0
        %918 = vmatpush.msra.mxu0 0.0
        %919 = vmatpush.msra.mxu0 0.0
        %920 = vmatpush.msra.mxu0 0.0
        %921 = vmatpush.msra.mxu0 0.0
        %922 = vmatpush.msra.mxu0 0.0
        %923 = vmatpush.msra.mxu0 %v903
        %924 = vmatmul.f32.gmra.mxu0 %v906
        %v925 = vpop.f32.mrf.mxu0
        %v926 = vadd.f32 0.0, %v925
        %927 = vdwg.mxu0
        %v928 = vld [vmem:[#allocation11 + $0x20] sm:$0xff]
        %v929 = vld [vmem:[#allocation11 + $0x28] sm:$0xff]
        %v930 = vld [vmem:[#allocation11 + $0x30] sm:$0xff]
        %v931 = vld [vmem:[#allocation11 + $0x38] sm:$0xff]
        %v933 = vsel %vm796, %v926, 0
        %935 = vmatpush.msra.mxu0 0.0
        %936 = vmatpush.msra.mxu0 0.0
        %937 = vmatpush.msra.mxu0 0.0
        %938 = vmatpush.msra.mxu0 0.0
        %939 = vmatpush.msra.mxu0 0.0
        %940 = vmatpush.msra.mxu0 0.0
        %941 = vmatpush.msra.mxu0 0.0
        %942 = vmatpush.msra.mxu0 0.0
        %943 = vmatpush.msra.mxu0 0.0
        %944 = vmatpush.msra.mxu0 0.0
        %945 = vmatpush.msra.mxu0 0.0
        %946 = vmatpush.msra.mxu0 0.0
        %947 = vmatpush.msra.mxu0 %v931
        %948 = vmatpush.msra.mxu0 %v930
        %949 = vmatpush.msra.mxu0 %v929
        %950 = vmatpush.msra.mxu0 %v928
        %951 = vmatmul.f32.gmra.mxu0 %v933
        %v952 = vpop.f32.mrf.mxu0
        %v953 = vadd.f32 0.0, %v952
        %954 = vdwg.mxu0
        %v956 = vsel %vm796, %v856, 0
        %958 = vmatpush.msra.mxu0 0.0
        %959 = vmatpush.msra.mxu0 0.0
        %960 = vmatpush.msra.mxu0 0.0
        %961 = vmatpush.msra.mxu0 0.0
        %962 = vmatpush.msra.mxu0 0.0
        %963 = vmatpush.msra.mxu0 0.0
        %964 = vmatpush.msra.mxu0 0.0
        %965 = vmatpush.msra.mxu0 0.0
        %966 = vmatpush.msra.mxu0 0.0
        %967 = vmatpush.msra.mxu0 0.0
        %968 = vmatpush.msra.mxu0 0.0
        %969 = vmatpush.msra.mxu0 0.0
        %970 = vmatpush.msra.mxu0 %v861
        %971 = vmatpush.msra.mxu0 %v860
        %972 = vmatpush.msra.mxu0 %v859
        %973 = vmatpush.msra.mxu0 %v858
        %974 = vmatmul.f32.gmra.mxu0 %v956
        %v975 = vpop.f32.mrf.mxu0
        %v976 = vadd.f32 %v953, %v975
        %977 = vdwg.mxu0
        %978 = vrot.lane.b32.xlu0 %v734, 64
        %v979 = vpop.permute.xlu0 %978
        %980 = vrot.lane.b32.xlu0 %v754, 64
        %v981 = vpop.permute.xlu0 %980
        %v982 = vsel %vm796, %v979, 0
        %v984 = vsel %vm796, %v981, 0
        %986 = vmatpush.xpose.msra.mxu0 0.0
        %987 = vmatpush.xpose.msra.mxu0 0.0
        %988 = vmatpush.xpose.msra.mxu0 0.0
        %989 = vmatpush.xpose.msra.mxu0 0.0
        %990 = vmatpush.xpose.msra.mxu0 0.0
        %991 = vmatpush.xpose.msra.mxu0 0.0
        %992 = vmatpush.xpose.msra.mxu0 0.0
        %993 = vmatpush.xpose.msra.mxu0 0.0
        %994 = vmatpush.xpose.msra.mxu0 0.0
        %995 = vmatpush.xpose.msra.mxu0 0.0
        %996 = vmatpush.xpose.msra.mxu0 0.0
        %997 = vmatpush.xpose.msra.mxu0 0.0
        %998 = vmatpush.xpose.msra.mxu0 0.0
        %999 = vmatpush.xpose.msra.mxu0 0.0
        %1000 = vmatpush.xpose.msra.mxu0 0.0
        %1001 = vmatpush.xpose.msra.mxu0 %v984
        %1002 = vmatmul.f32.gmra.mxu0 %v982
        %v1003 = vpop.f32.mrf.mxu0
        %v1004 = vadd.f32 0.0, %v1003
        %1005 = vdwg.mxu0
        %v1006 = vsel %vm823, %v1004, -inf
        %1007 = vmax.xlane.f32.xlu0 %v1006
        %v1008 = vpop.xlane.xlu0 %1007
        %v1009 = vsub.f32 %v1004, %v1008
        %v1010 = vmul.f32 %v1009, 1.442695
        %v1011 = vpow.pop %v1010
        %v1012 = vsel %vm823, %v1011, 0.0
        %1013 = vadd.xlane.f32.xlu0 %v1012
        %v1014 = vpop.xlane.xlu0 %1013
        %v1015 = vrcp.pop %v1014
        %v1016 = vmul.f32 %v1011, %v1015
        %1017 = vrot.lane.b32.xlu0 %v794, 64
        %v1018 = vpop.permute.xlu0 %1017
        %v1021 = vsel %vm823, %v1016, 0
        %1023 = vmatpush.msra.mxu0 0.0
        %1024 = vmatpush.msra.mxu0 0.0
        %1025 = vmatpush.msra.mxu0 0.0
        %1026 = vmatpush.msra.mxu0 0.0
        %1027 = vmatpush.msra.mxu0 0.0
        %1028 = vmatpush.msra.mxu0 0.0
        %1029 = vmatpush.msra.mxu0 0.0
        %1030 = vmatpush.msra.mxu0 0.0
        %1031 = vmatpush.msra.mxu0 0.0
        %1032 = vmatpush.msra.mxu0 0.0
        %1033 = vmatpush.msra.mxu0 0.0
        %1034 = vmatpush.msra.mxu0 0.0
        %1035 = vmatpush.msra.mxu0 0.0
        %1036 = vmatpush.msra.mxu0 0.0
        %1037 = vmatpush.msra.mxu0 0.0
        %1038 = vmatpush.msra.mxu0 %v1018
        %1039 = vmatmul.f32.gmra.mxu0 %v1021
        %v1040 = vpop.f32.mrf.mxu0
        %v1041 = vadd.f32 0.0, %v1040
        %1042 = vdwg.mxu0
        %v1043 = vld [vmem:[#allocation11 + $0x40] sm:$0xff]
        %v1044 = vld [vmem:[#allocation11 + $0x48] sm:$0xff]
        %v1045 = vld [vmem:[#allocation11 + $0x50] sm:$0xff]
        %v1046 = vld [vmem:[#allocation11 + $0x58] sm:$0xff]
        %v1048 = vsel %vm796, %v1041, 0
        %1050 = vmatpush.msra.mxu0 0.0
        %1051 = vmatpush.msra.mxu0 0.0
        %1052 = vmatpush.msra.mxu0 0.0
        %1053 = vmatpush.msra.mxu0 0.0
        %1054 = vmatpush.msra.mxu0 0.0
        %1055 = vmatpush.msra.mxu0 0.0
        %1056 = vmatpush.msra.mxu0 0.0
        %1057 = vmatpush.msra.mxu0 0.0
        %1058 = vmatpush.msra.mxu0 0.0
        %1059 = vmatpush.msra.mxu0 0.0
        %1060 = vmatpush.msra.mxu0 0.0
        %1061 = vmatpush.msra.mxu0 0.0
        %1062 = vmatpush.msra.mxu0 %v1046
        %1063 = vmatpush.msra.mxu0 %v1045
        %1064 = vmatpush.msra.mxu0 %v1044
        %1065 = vmatpush.msra.mxu0 %v1043
        %1066 = vmatmul.f32.gmra.mxu0 %v1048
        %v1067 = vpop.f32.mrf.mxu0
        %v1068 = vadd.f32 0.0, %v1067
        %1069 = vdwg.mxu0
        %v1070 = vadd.f32 %v976, %v1068
        %1071 = vrot.lane.b32.xlu0 %v734, 32
        %v1072 = vpop.permute.xlu0 %1071
        %1073 = vrot.lane.b32.xlu0 %v754, 32
        %v1074 = vpop.permute.xlu0 %1073
        %v1075 = vsel %vm796, %v1072, 0
        %v1077 = vsel %vm796, %v1074, 0
        %1079 = vmatpush.xpose.msra.mxu0 0.0
        %1080 = vmatpush.xpose.msra.mxu0 0.0
        %1081 = vmatpush.xpose.msra.mxu0 0.0
        %1082 = vmatpush.xpose.msra.mxu0 0.0
        %1083 = vmatpush.xpose.msra.mxu0 0.0
        %1084 = vmatpush.xpose.msra.mxu0 0.0
        %1085 = vmatpush.xpose.msra.mxu0 0.0
        %1086 = vmatpush.xpose.msra.mxu0 0.0
        %1087 = vmatpush.xpose.msra.mxu0 0.0
        %1088 = vmatpush.xpose.msra.mxu0 0.0
        %1089 = vmatpush.xpose.msra.mxu0 0.0
        %1090 = vmatpush.xpose.msra.mxu0 0.0
        %1091 = vmatpush.xpose.msra.mxu0 0.0
        %1092 = vmatpush.xpose.msra.mxu0 0.0
        %1093 = vmatpush.xpose.msra.mxu0 0.0
        %1094 = vmatpush.xpose.msra.mxu0 %v1077
        %1095 = vmatmul.f32.gmra.mxu0 %v1075
        %v1096 = vpop.f32.mrf.mxu0
        %v1097 = vadd.f32 0.0, %v1096
        %1098 = vdwg.mxu0
        %v1099 = vsel %vm823, %v1097, -inf
        %1100 = vmax.xlane.f32.xlu0 %v1099
        %v1101 = vpop.xlane.xlu0 %1100
        %v1102 = vsub.f32 %v1097, %v1101
        %v1103 = vmul.f32 %v1102, 1.442695
        %v1104 = vpow.pop %v1103
        %v1105 = vsel %vm823, %v1104, 0.0
        %1106 = vadd.xlane.f32.xlu0 %v1105
        %v1107 = vpop.xlane.xlu0 %1106
        %v1108 = vrcp.pop %v1107
        %v1109 = vmul.f32 %v1104, %v1108
        %1110 = vrot.lane.b32.xlu0 %v794, 32
        %v1111 = vpop.permute.xlu0 %1110
        %v1114 = vsel %vm823, %v1109, 0
        %1116 = vmatpush.msra.mxu0 0.0
        %1117 = vmatpush.msra.mxu0 0.0
        %1118 = vmatpush.msra.mxu0 0.0
        %1119 = vmatpush.msra.mxu0 0.0
        %1120 = vmatpush.msra.mxu0 0.0
        %1121 = vmatpush.msra.mxu0 0.0
        %1122 = vmatpush.msra.mxu0 0.0
        %1123 = vmatpush.msra.mxu0 0.0
        %1124 = vmatpush.msra.mxu0 0.0
        %1125 = vmatpush.msra.mxu0 0.0
        %1126 = vmatpush.msra.mxu0 0.0
        %1127 = vmatpush.msra.mxu0 0.0
        %1128 = vmatpush.msra.mxu0 0.0
        %1129 = vmatpush.msra.mxu0 0.0
        %1130 = vmatpush.msra.mxu0 0.0
        %1131 = vmatpush.msra.mxu0 %v1111
        %1132 = vmatmul.f32.gmra.mxu0 %v1114
        %v1133 = vpop.f32.mrf.mxu0
        %v1134 = vadd.f32 0.0, %v1133
        %1135 = vdwg.mxu0
        %v1136 = vld [vmem:[#allocation11 + $0x60] sm:$0xff]
        %v1137 = vld [vmem:[#allocation11 + $0x68] sm:$0xff]
        %v1138 = vld [vmem:[#allocation11 + $0x70] sm:$0xff]
        %v1139 = vld [vmem:[#allocation11 + $0x78] sm:$0xff]
        %v1141 = vsel %vm796, %v1134, 0
        %1143 = vmatpush.msra.mxu0 0.0
        %1144 = vmatpush.msra.mxu0 0.0
        %1145 = vmatpush.msra.mxu0 0.0
        %1146 = vmatpush.msra.mxu0 0.0
        %1147 = vmatpush.msra.mxu0 0.0
        %1148 = vmatpush.msra.mxu0 0.0
        %1149 = vmatpush.msra.mxu0 0.0
        %1150 = vmatpush.msra.mxu0 0.0
        %1151 = vmatpush.msra.mxu0 0.0
        %1152 = vmatpush.msra.mxu0 0.0
        %1153 = vmatpush.msra.mxu0 0.0
        %1154 = vmatpush.msra.mxu0 0.0
        %1155 = vmatpush.msra.mxu0 %v1139
        %1156 = vmatpush.msra.mxu0 %v1138
        %1157 = vmatpush.msra.mxu0 %v1137
        %1158 = vmatpush.msra.mxu0 %v1136
        %1159 = vmatmul.f32.gmra.mxu0 %v1141
        %v1160 = vpop.f32.mrf.mxu0
        %v1161 = vadd.f32 0.0, %v1160
        %1162 = vdwg.mxu0
        %v1163 = vadd.f32 %v1070, %v1161
        %v1164 = vld [vmem:[%s7] sm:$0x1]
        %v1166 = vperm.slane %v1164, 0
        %v1168 = vadd.f32 %v1163, %v1166
        %v1169 = vadd.f32 %v675, %v1168
        %1170 = vadd.xlane.f32.xlu0 %v1169
        %v1171 = vpop.xlane.xlu0 %1170
        %v1172 = vrcp.pop 128.0
        %v1173 = vmul.f32 128.0, %v1172
        %v1174 = vsub.f32 1.0, %v1173
        %v1175 = vmul.f32 %v1172, %v1174
        %v1176 = vadd.f32 %v1172, %v1175
        %vm1177 = vweird.f32 %v1172
        %v1178 = vsel %vm1177, %v1172, %v1176
        %v1179 = vmul.f32 %v1171, %v1178
        %v1180 = vsub.f32 %v1169, %v1179
        %v1181 = vmul.f32 %v1180, %v1180
        %1182 = vadd.xlane.f32.xlu0 %v1181
        %v1183 = vpop.xlane.xlu0 %1182
        %v1184 = vmul.f32 %v1183, %v1178
        %v1185 = vadd.f32 %v1184, 1e-05
        %v1186 = vrsqrt.pop %v1185
        %v1187 = vmul.f32 %v1186, %v1185
        %v1188 = vmul.f32 %v1187, %v1186
        %v1189 = vmul.f32 0.5, %v1188
        %v1190 = vsub.f32 1.5, %v1189
        %v1191 = vmul.f32 %v1186, %v1190
        %vm1192 = vweird.f32 %v1185
        %vm1193 = vweird.f32 %v1186
        %vm1194 = vmor %vm1192, %vm1193
        %v1195 = vsel %vm1194, %v1186, %v1191
        %v1196 = vmul.f32 %v1180, %v1195
        %v1197 = vld [vmem:[%s12] sm:$0x1]
        %v1199 = vperm.slane %v1197, 0
        %v1201 = vmul.f32 %v1196, %v1199
        %v1202 = vld [vmem:[%s13] sm:$0x1]
        %v1204 = vperm.slane %v1202, 0
        %v1206 = vadd.f32 %v1201, %v1204
        %v1207 = vld [vmem:[#allocation13] sm:$0xff]
        %v1208 = vld [vmem:[#allocation13 + $0x8] sm:$0xff]
        %v1209 = vld [vmem:[#allocation13 + $0x10] sm:$0xff]
        %v1210 = vld [vmem:[#allocation13 + $0x18] sm:$0xff]
        %v1211 = vld [vmem:[#allocation13 + $0x20] sm:$0xff]
        %v1212 = vld [vmem:[#allocation13 + $0x28] sm:$0xff]
        %v1213 = vld [vmem:[#allocation13 + $0x30] sm:$0xff]
        %v1214 = vld [vmem:[#allocation13 + $0x38] sm:$0xff]
        %v1215 = vld [vmem:[#allocation13 + $0x40] sm:$0xff]
        %v1216 = vld [vmem:[#allocation13 + $0x48] sm:$0xff]
        %v1217 = vld [vmem:[#allocation13 + $0x50] sm:$0xff]
        %v1218 = vld [vmem:[#allocation13 + $0x58] sm:$0xff]
        %v1219 = vld [vmem:[#allocation13 + $0x60] sm:$0xff]
        %v1220 = vld [vmem:[#allocation13 + $0x68] sm:$0xff]
        %v1221 = vld [vmem:[#allocation13 + $0x70] sm:$0xff]
        %v1222 = vld [vmem:[#allocation13 + $0x78] sm:$0xff]
        %v1223 = vld [vmem:[#allocation13 + $0x80] sm:$0xff]
        %v1224 = vld [vmem:[#allocation13 + $0x88] sm:$0xff]
        %v1225 = vld [vmem:[#allocation13 + $0x90] sm:$0xff]
        %v1226 = vld [vmem:[#allocation13 + $0x98] sm:$0xff]
        %v1227 = vld [vmem:[#allocation13 + $0xa0] sm:$0xff]
        %v1228 = vld [vmem:[#allocation13 + $0xa8] sm:$0xff]
        %v1229 = vld [vmem:[#allocation13 + $0xb0] sm:$0xff]
        %v1230 = vld [vmem:[#allocation13 + $0xb8] sm:$0xff]
        %v1231 = vld [vmem:[#allocation13 + $0xc0] sm:$0xff]
        %v1232 = vld [vmem:[#allocation13 + $0xc8] sm:$0xff]
        %v1233 = vld [vmem:[#allocation13 + $0xd0] sm:$0xff]
        %v1234 = vld [vmem:[#allocation13 + $0xd8] sm:$0xff]
        %v1235 = vld [vmem:[#allocation13 + $0xe0] sm:$0xff]
        %v1236 = vld [vmem:[#allocation13 + $0xe8] sm:$0xff]
        %v1237 = vld [vmem:[#allocation13 + $0xf0] sm:$0xff]
        %v1238 = vld [vmem:[#allocation13 + $0xf8] sm:$0xff]
        %v1239 = vld [vmem:[%s9] sm:$0x3]
        %v1241 = vperm.slane %v1239, 0
        %v1242 = vperm.slane %v1239, 1
        %1245 = vmatpush.msra.mxu0 %v1237
        %1246 = vmatpush.msra.mxu0 %v1235
        %1247 = vmatpush.msra.mxu0 %v1233
        %1248 = vmatpush.msra.mxu0 %v1231
        %1249 = vmatpush.msra.mxu0 %v1229
        %1250 = vmatpush.msra.mxu0 %v1227
        %1251 = vmatpush.msra.mxu0 %v1225
        %1252 = vmatpush.msra.mxu0 %v1223
        %1253 = vmatpush.msra.mxu0 %v1221
        %1254 = vmatpush.msra.mxu0 %v1219
        %1255 = vmatpush.msra.mxu0 %v1217
        %1256 = vmatpush.msra.mxu0 %v1215
        %1257 = vmatpush.msra.mxu0 %v1213
        %1258 = vmatpush.msra.mxu0 %v1211
        %1259 = vmatpush.msra.mxu0 %v1209
        %1260 = vmatpush.msra.mxu0 %v1207
        %1261 = vmatmul.f32.gmra.mxu0 %v1206
        %v1262 = vpop.f32.mrf.mxu0
        %v1263 = vadd.f32 %v1241, %v1262
        %1264 = vdwg.mxu0
        %1265 = vmatpush.msra.mxu0 %v1238
        %1266 = vmatpush.msra.mxu0 %v1236
        %1267 = vmatpush.msra.mxu0 %v1234
        %1268 = vmatpush.msra.mxu0 %v1232
        %1269 = vmatpush.msra.mxu0 %v1230
        %1270 = vmatpush.msra.mxu0 %v1228
        %1271 = vmatpush.msra.mxu0 %v1226
        %1272 = vmatpush.msra.mxu0 %v1224
        %1273 = vmatpush.msra.mxu0 %v1222
        %1274 = vmatpush.msra.mxu0 %v1220
        %1275 = vmatpush.msra.mxu0 %v1218
        %1276 = vmatpush.msra.mxu0 %v1216
        %1277 = vmatpush.msra.mxu0 %v1214
        %1278 = vmatpush.msra.mxu0 %v1212
        %1279 = vmatpush.msra.mxu0 %v1210
        %1280 = vmatpush.msra.mxu0 %v1208
        %1281 = vmatmul.f32.gmra.mxu0 %v1206
        %v1282 = vpop.f32.mrf.mxu0
        %v1283 = vadd.f32 %v1242, %v1282
        %1284 = vdwg.mxu0
        %v1285 = vmax.f32 %v1263, 0.0
        %v1286 = vmax.f32 %v1283, 0.0
        %v1287 = vld [vmem:[#allocation14] sm:$0xff]
        %v1288 = vld [vmem:[#allocation14 + $0x8] sm:$0xff]
        %v1289 = vld [vmem:[#allocation14 + $0x10] sm:$0xff]
        %v1290 = vld [vmem:[#allocation14 + $0x18] sm:$0xff]
        %v1291 = vld [vmem:[#allocation14 + $0x20] sm:$0xff]
        %v1292 = vld [vmem:[#allocation14 + $0x28] sm:$0xff]
        %v1293 = vld [vmem:[#allocation14 + $0x30] sm:$0xff]
        %v1294 = vld [vmem:[#allocation14 + $0x38] sm:$0xff]
        %v1295 = vld [vmem:[#allocation14 + $0x40] sm:$0xff]
        %v1296 = vld [vmem:[#allocation14 + $0x48] sm:$0xff]
        %v1297 = vld [vmem:[#allocation14 + $0x50] sm:$0xff]
        %v1298 = vld [vmem:[#allocation14 + $0x58] sm:$0xff]
        %v1299 = vld [vmem:[#allocation14 + $0x60] sm:$0xff]
        %v1300 = vld [vmem:[#allocation14 + $0x68] sm:$0xff]
        %v1301 = vld [vmem:[#allocation14 + $0x70] sm:$0xff]
        %v1302 = vld [vmem:[#allocation14 + $0x78] sm:$0xff]
        %v1303 = vld [vmem:[#allocation14 + $0x80] sm:$0xff]
        %v1304 = vld [vmem:[#allocation14 + $0x88] sm:$0xff]
        %v1305 = vld [vmem:[#allocation14 + $0x90] sm:$0xff]
        %v1306 = vld [vmem:[#allocation14 + $0x98] sm:$0xff]
        %v1307 = vld [vmem:[#allocation14 + $0xa0] sm:$0xff]
        %v1308 = vld [vmem:[#allocation14 + $0xa8] sm:$0xff]
        %v1309 = vld [vmem:[#allocation14 + $0xb0] sm:$0xff]
        %v1310 = vld [vmem:[#allocation14 + $0xb8] sm:$0xff]
        %v1311 = vld [vmem:[#allocation14 + $0xc0] sm:$0xff]
        %v1312 = vld [vmem:[#allocation14 + $0xc8] sm:$0xff]
        %v1313 = vld [vmem:[#allocation14 + $0xd0] sm:$0xff]
        %v1314 = vld [vmem:[#allocation14 + $0xd8] sm:$0xff]
        %v1315 = vld [vmem:[#allocation14 + $0xe0] sm:$0xff]
        %v1316 = vld [vmem:[#allocation14 + $0xe8] sm:$0xff]
        %v1317 = vld [vmem:[#allocation14 + $0xf0] sm:$0xff]
        %v1318 = vld [vmem:[#allocation14 + $0xf8] sm:$0xff]
        %v1319 = vld [vmem:[%s11] sm:$0x1]
        %v1321 = vperm.slane %v1319, 0
        %1323 = vmatpush.msra.mxu0 %v1302
        %1324 = vmatpush.msra.mxu0 %v1301
        %1325 = vmatpush.msra.mxu0 %v1300
        %1326 = vmatpush.msra.mxu0 %v1299
        %1327 = vmatpush.msra.mxu0 %v1298
        %1328 = vmatpush.msra.mxu0 %v1297
        %1329 = vmatpush.msra.mxu0 %v1296
        %1330 = vmatpush.msra.mxu0 %v1295
        %1331 = vmatpush.msra.mxu0 %v1294
        %1332 = vmatpush.msra.mxu0 %v1293
        %1333 = vmatpush.msra.mxu0 %v1292
        %1334 = vmatpush.msra.mxu0 %v1291
        %1335 = vmatpush.msra.mxu0 %v1290
        %1336 = vmatpush.msra.mxu0 %v1289
        %1337 = vmatpush.msra.mxu0 %v1288
        %1338 = vmatpush.msra.mxu0 %v1287
        %1339 = vmatmul.f32.gmra.mxu0 %v1285
        %v1340 = vpop.f32.mrf.mxu0
        %v1341 = vadd.f32 %v1321, %v1340
        %1342 = vdwg.mxu0
        %1343 = vmatpush.msra.mxu0 %v1318
        %1344 = vmatpush.msra.mxu0 %v1317
        %1345 = vmatpush.msra.mxu0 %v1316
        %1346 = vmatpush.msra.mxu0 %v1315
        %1347 = vmatpush.msra.mxu0 %v1314
        %1348 = vmatpush.msra.mxu0 %v1313
        %1349 = vmatpush.msra.mxu0 %v1312
        %1350 = vmatpush.msra.mxu0 %v1311
        %1351 = vmatpush.msra.mxu0 %v1310
        %1352 = vmatpush.msra.mxu0 %v1309
        %1353 = vmatpush.msra.mxu0 %v1308
        %1354 = vmatpush.msra.mxu0 %v1307
        %1355 = vmatpush.msra.mxu0 %v1306
        %1356 = vmatpush.msra.mxu0 %v1305
        %1357 = vmatpush.msra.mxu0 %v1304
        %1358 = vmatpush.msra.mxu0 %v1303
        %1359 = vmatmul.f32.gmra.mxu0 %v1286
        %v1360 = vpop.f32.mrf.mxu0
        %v1361 = vadd.f32 %v1341, %v1360
        %1362 = vdwg.mxu0
        %v1363 = vadd.f32 %v1206, %v1361
        %1364 = vadd.xlane.f32.xlu0 %v1363
        %v1365 = vpop.xlane.xlu0 %1364
        %v1366 = vmul.f32 %v1365, %v1178
        %v1367 = vsub.f32 %v1363, %v1366
        %v1368 = vmul.f32 %v1367, %v1367
        %1369 = vadd.xlane.f32.xlu0 %v1368
        %v1370 = vpop.xlane.xlu0 %1369
        %v1371 = vmul.f32 %v1370, %v1178
        %v1372 = vadd.f32 %v1371, 1e-05
        %v1373 = vrsqrt.pop %v1372
        %v1374 = vmul.f32 %v1373, %v1372
        %v1375 = vmul.f32 %v1374, %v1373
        %v1376 = vmul.f32 0.5, %v1375
        %v1377 = vsub.f32 1.5, %v1376
        %v1378 = vmul.f32 %v1373, %v1377
        %vm1379 = vweird.f32 %v1372
        %vm1380 = vweird.f32 %v1373
        %vm1381 = vmor %vm1379, %vm1380
        %v1382 = vsel %vm1381, %v1373, %v1378
        %v1383 = vmul.f32 %v1367, %v1382
        %v1384 = vld [vmem:[%s14] sm:$0x1]
        %v1386 = vperm.slane %v1384, 0
        %v1388 = vmul.f32 %v1383, %v1386
        %v1389 = vld [vmem:[%s15] sm:$0x1]
        %v1391 = vperm.slane %v1389, 0
        %v1393 = vadd.f32 %v1388, %v1391
        %1394 = vst [vmem:[%s674] sm:$0xff] %v1393
        %s1395 = sand.u32 %s393, 1
        %s1396 = scalar_lea.sflag [#allocation4], %s1395
        %s1397 = sand.u32 %s393, 1
        %s1398 = smul.addr %s1397, 8
        %s1399 = scalar_lea.vmem [#allocation16], %s1398
        // Predicated region
        $region117: #{tpu_custom_call.1} parent=83 // pred_check
          %p1400 = pneg %p403
        $region118: #{tpu_custom_call.1} parent=83 // pred_check_branch
          %1402 = sbr.rel (%p1400) target = $region120
        $region119: #{tpu_custom_call.1} parent=83 // pred_region
          %1404 = vsyncadd %s1396, 0
          %s1405 = smul.addr %s39, 8
          %s1406 = scalar_lea.hbm %s16, %s1405
          %s1408 = sshll.u32 %s1399, 4
          %s1409 = int_to_ptr.vmem [resolvable:$true] %s1408
          %s1410 = sshll.u32 %s1406, 4
          %s1411 = int_to_ptr.hbm [resolvable:$true] %s1410
          %1413 = dma.vmem_to_hbm [thread:$0]  %s1409, 128, %s1411, %s1396
        $region120: #{tpu_custom_call.1} parent=83 // pred_fallthru
          _
      $region84: #{tpu_custom_call.1} parent=5 // pred_fallthru
        _
      %p1414 = scmp.le.s32.totalorder 2, %s34
      // Predicated region
      $region121: #{tpu_custom_call.1} parent=5 // pred_check
        %p1415 = pneg %p1414
      $region122: #{tpu_custom_call.1} parent=5 // pred_check_branch
        %1417 = sbr.rel (%p1415) target = $region124
      $region123: #{tpu_custom_call.1} parent=5 // pred_region
        %s1418 = ssub.s32 %s34, 2
        // Predicated region
        $region125: #{tpu_custom_call.1} parent=123 // pred_check
          %p1419 = pneg %p409
        $region126: #{tpu_custom_call.1} parent=123 // pred_check_branch
          %1421 = sbr.rel (%p1419) target = $region128
        $region127: #{tpu_custom_call.1} parent=123 // pred_region
          %s1422 = sand.u32 %s394, 1
          %s1423 = scalar_lea.sflag [#allocation4], %s1422
          %s1424 = sand.u32 %s394, 1
          %s1425 = smul.addr %s1424, 8
          %s1426 = scalar_lea.vmem [#allocation16], %s1425
          %1428 = dma.done %s1423, 128
        $region128: #{tpu_custom_call.1} parent=123 // pred_fallthru
          _
      $region124: #{tpu_custom_call.1} parent=5 // pred_fallthru
        _
    $region6: #{tpu_custom_call.1} parent=1 // loop_footer
      %s38 = sadd.s32 1, %s34
    $region7: #{tpu_custom_call.1} parent=1 // loop_footer_branch
      %33 = sbr.rel target = $region3
    $region8: #{tpu_custom_call.1} parent=1 // loop_exit
      _
    %1429 = vsyncpa [#allocation3], 1
    %s1430 = scalar_lea.sflag [#allocation3], 1
    %1431 = vsyncpa %s1430, 1
    %1432 = vsyncpa [#allocation6], 1
    %s1433 = scalar_lea.sflag [#allocation6], 1
    %1434 = vsyncpa %s1433, 1
    %1435 = vsyncpa [#allocation9], 1
    %1436 = vsyncpa [#allocation12], 1
    %1437 = vsyncpa [#allocation15], 1
    %1438 = vsyncpa [#allocation4], 1
    %s1439 = scalar_lea.sflag [#allocation4], 1
    %1440 = vsyncpa %s1439, 1

// kernel: tpu_custom_call.1
$region0: #{tpu_custom_call.1}
  #allocation0 [shape = 'u32[]', space=smem, size = 0x4, offset = 0x4, fixed_abs, tag = 'smem constant byte address 0x4 - core index']
  #allocation1 [shape = 'u32[72,128]{1,0:T(1,128)}', space=vmem, size = 0x9000, scoped, tag = 'internal scratch']
  %s0 = inlined_call_operand.hbm [shape: f32[2,8,128], index: 0, kind: input, shape index: {}]
  %s1 = inlined_call_operand.hbm [shape: f32[2,8,128], index: 1, kind: input, shape index: {}]
  %s2 = inlined_call_operand.hbm [shape: f32[128,256], index: 2, kind: input, shape index: {}]
  %s3 = inlined_call_operand.vmem [shape: f32[1,256], index: 3, kind: input, shape index: {}]
  %s4 = inlined_call_operand.hbm [shape: f32[128,128], index: 4, kind: input, shape index: {}]
  %s5 = inlined_call_operand.hbm [shape: f32[1,128], index: 5, kind: input, shape index: {}]
  %s6 = inlined_call_operand.hbm [shape: f32[128,128], index: 6, kind: input, shape index: {}]
  %s7 = inlined_call_operand.vmem [shape: f32[1,128], index: 7, kind: input, shape index: {}]
  %s8 = inlined_call_operand.hbm [shape: f32[128,256], index: 8, kind: input, shape index: {}]
  %s9 = inlined_call_operand.vmem [shape: f32[1,256], index: 9, kind: input, shape index: {}]
  %s10 = inlined_call_operand.hbm [shape: f32[256,128], index: 10, kind: input, shape index: {}]
  %s11 = inlined_call_operand.vmem [shape: f32[1,128], index: 11, kind: input, shape index: {}]
  %s12 = inlined_call_operand.vmem [shape: f32[1,128], index: 12, kind: input, shape index: {}]
  %s13 = inlined_call_operand.vmem [shape: f32[1,128], index: 13, kind: input, shape index: {}]
  %s14 = inlined_call_operand.vmem [shape: f32[1,128], index: 14, kind: input, shape index: {}]
  %s15 = inlined_call_operand.vmem [shape: f32[1,128], index: 15, kind: input, shape index: {}]
  %s16 = inlined_call_operand.hbm [shape: f32[2,8,128], index: 16, kind: output, shape index: {}]
  %s17 = sld [smem:[#allocation0]]
  $region129: #{tpu_custom_call.1} parent=0
    _
  %s19 = ssub.s32 1, %s17
  %s20 = scalar_select 0, %s19, %s17
  $region1: #{tpu_custom_call.1} parent=0
    #allocation2 [shape = 'u8[8192]{0}', space=vmem, size = 0x2000, scoped, tag = 'input window, operand 0']
    #allocation3 [shape = 's32[2]{0}', space=sflag, size = 0x8, scoped, tag = 'scoped memory for tpu_custom_call.1']
    #allocation4 [shape = 's32[2]{0}', space=sflag, size = 0x8, scoped, tag = 'scoped memory for tpu_custom_call.1']
    #allocation5 [shape = 'u8[8192]{0}', space=vmem, size = 0x2000, scoped, tag = 'input window, operand 1']
    #allocation6 [shape = 's32[2]{0}', space=sflag, size = 0x8, scoped, tag = 'scoped memory for tpu_custom_call.1']
    #allocation7 [shape = 'u8[131072]{0}', space=vmem, size = 0x20000, scoped, tag = 'input window, operand 2, single buffered']
    #allocation8 [shape = 'u8[65536]{0}', space=vmem, size = 0x10000, scoped, tag = 'input window, operand 4, single buffered']
    #allocation9 [shape = 's32[1]{0}', space=sflag, size = 0x4, scoped, tag = 'scoped memory for tpu_custom_call.1']
    #allocation10 [shape = 'u8[512]{0}', space=vmem, size = 0x400, scoped, tag = 'input window, operand 5, single buffered']
    #allocation11 [shape = 'u8[65536]{0}', space=vmem, size = 0x10000, scoped, tag = 'input window, operand 6, single buffered']
    #allocation12 [shape = 's32[1]{0}', space=sflag, size = 0x4, scoped, tag = 'scoped memory for tpu_custom_call.1']
    #allocation13 [shape = 'u8[131072]{0}', space=vmem, size = 0x20000, scoped, tag = 'input window, operand 8, single buffered']
    #allocation14 [shape = 'u8[131072]{0}', space=vmem, size = 0x20000, scoped, tag = 'input window, operand 10, single buffered']
    #allocation15 [shape = 's32[1]{0}', space=sflag, size = 0x4, scoped, tag = 'scoped memory for tpu_custom_call.1']
    #allocation16 [shape = 'u8[8192]{0}', space=vmem, size = 0x2000, scoped, tag = 'output window, operand 0']
    %21 = vsyncpa [#allocation3], 0
    %s22 = scalar_lea.sflag [#allocation3], 1
    %23 = vsyncpa %s22, 0
    %24 = vsyncpa [#allocation6], 0
    %s25 = scalar_lea.sflag [#allocation6], 1
    %26 = vsyncpa %s25, 0
    %27 = vsyncpa [#allocation9], 0
    %28 = vsyncpa [#allocation12], 0
    %29 = vsyncpa [#allocation15], 0
    %30 = vsyncpa [#allocation4], 0
    %s31 = scalar_lea.sflag [#allocation4], 1
    %32 = vsyncpa %s31, 0
    loop: start=0, step=1, limit=4
    $region2: #{tpu_custom_call.1} parent=1 // loop_pre_header
      _
    $region3: #{tpu_custom_call.1} parent=1 // loop_header
      %s34 = sphi 0, %s38
      %p35 = scmp.ge.s32.totalorder %s34, 4
      %s44 = sphi 0, %s46
      %s47 = sphi 0, %s44
      %s48 = sphi 0, %s47
      %s64 = sphi 0, %s48
      %s70 = sphi 0, %s72
      %s73 = sphi 0, %s70
      %s74 = sphi 0, %s73
      %s90 = sphi 0, %s74
      %s94 = sphi 0, %s94
      %s96 = sphi 0, %s94
      %s97 = sphi 0, %s96
      %s111 = sphi 0, %s97
      %s115 = sphi 0, %s115
      %s117 = sphi 0, %s115
      %s118 = sphi 0, %s117
      %s132 = sphi 0, %s118
      %s136 = sphi 0, %s136
      %s138 = sphi 0, %s136
      %s139 = sphi 0, %s138
      %s153 = sphi 0, %s139
      %s157 = sphi 0, %s157
      %s159 = sphi 0, %s157
      %s160 = sphi 0, %s159
      %s174 = sphi 0, %s160
      %s178 = sphi 0, %s178
      %s180 = sphi 0, %s178
      %s181 = sphi 0, %s180
      %s195 = sphi 0, %s181
      %s199 = sphi 0, %s199
      %s201 = sphi 0, %s199
      %s202 = sphi 0, %s201
      %s216 = sphi 0, %s202
      %s220 = sphi 0, %s220
      %s222 = sphi 0, %s220
      %s223 = sphi 0, %s222
      %s237 = sphi 0, %s223
      %s241 = sphi 0, %s241
      %s243 = sphi 0, %s241
      %s244 = sphi 0, %s243
      %s258 = sphi 0, %s244
      %s262 = sphi 0, %s262
      %s264 = sphi 0, %s262
      %s265 = sphi 0, %s264
      %s279 = sphi 0, %s265
      %s283 = sphi 0, %s283
      %s285 = sphi 0, %s283
      %s286 = sphi 0, %s285
      %s300 = sphi 0, %s286
      %s304 = sphi 0, %s304
      %s306 = sphi 0, %s304
      %s307 = sphi 0, %s306
      %s321 = sphi 0, %s307
      %s325 = sphi 0, %s325
      %s327 = sphi 0, %s325
      %s328 = sphi 0, %s327
      %s342 = sphi 0, %s328
      %s346 = sphi 0, %s346
      %s348 = sphi 0, %s346
      %s349 = sphi 0, %s348
      %s363 = sphi 0, %s349
      %s367 = sphi 0, %s367
      %s369 = sphi 0, %s367
      %s370 = sphi 0, %s369
      %s384 = sphi 0, %s370
      %s390 = sphi 0, %s392
      %s393 = sphi 0, %s390
      %s394 = sphi 0, %s393
      %s410 = sphi 0, %s394
    $region4: #{tpu_custom_call.1} parent=1 // loop_header_branch
      %37 = sbr.rel (%p35) target = $region8
    $region5: #{tpu_custom_call.1} parent=1 // loop_body
      %s39 = ssub.s32 %s34, 1
      %s40 = ssub.s32 %s34, 2
      %s41 = sadd.s32 %s34, 1
      %s42 = ssub.s32 %s34, %s41
      %p43 = scmp.eq.s32.totalorder %s42, 0
      %s45 = sadd.s32 %s44, 1
      %s46 = scalar_select %p43, %s44, %s45
      %p49 = pneg %p43
      %p50 = scmp.eq.s32.totalorder %s34, 1
      %p51 = por %p49, %p50
      %p52 = scmp.ne.s32.totalorder %s44, %s47
      %p53 = scmp.eq.s32.totalorder %s34, 0
      %p54 = por %p52, %p53
      %p55 = scmp.ne.s32.totalorder %s44, %s47
      %p56 = scmp.eq.s32.totalorder %s39, 1
      %p57 = por %p55, %p56
      %p58 = scmp.ne.s32.totalorder %s47, %s48
      %p59 = scmp.eq.s32.totalorder %s39, 0
      %p60 = por %p58, %p59
      %p61 = scmp.ne.s32.totalorder %s47, %s48
      %p62 = scmp.eq.s32.totalorder %s40, 1
      %p63 = por %p61, %p62
      %p65 = scmp.ne.s32.totalorder %s48, %s64
      %p66 = scmp.eq.s32.totalorder %s40, 0
      %p67 = por %p65, %p66
      %s68 = ssub.s32 %s34, %s41
      %p69 = scmp.eq.s32.totalorder %s68, 0
      %s71 = sadd.s32 %s70, 1
      %s72 = scalar_select %p69, %s70, %s71
      %p75 = pneg %p69
      %p76 = scmp.eq.s32.totalorder %s34, 1
      %p77 = por %p75, %p76
      %p78 = scmp.ne.s32.totalorder %s70, %s73
      %p79 = scmp.eq.s32.totalorder %s34, 0
      %p80 = por %p78, %p79
      %p81 = scmp.ne.s32.totalorder %s70, %s73
      %p82 = scmp.eq.s32.totalorder %s39, 1
      %p83 = por %p81, %p82
      %p84 = scmp.ne.s32.totalorder %s73, %s74
      %p85 = scmp.eq.s32.totalorder %s39, 0
      %p86 = por %p84, %p85
      %p87 = scmp.ne.s32.totalorder %s73, %s74
      %p88 = scmp.eq.s32.totalorder %s40, 1
      %p89 = por %p87, %p88
      %p91 = scmp.ne.s32.totalorder %s74, %s90
      %p92 = scmp.eq.s32.totalorder %s40, 0
      %p93 = por %p91, %p92
      %s95 = sadd.s32 %s94, 1
      %p98 = scmp.eq.s32.totalorder %s34, 1
      %p99 = scmp.ne.s32.totalorder %s94, %s96
      %p100 = scmp.eq.s32.totalorder %s34, 0
      %p101 = por %p99, %p100
      %p102 = scmp.ne.s32.totalorder %s94, %s96
      %p103 = scmp.eq.s32.totalorder %s39, 1
      %p104 = por %p102, %p103
      %p105 = scmp.ne.s32.totalorder %s96, %s97
      %p106 = scmp.eq.s32.totalorder %s39, 0
      %p107 = por %p105, %p106
      %p108 = scmp.ne.s32.totalorder %s96, %s97
      %p109 = scmp.eq.s32.totalorder %s40, 1
      %p110 = por %p108, %p109
      %p112 = scmp.ne.s32.totalorder %s97, %s111
      %p113 = scmp.eq.s32.totalorder %s40, 0
      %p114 = por %p112, %p113
      %s116 = sadd.s32 %s115, 1
      %p119 = scmp.eq.s32.totalorder %s34, 1
      %p120 = scmp.ne.s32.totalorder %s115, %s117
      %p121 = scmp.eq.s32.totalorder %s34, 0
      %p122 = por %p120, %p121
      %p123 = scmp.ne.s32.totalorder %s115, %s117
      %p124 = scmp.eq.s32.totalorder %s39, 1
      %p125 = por %p123, %p124
      %p126 = scmp.ne.s32.totalorder %s117, %s118
      %p127 = scmp.eq.s32.totalorder %s39, 0
      %p128 = por %p126, %p127
      %p129 = scmp.ne.s32.totalorder %s117, %s118
      %p130 = scmp.eq.s32.totalorder %s40, 1
      %p131 = por %p129, %p130
      %p133 = scmp.ne.s32.totalorder %s118, %s132
      %p134 = scmp.eq.s32.totalorder %s40, 0
      %p135 = por %p133, %p134
      %s137 = sadd.s32 %s136, 1
      %p140 = scmp.eq.s32.totalorder %s34, 1
      %p141 = scmp.ne.s32.totalorder %s136, %s138
      %p142 = scmp.eq.s32.totalorder %s34, 0
      %p143 = por %p141, %p142
      %p144 = scmp.ne.s32.totalorder %s136, %s138
      %p145 = scmp.eq.s32.totalorder %s39, 1
      %p146 = por %p144, %p145
      %p147 = scmp.ne.s32.totalorder %s138, %s139
      %p148 = scmp.eq.s32.totalorder %s39, 0
      %p149 = por %p147, %p148
      %p150 = scmp.ne.s32.totalorder %s138, %s139
      %p151 = scmp.eq.s32.totalorder %s40, 1
      %p152 = por %p150, %p151
      %p154 = scmp.ne.s32.totalorder %s139, %s153
      %p155 = scmp.eq.s32.totalorder %s40, 0
      %p156 = por %p154, %p155
      %s158 = sadd.s32 %s157, 1
      %p161 = scmp.eq.s32.totalorder %s34, 1
      %p162 = scmp.ne.s32.totalorder %s157, %s159
      %p163 = scmp.eq.s32.totalorder %s34, 0
      %p164 = por %p162, %p163
      %p165 = scmp.ne.s32.totalorder %s157, %s159
      %p166 = scmp.eq.s32.totalorder %s39, 1
      %p167 = por %p165, %p166
      %p168 = scmp.ne.s32.totalorder %s159, %s160
      %p169 = scmp.eq.s32.totalorder %s39, 0
      %p170 = por %p168, %p169
      %p171 = scmp.ne.s32.totalorder %s159, %s160
      %p172 = scmp.eq.s32.totalorder %s40, 1
      %p173 = por %p171, %p172
      %p175 = scmp.ne.s32.totalorder %s160, %s174
      %p176 = scmp.eq.s32.totalorder %s40, 0
      %p177 = por %p175, %p176
      %s179 = sadd.s32 %s178, 1
      %p182 = scmp.eq.s32.totalorder %s34, 1
      %p183 = scmp.ne.s32.totalorder %s178, %s180
      %p184 = scmp.eq.s32.totalorder %s34, 0
      %p185 = por %p183, %p184
      %p186 = scmp.ne.s32.totalorder %s178, %s180
      %p187 = scmp.eq.s32.totalorder %s39, 1
      %p188 = por %p186, %p187
      %p189 = scmp.ne.s32.totalorder %s180, %s181
      %p190 = scmp.eq.s32.totalorder %s39, 0
      %p191 = por %p189, %p190
      %p192 = scmp.ne.s32.totalorder %s180, %s181
      %p193 = scmp.eq.s32.totalorder %s40, 1
      %p194 = por %p192, %p193
      %p196 = scmp.ne.s32.totalorder %s181, %s195
      %p197 = scmp.eq.s32.totalorder %s40, 0
      %p198 = por %p196, %p197
      %s200 = sadd.s32 %s199, 1
      %p203 = scmp.eq.s32.totalorder %s34, 1
      %p204 = scmp.ne.s32.totalorder %s199, %s201
      %p205 = scmp.eq.s32.totalorder %s34, 0
      %p206 = por %p204, %p205
      %p207 = scmp.ne.s32.totalorder %s199, %s201
      %p208 = scmp.eq.s32.totalorder %s39, 1
      %p209 = por %p207, %p208
      %p210 = scmp.ne.s32.totalorder %s201, %s202
      %p211 = scmp.eq.s32.totalorder %s39, 0
      %p212 = por %p210, %p211
      %p213 = scmp.ne.s32.totalorder %s201, %s202
      %p214 = scmp.eq.s32.totalorder %s40, 1
      %p215 = por %p213, %p214
      %p217 = scmp.ne.s32.totalorder %s202, %s216
      %p218 = scmp.eq.s32.totalorder %s40, 0
      %p219 = por %p217, %p218
      %s221 = sadd.s32 %s220, 1
      %p224 = scmp.eq.s32.totalorder %s34, 1
      %p225 = scmp.ne.s32.totalorder %s220, %s222
      %p226 = scmp.eq.s32.totalorder %s34, 0
      %p227 = por %p225, %p226
      %p228 = scmp.ne.s32.totalorder %s220, %s222
      %p229 = scmp.eq.s32.totalorder %s39, 1
      %p230 = por %p228, %p229
      %p231 = scmp.ne.s32.totalorder %s222, %s223
      %p232 = scmp.eq.s32.totalorder %s39, 0
      %p233 = por %p231, %p232
      %p234 = scmp.ne.s32.totalorder %s222, %s223
      %p235 = scmp.eq.s32.totalorder %s40, 1
      %p236 = por %p234, %p235
      %p238 = scmp.ne.s32.totalorder %s223, %s237
      %p239 = scmp.eq.s32.totalorder %s40, 0
      %p240 = por %p238, %p239
      %s242 = sadd.s32 %s241, 1
      %p245 = scmp.eq.s32.totalorder %s34, 1
      %p246 = scmp.ne.s32.totalorder %s241, %s243
      %p247 = scmp.eq.s32.totalorder %s34, 0
      %p248 = por %p246, %p247
      %p249 = scmp.ne.s32.totalorder %s241, %s243
      %p250 = scmp.eq.s32.totalorder %s39, 1
      %p251 = por %p249, %p250
      %p252 = scmp.ne.s32.totalorder %s243, %s244
      %p253 = scmp.eq.s32.totalorder %s39, 0
      %p254 = por %p252, %p253
      %p255 = scmp.ne.s32.totalorder %s243, %s244
      %p256 = scmp.eq.s32.totalorder %s40, 1
      %p257 = por %p255, %p256
      %p259 = scmp.ne.s32.totalorder %s244, %s258
      %p260 = scmp.eq.s32.totalorder %s40, 0
      %p261 = por %p259, %p260
      %s263 = sadd.s32 %s262, 1
      %p266 = scmp.eq.s32.totalorder %s34, 1
      %p267 = scmp.ne.s32.totalorder %s262, %s264
      %p268 = scmp.eq.s32.totalorder %s34, 0
      %p269 = por %p267, %p268
      %p270 = scmp.ne.s32.totalorder %s262, %s264
      %p271 = scmp.eq.s32.totalorder %s39, 1
      %p272 = por %p270, %p271
      %p273 = scmp.ne.s32.totalorder %s264, %s265
      %p274 = scmp.eq.s32.totalorder %s39, 0
      %p275 = por %p273, %p274
      %p276 = scmp.ne.s32.totalorder %s264, %s265
      %p277 = scmp.eq.s32.totalorder %s40, 1
      %p278 = por %p276, %p277
      %p280 = scmp.ne.s32.totalorder %s265, %s279
      %p281 = scmp.eq.s32.totalorder %s40, 0
      %p282 = por %p280, %p281
      %s284 = sadd.s32 %s283, 1
      %p287 = scmp.eq.s32.totalorder %s34, 1
      %p288 = scmp.ne.s32.totalorder %s283, %s285
      %p289 = scmp.eq.s32.totalorder %s34, 0
      %p290 = por %p288, %p289
      %p291 = scmp.ne.s32.totalorder %s283, %s285
      %p292 = scmp.eq.s32.totalorder %s39, 1
      %p293 = por %p291, %p292
      %p294 = scmp.ne.s32.totalorder %s285, %s286
      %p295 = scmp.eq.s32.totalorder %s39, 0
      %p296 = por %p294, %p295
      %p297 = scmp.ne.s32.totalorder %s285, %s286
      %p298 = scmp.eq.s32.totalorder %s40, 1
      %p299 = por %p297, %p298
      %p301 = scmp.ne.s32.totalorder %s286, %s300
      %p302 = scmp.eq.s32.totalorder %s40, 0
      %p303 = por %p301, %p302
      %s305 = sadd.s32 %s304, 1
      %p308 = scmp.eq.s32.totalorder %s34, 1
      %p309 = scmp.ne.s32.totalorder %s304, %s306
      %p310 = scmp.eq.s32.totalorder %s34, 0
      %p311 = por %p309, %p310
      %p312 = scmp.ne.s32.totalorder %s304, %s306
      %p313 = scmp.eq.s32.totalorder %s39, 1
      %p314 = por %p312, %p313
      %p315 = scmp.ne.s32.totalorder %s306, %s307
      %p316 = scmp.eq.s32.totalorder %s39, 0
      %p317 = por %p315, %p316
      %p318 = scmp.ne.s32.totalorder %s306, %s307
      %p319 = scmp.eq.s32.totalorder %s40, 1
      %p320 = por %p318, %p319
      %p322 = scmp.ne.s32.totalorder %s307, %s321
      %p323 = scmp.eq.s32.totalorder %s40, 0
      %p324 = por %p322, %p323
      %s326 = sadd.s32 %s325, 1
      %p329 = scmp.eq.s32.totalorder %s34, 1
      %p330 = scmp.ne.s32.totalorder %s325, %s327
      %p331 = scmp.eq.s32.totalorder %s34, 0
      %p332 = por %p330, %p331
      %p333 = scmp.ne.s32.totalorder %s325, %s327
      %p334 = scmp.eq.s32.totalorder %s39, 1
      %p335 = por %p333, %p334
      %p336 = scmp.ne.s32.totalorder %s327, %s328
      %p337 = scmp.eq.s32.totalorder %s39, 0
      %p338 = por %p336, %p337
      %p339 = scmp.ne.s32.totalorder %s327, %s328
      %p340 = scmp.eq.s32.totalorder %s40, 1
      %p341 = por %p339, %p340
      %p343 = scmp.ne.s32.totalorder %s328, %s342
      %p344 = scmp.eq.s32.totalorder %s40, 0
      %p345 = por %p343, %p344
      %s347 = sadd.s32 %s346, 1
      %p350 = scmp.eq.s32.totalorder %s34, 1
      %p351 = scmp.ne.s32.totalorder %s346, %s348
      %p352 = scmp.eq.s32.totalorder %s34, 0
      %p353 = por %p351, %p352
      %p354 = scmp.ne.s32.totalorder %s346, %s348
      %p355 = scmp.eq.s32.totalorder %s39, 1
      %p356 = por %p354, %p355
      %p357 = scmp.ne.s32.totalorder %s348, %s349
      %p358 = scmp.eq.s32.totalorder %s39, 0
      %p359 = por %p357, %p358
      %p360 = scmp.ne.s32.totalorder %s348, %s349
      %p361 = scmp.eq.s32.totalorder %s40, 1
      %p362 = por %p360, %p361
      %p364 = scmp.ne.s32.totalorder %s349, %s363
      %p365 = scmp.eq.s32.totalorder %s40, 0
      %p366 = por %p364, %p365
      %s368 = sadd.s32 %s367, 1
      %p371 = scmp.eq.s32.totalorder %s34, 1
      %p372 = scmp.ne.s32.totalorder %s367, %s369
      %p373 = scmp.eq.s32.totalorder %s34, 0
      %p374 = por %p372, %p373
      %p375 = scmp.ne.s32.totalorder %s367, %s369
      %p376 = scmp.eq.s32.totalorder %s39, 1
      %p377 = por %p375, %p376
      %p378 = scmp.ne.s32.totalorder %s369, %s370
      %p379 = scmp.eq.s32.totalorder %s39, 0
      %p380 = por %p378, %p379
      %p381 = scmp.ne.s32.totalorder %s369, %s370
      %p382 = scmp.eq.s32.totalorder %s40, 1
      %p383 = por %p381, %p382
      %p385 = scmp.ne.s32.totalorder %s370, %s384
      %p386 = scmp.eq.s32.totalorder %s40, 0
      %p387 = por %p385, %p386
      %s388 = ssub.s32 %s34, %s41
      %p389 = scmp.eq.s32.totalorder %s388, 0
      %s391 = sadd.s32 %s390, 1
      %s392 = scalar_select %p389, %s390, %s391
      %p395 = pneg %p389
      %p396 = scmp.eq.s32.totalorder %s34, 1
      %p397 = por %p395, %p396
      %p398 = scmp.ne.s32.totalorder %s390, %s393
      %p399 = scmp.eq.s32.totalorder %s34, 0
      %p400 = por %p398, %p399
      %p401 = scmp.ne.s32.totalorder %s390, %s393
      %p402 = scmp.eq.s32.totalorder %s39, 1
      %p403 = por %p401, %p402
      %p404 = scmp.ne.s32.totalorder %s393, %s394
      %p405 = scmp.eq.s32.totalorder %s39, 0
      %p406 = por %p404, %p405
      %p407 = scmp.ne.s32.totalorder %s393, %s394
      %p408 = scmp.eq.s32.totalorder %s40, 1
      %p409 = por %p407, %p408
      %p411 = scmp.ne.s32.totalorder %s394, %s410
      %p412 = scmp.eq.s32.totalorder %s40, 0
      %p413 = por %p411, %p412
      %p414 = scmp.le.s32.totalorder 1, %s34
      %p415 = scmp.lt.s32.totalorder %s34, 3
      %p416 = pnand %p414, %p415
      %p417 = pneg %p416
      // Predicated region
      $region9: #{tpu_custom_call.1} parent=5 // pred_check
        _
      $region10: #{tpu_custom_call.1} parent=5 // pred_check_branch
        %419 = sbr.rel (%p416) target = $region12
      $region11: #{tpu_custom_call.1} parent=5 // pred_region
        %s420 = ssub.s32 %s34, 1
        // Predicated region
        $region13: #{tpu_custom_call.1} parent=11 // pred_check
          %p421 = pneg %p107
        $region14: #{tpu_custom_call.1} parent=11 // pred_check_branch
          %423 = sbr.rel (%p421) target = $region16
        $region15: #{tpu_custom_call.1} parent=11 // pred_region
          %425 = vsyncadd [#allocation6], 0
          %s426 = sshll.u32 %s2, 4
          %s427 = int_to_ptr.hbm [resolvable:$true] %s426
          %s428 = sshll.u32 [#allocation7], 4
          %s429 = int_to_ptr.vmem [resolvable:$true] %s428
          %434 = dma.hbm_to_vmem [thread:$0]  %s427, 4096, %s429, [#allocation6], 256, 256, 16
        $region16: #{tpu_custom_call.1} parent=11 // pred_fallthru
          _
        // Predicated region
        $region17: #{tpu_custom_call.1} parent=11 // pred_check
          %p435 = pneg %p128
        $region18: #{tpu_custom_call.1} parent=11 // pred_check_branch
          %437 = sbr.rel (%p435) target = $region20
        $region19: #{tpu_custom_call.1} parent=11 // pred_region
          _
        $region20: #{tpu_custom_call.1} parent=11 // pred_fallthru
          _
        // Predicated region
        $region21: #{tpu_custom_call.1} parent=11 // pred_check
          %p438 = pneg %p149
        $region22: #{tpu_custom_call.1} parent=11 // pred_check_branch
          %440 = sbr.rel (%p438) target = $region24
        $region23: #{tpu_custom_call.1} parent=11 // pred_region
          %442 = vsyncadd [#allocation9], 0
          %s443 = sshll.u32 %s4, 4
          %s444 = int_to_ptr.hbm [resolvable:$true] %s443
          %s445 = sshll.u32 [#allocation8], 4
          %s446 = int_to_ptr.vmem [resolvable:$true] %s445
          %451 = dma.hbm_to_vmem [thread:$0]  %s444, 2048, %s446, [#allocation9], 128, 128, 8
        $region24: #{tpu_custom_call.1} parent=11 // pred_fallthru
          _
        // Predicated region
        $region25: #{tpu_custom_call.1} parent=11 // pred_check
          %p452 = pneg %p170
        $region26: #{tpu_custom_call.1} parent=11 // pred_check_branch
          %454 = sbr.rel (%p452) target = $region28
        $region27: #{tpu_custom_call.1} parent=11 // pred_region
          %456 = vsyncadd [#allocation9], 0
          %s458 = sshll.u32 %s5, 4
          %s459 = int_to_ptr.hbm [resolvable:$true] %s458
          %s460 = sshll.u32 [#allocation10], 4
          %s461 = int_to_ptr.vmem [resolvable:$true] %s460
          %463 = dma.hbm_to_vmem [thread:$0]  %s459, 16, %s461, [#allocation9]
        $region28: #{tpu_custom_call.1} parent=11 // pred_fallthru
          _
        // Predicated region
        $region29: #{tpu_custom_call.1} parent=11 // pred_check
          %p464 = pneg %p191
        $region30: #{tpu_custom_call.1} parent=11 // pred_check_branch
          %466 = sbr.rel (%p464) target = $region32
        $region31: #{tpu_custom_call.1} parent=11 // pred_region
          %468 = vsyncadd [#allocation12], 0
          %s469 = sshll.u32 %s6, 4
          %s470 = int_to_ptr.hbm [resolvable:$true] %s469
          %s471 = sshll.u32 [#allocation11], 4
          %s472 = int_to_ptr.vmem [resolvable:$true] %s471
          %477 = dma.hbm_to_vmem [thread:$0]  %s470, 2048, %s472, [#allocation12], 128, 128, 8
        $region32: #{tpu_custom_call.1} parent=11 // pred_fallthru
          _
        // Predicated region
        $region33: #{tpu_custom_call.1} parent=11 // pred_check
          %p478 = pneg %p212
        $region34: #{tpu_custom_call.1} parent=11 // pred_check_branch
          %480 = sbr.rel (%p478) target = $region36
        $region35: #{tpu_custom_call.1} parent=11 // pred_region
          _
        $region36: #{tpu_custom_call.1} parent=11 // pred_fallthru
          _
        // Predicated region
        $region37: #{tpu_custom_call.1} parent=11 // pred_check
          %p481 = pneg %p233
        $region38: #{tpu_custom_call.1} parent=11 // pred_check_branch
          %483 = sbr.rel (%p481) target = $region40
        $region39: #{tpu_custom_call.1} parent=11 // pred_region
          %485 = vsyncadd [#allocation12], 0
          %s486 = sshll.u32 %s8, 4
          %s487 = int_to_ptr.hbm [resolvable:$true] %s486
          %s488 = sshll.u32 [#allocation13], 4
          %s489 = int_to_ptr.vmem [resolvable:$true] %s488
          %494 = dma.hbm_to_vmem [thread:$0]  %s487, 4096, %s489, [#allocation12], 256, 256, 16
        $region40: #{tpu_custom_call.1} parent=11 // pred_fallthru
          _
        // Predicated region
        $region41: #{tpu_custom_call.1} parent=11 // pred_check
          %p495 = pneg %p254
        $region42: #{tpu_custom_call.1} parent=11 // pred_check_branch
          %497 = sbr.rel (%p495) target = $region44
        $region43: #{tpu_custom_call.1} parent=11 // pred_region
          _
        $region44: #{tpu_custom_call.1} parent=11 // pred_fallthru
          _
        // Predicated region
        $region45: #{tpu_custom_call.1} parent=11 // pred_check
          %p498 = pneg %p275
        $region46: #{tpu_custom_call.1} parent=11 // pred_check_branch
          %500 = sbr.rel (%p498) target = $region48
        $region47: #{tpu_custom_call.1} parent=11 // pred_region
          %502 = vsyncadd [#allocation15], 0
          %s503 = sshll.u32 %s10, 4
          %s504 = int_to_ptr.hbm [resolvable:$true] %s503
          %s505 = sshll.u32 [#allocation14], 4
          %s506 = int_to_ptr.vmem [resolvable:$true] %s505
          %511 = dma.hbm_to_vmem [thread:$0]  %s504, 4096, %s506, [#allocation15], 128, 128, 8
        $region48: #{tpu_custom_call.1} parent=11 // pred_fallthru
          _
        // Predicated region
        $region49: #{tpu_custom_call.1} parent=11 // pred_check
          %p512 = pneg %p296
        $region50: #{tpu_custom_call.1} parent=11 // pred_check_branch
          %514 = sbr.rel (%p512) target = $region52
        $region51: #{tpu_custom_call.1} parent=11 // pred_region
          _
        $region52: #{tpu_custom_call.1} parent=11 // pred_fallthru
          _
        // Predicated region
        $region53: #{tpu_custom_call.1} parent=11 // pred_check
          %p515 = pneg %p317
        $region54: #{tpu_custom_call.1} parent=11 // pred_check_branch
          %517 = sbr.rel (%p515) target = $region56
        $region55: #{tpu_custom_call.1} parent=11 // pred_region
          _
        $region56: #{tpu_custom_call.1} parent=11 // pred_fallthru
          _
        // Predicated region
        $region57: #{tpu_custom_call.1} parent=11 // pred_check
          %p518 = pneg %p338
        $region58: #{tpu_custom_call.1} parent=11 // pred_check_branch
          %520 = sbr.rel (%p518) target = $region60
        $region59: #{tpu_custom_call.1} parent=11 // pred_region
          _
        $region60: #{tpu_custom_call.1} parent=11 // pred_fallthru
          _
        // Predicated region
        $region61: #{tpu_custom_call.1} parent=11 // pred_check
          %p521 = pneg %p359
        $region62: #{tpu_custom_call.1} parent=11 // pred_check_branch
          %523 = sbr.rel (%p521) target = $region64
        $region63: #{tpu_custom_call.1} parent=11 // pred_region
          _
        $region64: #{tpu_custom_call.1} parent=11 // pred_fallthru
          _
        // Predicated region
        $region65: #{tpu_custom_call.1} parent=11 // pred_check
          %p524 = pneg %p380
        $region66: #{tpu_custom_call.1} parent=11 // pred_check_branch
          %526 = sbr.rel (%p524) target = $region68
        $region67: #{tpu_custom_call.1} parent=11 // pred_region
          _
        $region68: #{tpu_custom_call.1} parent=11 // pred_fallthru
          _
      $region12: #{tpu_custom_call.1} parent=5 // pred_fallthru
        _
      %p527 = scmp.lt.s32.totalorder %s34, 2
      // Predicated region
      $region69: #{tpu_custom_call.1} parent=5 // pred_check
        %p528 = pneg %p527
      $region70: #{tpu_custom_call.1} parent=5 // pred_check_branch
        %530 = sbr.rel (%p528) target = $region72
      $region71: #{tpu_custom_call.1} parent=5 // pred_region
        // Predicated region
        $region73: #{tpu_custom_call.1} parent=71 // pred_check
          %p531 = pneg %p54
        $region74: #{tpu_custom_call.1} parent=71 // pred_check_branch
          %533 = sbr.rel (%p531) target = $region76
        $region75: #{tpu_custom_call.1} parent=71 // pred_region
          %s534 = sand.u32 %s44, 1
          %s535 = scalar_lea.sflag [#allocation3], %s534
          %s536 = sand.u32 %s44, 1
          %s537 = smul.addr %s536, 8
          %s538 = scalar_lea.vmem [#allocation2], %s537
          %540 = vsyncadd %s535, 0
          %s541 = smul.addr %s34, 8
          %s542 = scalar_lea.hbm %s0, %s541
          %s544 = sshll.u32 %s542, 4
          %s545 = int_to_ptr.hbm [resolvable:$true] %s544
          %s546 = sshll.u32 %s538, 4
          %s547 = int_to_ptr.vmem [resolvable:$true] %s546
          %549 = dma.hbm_to_vmem [thread:$0]  %s545, 128, %s547, %s535
        $region76: #{tpu_custom_call.1} parent=71 // pred_fallthru
          _
        // Predicated region
        $region77: #{tpu_custom_call.1} parent=71 // pred_check
          %p550 = pneg %p80
        $region78: #{tpu_custom_call.1} parent=71 // pred_check_branch
          %552 = sbr.rel (%p550) target = $region80
        $region79: #{tpu_custom_call.1} parent=71 // pred_region
          %s553 = sand.u32 %s34, 1
          %s554 = scalar_lea.sflag [#allocation6], %s553
          %s555 = sand.u32 %s70, 1
          %s556 = smul.addr %s555, 8
          %s557 = scalar_lea.vmem [#allocation5], %s556
          %559 = vsyncadd %s554, 0
          %s560 = smul.addr %s34, 8
          %s561 = scalar_lea.hbm %s1, %s560
          %s563 = sshll.u32 %s561, 4
          %s564 = int_to_ptr.hbm [resolvable:$true] %s563
          %s565 = sshll.u32 %s557, 4
          %s566 = int_to_ptr.vmem [resolvable:$true] %s565
          %568 = dma.hbm_to_vmem [thread:$0]  %s564, 128, %s566, %s554
        $region80: #{tpu_custom_call.1} parent=71 // pred_fallthru
          _
      $region72: #{tpu_custom_call.1} parent=5 // pred_fallthru
        _
      %p569 = scmp.le.s32.totalorder 1, %s34
      %p570 = scmp.lt.s32.totalorder %s34, 3
      %p571 = pnand %p569, %p570
      %p572 = pneg %p571
      // Predicated region
      $region81: #{tpu_custom_call.1} parent=5 // pred_check
        _
      $region82: #{tpu_custom_call.1} parent=5 // pred_check_branch
        %574 = sbr.rel (%p571) target = $region84
      $region83: #{tpu_custom_call.1} parent=5 // pred_region
        %s575 = ssub.s32 %s34, 1
        %s576 = sand.u32 %s47, 1
        %s577 = scalar_lea.sflag [#allocation3], %s576
        %s578 = sand.u32 %s47, 1
        %s579 = smul.addr %s578, 8
        %s580 = scalar_lea.vmem [#allocation2], %s579
        // Predicated region
        $region85: #{tpu_custom_call.1} parent=83 // pred_check
          %p581 = pneg %p60
        $region86: #{tpu_custom_call.1} parent=83 // pred_check_branch
          %583 = sbr.rel (%p581) target = $region88
        $region87: #{tpu_custom_call.1} parent=83 // pred_region
          %585 = dma.done %s577, 128
        $region88: #{tpu_custom_call.1} parent=83 // pred_fallthru
          _
        %s586 = sand.u32 %s39, 1
        %s587 = scalar_lea.sflag [#allocation6], %s586
        %s588 = sand.u32 %s73, 1
        %s589 = smul.addr %s588, 8
        %s590 = scalar_lea.vmem [#allocation5], %s589
        // Predicated region
        $region89: #{tpu_custom_call.1} parent=83 // pred_check
          %p591 = pneg %p86
        $region90: #{tpu_custom_call.1} parent=83 // pred_check_branch
          %593 = sbr.rel (%p591) target = $region92
        $region91: #{tpu_custom_call.1} parent=83 // pred_region
          %595 = dma.done %s587, 128
        $region92: #{tpu_custom_call.1} parent=83 // pred_fallthru
          _
        // Predicated region
        $region93: #{tpu_custom_call.1} parent=83 // pred_check
          %p596 = pneg %p107
        $region94: #{tpu_custom_call.1} parent=83 // pred_check_branch
          %598 = sbr.rel (%p596) target = $region96
        $region95: #{tpu_custom_call.1} parent=83 // pred_region
          %600 = dma.done [#allocation6], 4096
        $region96: #{tpu_custom_call.1} parent=83 // pred_fallthru
          _
        // Predicated region
        $region97: #{tpu_custom_call.1} parent=83 // pred_check
          %p601 = pneg %p149
        $region98: #{tpu_custom_call.1} parent=83 // pred_check_branch
          %603 = sbr.rel (%p601) target = $region100
        $region99: #{tpu_custom_call.1} parent=83 // pred_region
          %605 = dma.done [#allocation9], 2048
        $region100: #{tpu_custom_call.1} parent=83 // pred_fallthru
          _
        // Predicated region
        $region101: #{tpu_custom_call.1} parent=83 // pred_check
          %p606 = pneg %p170
        $region102: #{tpu_custom_call.1} parent=83 // pred_check_branch
          %608 = sbr.rel (%p606) target = $region104
        $region103: #{tpu_custom_call.1} parent=83 // pred_region
          %610 = dma.done [#allocation9], 16
        $region104: #{tpu_custom_call.1} parent=83 // pred_fallthru
          _
        // Predicated region
        $region105: #{tpu_custom_call.1} parent=83 // pred_check
          %p611 = pneg %p191
        $region106: #{tpu_custom_call.1} parent=83 // pred_check_branch
          %613 = sbr.rel (%p611) target = $region108
        $region107: #{tpu_custom_call.1} parent=83 // pred_region
          %615 = dma.done [#allocation12], 2048
        $region108: #{tpu_custom_call.1} parent=83 // pred_fallthru
          _
        // Predicated region
        $region109: #{tpu_custom_call.1} parent=83 // pred_check
          %p616 = pneg %p233
        $region110: #{tpu_custom_call.1} parent=83 // pred_check_branch
          %618 = sbr.rel (%p616) target = $region112
        $region111: #{tpu_custom_call.1} parent=83 // pred_region
          %620 = dma.done [#allocation12], 4096
        $region112: #{tpu_custom_call.1} parent=83 // pred_fallthru
          _
        // Predicated region
        $region113: #{tpu_custom_call.1} parent=83 // pred_check
          %p621 = pneg %p275
        $region114: #{tpu_custom_call.1} parent=83 // pred_check_branch
          %623 = sbr.rel (%p621) target = $region116
        $region115: #{tpu_custom_call.1} parent=83 // pred_region
          %625 = dma.done [#allocation15], 4096
        $region116: #{tpu_custom_call.1} parent=83 // pred_fallthru
          _
        %s626 = sand.u32 %s47, 1
        %s627 = scalar_lea.sflag [#allocation3], %s626
        %s628 = sand.u32 %s47, 1
        %s629 = smul.addr %s628, 8
        %s630 = scalar_lea.vmem [#allocation2], %s629
        %p631 = pneg %p60
        %p632 = pneg %p57
        %s633 = sand.u32 %s39, 1
        %s634 = scalar_lea.sflag [#allocation6], %s633
        %s635 = sand.u32 %s73, 1
        %s636 = smul.addr %s635, 8
        %s637 = scalar_lea.vmem [#allocation5], %s636
        %p638 = pneg %p86
        %p639 = pneg %p83
        %p640 = pneg %p107
        %p641 = pneg %p104
        %p642 = pneg %p128
        %p643 = pneg %p125
        %p644 = pneg %p149
        %p645 = pneg %p146
        %p646 = pneg %p170
        %p647 = pneg %p167
        %p648 = pneg %p191
        %p649 = pneg %p188
        %p650 = pneg %p212
        %p651 = pneg %p209
        %p652 = pneg %p233
        %p653 = pneg %p230
        %p654 = pneg %p254
        %p655 = pneg %p251
        %p656 = pneg %p275
        %p657 = pneg %p272
        %p658 = pneg %p296
        %p659 = pneg %p293
        %p660 = pneg %p317
        %p661 = pneg %p314
        %p662 = pneg %p338
        %p663 = pneg %p335
        %p664 = pneg %p359
        %p665 = pneg %p356
        %p666 = pneg %p380
        %p667 = pneg %p377
        %p668 = pneg %p406
        %p669 = pneg %p403
        %s670 = sand.u32 %s393, 1
        %s671 = scalar_lea.sflag [#allocation4], %s670
        %s672 = sand.u32 %s393, 1
        %s673 = smul.addr %s672, 8
        %s674 = scalar_lea.vmem [#allocation16], %s673
        %v675 = vld [vmem:[%s580] sm:$0xff]
        %v676 = vld [vmem:[%s590] sm:$0xff]
        %v677 = vadd.f32 %v675, %v676
        %v678 = vld [vmem:[#allocation7] sm:$0xff]
        %v679 = vld [vmem:[#allocation7 + $0x8] sm:$0xff]
        %v680 = vld [vmem:[#allocation7 + $0x10] sm:$0xff]
        %v681 = vld [vmem:[#allocation7 + $0x18] sm:$0xff]
        %v682 = vld [vmem:[#allocation7 + $0x20] sm:$0xff]
        %v683 = vld [vmem:[#allocation7 + $0x28] sm:$0xff]
        %v684 = vld [vmem:[#allocation7 + $0x30] sm:$0xff]
        %v685 = vld [vmem:[#allocation7 + $0x38] sm:$0xff]
        %v686 = vld [vmem:[#allocation7 + $0x40] sm:$0xff]
        %v687 = vld [vmem:[#allocation7 + $0x48] sm:$0xff]
        %v688 = vld [vmem:[#allocation7 + $0x50] sm:$0xff]
        %v689 = vld [vmem:[#allocation7 + $0x58] sm:$0xff]
        %v690 = vld [vmem:[#allocation7 + $0x60] sm:$0xff]
        %v691 = vld [vmem:[#allocation7 + $0x68] sm:$0xff]
        %v692 = vld [vmem:[#allocation7 + $0x70] sm:$0xff]
        %v693 = vld [vmem:[#allocation7 + $0x78] sm:$0xff]
        %v694 = vld [vmem:[#allocation7 + $0x80] sm:$0xff]
        %v695 = vld [vmem:[#allocation7 + $0x88] sm:$0xff]
        %v696 = vld [vmem:[#allocation7 + $0x90] sm:$0xff]
        %v697 = vld [vmem:[#allocation7 + $0x98] sm:$0xff]
        %v698 = vld [vmem:[#allocation7 + $0xa0] sm:$0xff]
        %v699 = vld [vmem:[#allocation7 + $0xa8] sm:$0xff]
        %v700 = vld [vmem:[#allocation7 + $0xb0] sm:$0xff]
        %v701 = vld [vmem:[#allocation7 + $0xb8] sm:$0xff]
        %v702 = vld [vmem:[#allocation7 + $0xc0] sm:$0xff]
        %v703 = vld [vmem:[#allocation7 + $0xc8] sm:$0xff]
        %v704 = vld [vmem:[#allocation7 + $0xd0] sm:$0xff]
        %v705 = vld [vmem:[#allocation7 + $0xd8] sm:$0xff]
        %v706 = vld [vmem:[#allocation7 + $0xe0] sm:$0xff]
        %v707 = vld [vmem:[#allocation7 + $0xe8] sm:$0xff]
        %v708 = vld [vmem:[#allocation7 + $0xf0] sm:$0xff]
        %v709 = vld [vmem:[#allocation7 + $0xf8] sm:$0xff]
        %v710 = vld [vmem:[%s3] sm:$0x3]
        %v712 = vperm.slane %v710, 0
        %v713 = vperm.slane %v710, 1
        %716 = vmatpush.msra.mxu0 %v708
        %717 = vmatpush.msra.mxu0 %v706
        %718 = vmatpush.msra.mxu0 %v704
        %719 = vmatpush.msra.mxu0 %v702
        %720 = vmatpush.msra.mxu0 %v700
        %721 = vmatpush.msra.mxu0 %v698
        %722 = vmatpush.msra.mxu0 %v696
        %723 = vmatpush.msra.mxu0 %v694
        %724 = vmatpush.msra.mxu0 %v692
        %725 = vmatpush.msra.mxu0 %v690
        %726 = vmatpush.msra.mxu0 %v688
        %727 = vmatpush.msra.mxu0 %v686
        %728 = vmatpush.msra.mxu0 %v684
        %729 = vmatpush.msra.mxu0 %v682
        %730 = vmatpush.msra.mxu0 %v680
        %731 = vmatpush.msra.mxu0 %v678
        %732 = vmatmul.f32.gmra.mxu0 %v677
        %v733 = vpop.f32.mrf.mxu0
        %v734 = vadd.f32 %v712, %v733
        %735 = vdwg.mxu0
        %736 = vmatpush.msra.mxu0 %v709
        %737 = vmatpush.msra.mxu0 %v707
        %738 = vmatpush.msra.mxu0 %v705
        %739 = vmatpush.msra.mxu0 %v703
        %740 = vmatpush.msra.mxu0 %v701
        %741 = vmatpush.msra.mxu0 %v699
        %742 = vmatpush.msra.mxu0 %v697
        %743 = vmatpush.msra.mxu0 %v695
        %744 = vmatpush.msra.mxu0 %v693
        %745 = vmatpush.msra.mxu0 %v691
        %746 = vmatpush.msra.mxu0 %v689
        %747 = vmatpush.msra.mxu0 %v687
        %748 = vmatpush.msra.mxu0 %v685
        %749 = vmatpush.msra.mxu0 %v683
        %750 = vmatpush.msra.mxu0 %v681
        %751 = vmatpush.msra.mxu0 %v679
        %752 = vmatmul.f32.gmra.mxu0 %v677
        %v753 = vpop.f32.mrf.mxu0
        %v754 = vadd.f32 %v713, %v753
        %755 = vdwg.mxu0
        %v756 = vld [vmem:[#allocation8] sm:$0xff]
        %v757 = vld [vmem:[#allocation8 + $0x8] sm:$0xff]
        %v758 = vld [vmem:[#allocation8 + $0x10] sm:$0xff]
        %v759 = vld [vmem:[#allocation8 + $0x18] sm:$0xff]
        %v760 = vld [vmem:[#allocation8 + $0x20] sm:$0xff]
        %v761 = vld [vmem:[#allocation8 + $0x28] sm:$0xff]
        %v762 = vld [vmem:[#allocation8 + $0x30] sm:$0xff]
        %v763 = vld [vmem:[#allocation8 + $0x38] sm:$0xff]
        %v764 = vld [vmem:[#allocation8 + $0x40] sm:$0xff]
        %v765 = vld [vmem:[#allocation8 + $0x48] sm:$0xff]
        %v766 = vld [vmem:[#allocation8 + $0x50] sm:$0xff]
        %v767 = vld [vmem:[#allocation8 + $0x58] sm:$0xff]
        %v768 = vld [vmem:[#allocation8 + $0x60] sm:$0xff]
        %v769 = vld [vmem:[#allocation8 + $0x68] sm:$0xff]
        %v770 = vld [vmem:[#allocation8 + $0x70] sm:$0xff]
        %v771 = vld [vmem:[#allocation8 + $0x78] sm:$0xff]
        %v772 = vld [vmem:[#allocation10] sm:$0x1]
        %v774 = vperm.slane %v772, 0
        %776 = vmatpush.msra.mxu0 %v771
        %777 = vmatpush.msra.mxu0 %v770
        %778 = vmatpush.msra.mxu0 %v769
        %779 = vmatpush.msra.mxu0 %v768
        %780 = vmatpush.msra.mxu0 %v767
        %781 = vmatpush.msra.mxu0 %v766
        %782 = vmatpush.msra.mxu0 %v765
        %783 = vmatpush.msra.mxu0 %v764
        %784 = vmatpush.msra.mxu0 %v763
        %785 = vmatpush.msra.mxu0 %v762
        %786 = vmatpush.msra.mxu0 %v761
        %787 = vmatpush.msra.mxu0 %v760
        %788 = vmatpush.msra.mxu0 %v759
        %789 = vmatpush.msra.mxu0 %v758
        %790 = vmatpush.msra.mxu0 %v757
        %791 = vmatpush.msra.mxu0 %v756
        %792 = vmatmul.f32.gmra.mxu0 %v675
        %v793 = vpop.f32.mrf.mxu0
        %v794 = vadd.f32 %v774, %v793
        %795 = vdwg.mxu0
        %vm796 = vcmask 261120
        %v798 = vsel %vm796, %v734, 0
        %v801 = vsel %vm796, %v754, 0
        %803 = vmatpush.xpose.msra.mxu0 0.0
        %804 = vmatpush.xpose.msra.mxu0 0.0
        %805 = vmatpush.xpose.msra.mxu0 0.0
        %806 = vmatpush.xpose.msra.mxu0 0.0
        %807 = vmatpush.xpose.msra.mxu0 0.0
        %808 = vmatpush.xpose.msra.mxu0 0.0
        %809 = vmatpush.xpose.msra.mxu0 0.0
        %810 = vmatpush.xpose.msra.mxu0 0.0
        %811 = vmatpush.xpose.msra.mxu0 0.0
        %812 = vmatpush.xpose.msra.mxu0 0.0
        %813 = vmatpush.xpose.msra.mxu0 0.0
        %814 = vmatpush.xpose.msra.mxu0 0.0
        %815 = vmatpush.xpose.msra.mxu0 0.0
        %816 = vmatpush.xpose.msra.mxu0 0.0
        %817 = vmatpush.xpose.msra.mxu0 0.0
        %818 = vmatpush.xpose.msra.mxu0 %v801
        %819 = vmatmul.f32.gmra.mxu0 %v798
        %v820 = vpop.f32.mrf.mxu0
        %v821 = vadd.f32 0.0, %v820
        %822 = vdwg.mxu0
        %vm823 = vcmask 64512
        %v824 = vsel %vm823, %v821, -inf
        %825 = vmax.xlane.f32.xlu0 %v824
        %v826 = vpop.xlane.xlu0 %825
        %v827 = vsub.f32 %v821, %v826
        %v828 = vmul.f32 %v827, 1.442695
        %v829 = vpow.pop %v828
        %v830 = vsel %vm823, %v829, 0.0
        %831 = vadd.xlane.f32.xlu0 %v830
        %v832 = vpop.xlane.xlu0 %831
        %v833 = vrcp.pop %v832
        %v834 = vmul.f32 %v829, %v833
        %v836 = vsel %vm823, %v834, 0
        %838 = vmatpush.msra.mxu0 0.0
        %839 = vmatpush.msra.mxu0 0.0
        %840 = vmatpush.msra.mxu0 0.0
        %841 = vmatpush.msra.mxu0 0.0
        %842 = vmatpush.msra.mxu0 0.0
        %843 = vmatpush.msra.mxu0 0.0
        %844 = vmatpush.msra.mxu0 0.0
        %845 = vmatpush.msra.mxu0 0.0
        %846 = vmatpush.msra.mxu0 0.0
        %847 = vmatpush.msra.mxu0 0.0
        %848 = vmatpush.msra.mxu0 0.0
        %849 = vmatpush.msra.mxu0 0.0
        %850 = vmatpush.msra.mxu0 0.0
        %851 = vmatpush.msra.mxu0 0.0
        %852 = vmatpush.msra.mxu0 0.0
        %853 = vmatpush.msra.mxu0 %v794
        %854 = vmatmul.f32.gmra.mxu0 %v836
        %v855 = vpop.f32.mrf.mxu0
        %v856 = vadd.f32 0.0, %v855
        %857 = vdwg.mxu0
        %v858 = vld [vmem:[#allocation11] sm:$0xff]
        %v859 = vld [vmem:[#allocation11 + $0x8] sm:$0xff]
        %v860 = vld [vmem:[#allocation11 + $0x10] sm:$0xff]
        %v861 = vld [vmem:[#allocation11 + $0x18] sm:$0xff]
        %862 = vrot.lane.b32.xlu0 %v734, 96
        %v863 = vpop.permute.xlu0 %862
        %864 = vrot.lane.b32.xlu0 %v754, 96
        %v865 = vpop.permute.xlu0 %864
        %v866 = vsel %vm796, %v863, 0
        %v868 = vsel %vm796, %v865, 0
        %870 = vmatpush.xpose.msra.mxu0 0.0
        %871 = vmatpush.xpose.msra.mxu0 0.0
        %872 = vmatpush.xpose.msra.mxu0 0.0
        %873 = vmatpush.xpose.msra.mxu0 0.0
        %874 = vmatpush.xpose.msra.mxu0 0.0
        %875 = vmatpush.xpose.msra.mxu0 0.0
        %876 = vmatpush.xpose.msra.mxu0 0.0
        %877 = vmatpush.xpose.msra.mxu0 0.0
        %878 = vmatpush.xpose.msra.mxu0 0.0
        %879 = vmatpush.xpose.msra.mxu0 0.0
        %880 = vmatpush.xpose.msra.mxu0 0.0
        %881 = vmatpush.xpose.msra.mxu0 0.0
        %882 = vmatpush.xpose.msra.mxu0 0.0
        %883 = vmatpush.xpose.msra.mxu0 0.0
        %884 = vmatpush.xpose.msra.mxu0 0.0
        %885 = vmatpush.xpose.msra.mxu0 %v868
        %886 = vmatmul.f32.gmra.mxu0 %v866
        %v887 = vpop.f32.mrf.mxu0
        %v888 = vadd.f32 0.0, %v887
        %889 = vdwg.mxu0
        %v890 = vsel %vm823, %v888, -inf
        %891 = vmax.xlane.f32.xlu0 %v890
        %v892 = vpop.xlane.xlu0 %891
        %v893 = vsub.f32 %v888, %v892
        %v894 = vmul.f32 %v893, 1.442695
        %v895 = vpow.pop %v894
        %v896 = vsel %vm823, %v895, 0.0
        %897 = vadd.xlane.f32.xlu0 %v896
        %v898 = vpop.xlane.xlu0 %897
        %v899 = vrcp.pop %v898
        %v900 = vmul.f32 %v895, %v899
        %902 = vrot.lane.b32.xlu0 %v794, 96
        %v903 = vpop.permute.xlu0 %902
        %v906 = vsel %vm823, %v900, 0
        %908 = vmatpush.msra.mxu0 0.0
        %909 = vmatpush.msra.mxu0 0.0
        %910 = vmatpush.msra.mxu0 0.0
        %911 = vmatpush.msra.mxu0 0.0
        %912 = vmatpush.msra.mxu0 0.0
        %913 = vmatpush.msra.mxu0 0.0
        %914 = vmatpush.msra.mxu0 0.0
        %915 = vmatpush.msra.mxu0 0.0
        %916 = vmatpush.msra.mxu0 0.0
        %917 = vmatpush.msra.mxu0 0.0
        %918 = vmatpush.msra.mxu0 0.0
        %919 = vmatpush.msra.mxu0 0.0
        %920 = vmatpush.msra.mxu0 0.0
        %921 = vmatpush.msra.mxu0 0.0
        %922 = vmatpush.msra.mxu0 0.0
        %923 = vmatpush.msra.mxu0 %v903
        %924 = vmatmul.f32.gmra.mxu0 %v906
        %v925 = vpop.f32.mrf.mxu0
        %v926 = vadd.f32 0.0, %v925
        %927 = vdwg.mxu0
        %v928 = vld [vmem:[#allocation11 + $0x20] sm:$0xff]
        %v929 = vld [vmem:[#allocation11 + $0x28] sm:$0xff]
        %v930 = vld [vmem:[#allocation11 + $0x30] sm:$0xff]
        %v931 = vld [vmem:[#allocation11 + $0x38] sm:$0xff]
        %v933 = vsel %vm796, %v926, 0
        %935 = vmatpush.msra.mxu0 0.0
        %936 = vmatpush.msra.mxu0 0.0
        %937 = vmatpush.msra.mxu0 0.0
        %938 = vmatpush.msra.mxu0 0.0
        %939 = vmatpush.msra.mxu0 0.0
        %940 = vmatpush.msra.mxu0 0.0
        %941 = vmatpush.msra.mxu0 0.0
        %942 = vmatpush.msra.mxu0 0.0
        %943 = vmatpush.msra.mxu0 0.0
        %944 = vmatpush.msra.mxu0 0.0
        %945 = vmatpush.msra.mxu0 0.0
        %946 = vmatpush.msra.mxu0 0.0
        %947 = vmatpush.msra.mxu0 %v931
        %948 = vmatpush.msra.mxu0 %v930
        %949 = vmatpush.msra.mxu0 %v929
        %950 = vmatpush.msra.mxu0 %v928
        %951 = vmatmul.f32.gmra.mxu0 %v933
        %v952 = vpop.f32.mrf.mxu0
        %v953 = vadd.f32 0.0, %v952
        %954 = vdwg.mxu0
        %v956 = vsel %vm796, %v856, 0
        %958 = vmatpush.msra.mxu0 0.0
        %959 = vmatpush.msra.mxu0 0.0
        %960 = vmatpush.msra.mxu0 0.0
        %961 = vmatpush.msra.mxu0 0.0
        %962 = vmatpush.msra.mxu0 0.0
        %963 = vmatpush.msra.mxu0 0.0
        %964 = vmatpush.msra.mxu0 0.0
        %965 = vmatpush.msra.mxu0 0.0
        %966 = vmatpush.msra.mxu0 0.0
        %967 = vmatpush.msra.mxu0 0.0
        %968 = vmatpush.msra.mxu0 0.0
        %969 = vmatpush.msra.mxu0 0.0
        %970 = vmatpush.msra.mxu0 %v861
        %971 = vmatpush.msra.mxu0 %v860
        %972 = vmatpush.msra.mxu0 %v859
        %973 = vmatpush.msra.mxu0 %v858
        %974 = vmatmul.f32.gmra.mxu0 %v956
        %v975 = vpop.f32.mrf.mxu0
        %v976 = vadd.f32 %v953, %v975
        %977 = vdwg.mxu0
        %978 = vrot.lane.b32.xlu0 %v734, 64
        %v979 = vpop.permute.xlu0 %978
        %980 = vrot.lane.b32.xlu0 %v754, 64
        %v981 = vpop.permute.xlu0 %980
        %v982 = vsel %vm796, %v979, 0
        %v984 = vsel %vm796, %v981, 0
        %986 = vmatpush.xpose.msra.mxu0 0.0
        %987 = vmatpush.xpose.msra.mxu0 0.0
        %988 = vmatpush.xpose.msra.mxu0 0.0
        %989 = vmatpush.xpose.msra.mxu0 0.0
        %990 = vmatpush.xpose.msra.mxu0 0.0
        %991 = vmatpush.xpose.msra.mxu0 0.0
        %992 = vmatpush.xpose.msra.mxu0 0.0
        %993 = vmatpush.xpose.msra.mxu0 0.0
        %994 = vmatpush.xpose.msra.mxu0 0.0
        %995 = vmatpush.xpose.msra.mxu0 0.0
        %996 = vmatpush.xpose.msra.mxu0 0.0
        %997 = vmatpush.xpose.msra.mxu0 0.0
        %998 = vmatpush.xpose.msra.mxu0 0.0
        %999 = vmatpush.xpose.msra.mxu0 0.0
        %1000 = vmatpush.xpose.msra.mxu0 0.0
        %1001 = vmatpush.xpose.msra.mxu0 %v984
        %1002 = vmatmul.f32.gmra.mxu0 %v982
        %v1003 = vpop.f32.mrf.mxu0
        %v1004 = vadd.f32 0.0, %v1003
        %1005 = vdwg.mxu0
        %v1006 = vsel %vm823, %v1004, -inf
        %1007 = vmax.xlane.f32.xlu0 %v1006
        %v1008 = vpop.xlane.xlu0 %1007
        %v1009 = vsub.f32 %v1004, %v1008
        %v1010 = vmul.f32 %v1009, 1.442695
        %v1011 = vpow.pop %v1010
        %v1012 = vsel %vm823, %v1011, 0.0
        %1013 = vadd.xlane.f32.xlu0 %v1012
        %v1014 = vpop.xlane.xlu0 %1013
        %v1015 = vrcp.pop %v1014
        %v1016 = vmul.f32 %v1011, %v1015
        %1017 = vrot.lane.b32.xlu0 %v794, 64
        %v1018 = vpop.permute.xlu0 %1017
        %v1021 = vsel %vm823, %v1016, 0
        %1023 = vmatpush.msra.mxu0 0.0
        %1024 = vmatpush.msra.mxu0 0.0
        %1025 = vmatpush.msra.mxu0 0.0
        %1026 = vmatpush.msra.mxu0 0.0
        %1027 = vmatpush.msra.mxu0 0.0
        %1028 = vmatpush.msra.mxu0 0.0
        %1029 = vmatpush.msra.mxu0 0.0
        %1030 = vmatpush.msra.mxu0 0.0
        %1031 = vmatpush.msra.mxu0 0.0
        %1032 = vmatpush.msra.mxu0 0.0
        %1033 = vmatpush.msra.mxu0 0.0
        %1034 = vmatpush.msra.mxu0 0.0
        %1035 = vmatpush.msra.mxu0 0.0
        %1036 = vmatpush.msra.mxu0 0.0
        %1037 = vmatpush.msra.mxu0 0.0
        %1038 = vmatpush.msra.mxu0 %v1018
        %1039 = vmatmul.f32.gmra.mxu0 %v1021
        %v1040 = vpop.f32.mrf.mxu0
        %v1041 = vadd.f32 0.0, %v1040
        %1042 = vdwg.mxu0
        %v1043 = vld [vmem:[#allocation11 + $0x40] sm:$0xff]
        %v1044 = vld [vmem:[#allocation11 + $0x48] sm:$0xff]
        %v1045 = vld [vmem:[#allocation11 + $0x50] sm:$0xff]
        %v1046 = vld [vmem:[#allocation11 + $0x58] sm:$0xff]
        %v1048 = vsel %vm796, %v1041, 0
        %1050 = vmatpush.msra.mxu0 0.0
        %1051 = vmatpush.msra.mxu0 0.0
        %1052 = vmatpush.msra.mxu0 0.0
        %1053 = vmatpush.msra.mxu0 0.0
        %1054 = vmatpush.msra.mxu0 0.0
        %1055 = vmatpush.msra.mxu0 0.0
        %1056 = vmatpush.msra.mxu0 0.0
        %1057 = vmatpush.msra.mxu0 0.0
        %1058 = vmatpush.msra.mxu0 0.0
        %1059 = vmatpush.msra.mxu0 0.0
        %1060 = vmatpush.msra.mxu0 0.0
        %1061 = vmatpush.msra.mxu0 0.0
        %1062 = vmatpush.msra.mxu0 %v1046
        %1063 = vmatpush.msra.mxu0 %v1045
        %1064 = vmatpush.msra.mxu0 %v1044
        %1065 = vmatpush.msra.mxu0 %v1043
        %1066 = vmatmul.f32.gmra.mxu0 %v1048
        %v1067 = vpop.f32.mrf.mxu0
        %v1068 = vadd.f32 0.0, %v1067
        %1069 = vdwg.mxu0
        %v1070 = vadd.f32 %v976, %v1068
        %1071 = vrot.lane.b32.xlu0 %v734, 32
        %v1072 = vpop.permute.xlu0 %1071
        %1073 = vrot.lane.b32.xlu0 %v754, 32
        %v1074 = vpop.permute.xlu0 %1073
        %v1075 = vsel %vm796, %v1072, 0
        %v1077 = vsel %vm796, %v1074, 0
        %1079 = vmatpush.xpose.msra.mxu0 0.0
        %1080 = vmatpush.xpose.msra.mxu0 0.0
        %1081 = vmatpush.xpose.msra.mxu0 0.0
        %1082 = vmatpush.xpose.msra.mxu0 0.0
        %1083 = vmatpush.xpose.msra.mxu0 0.0
        %1084 = vmatpush.xpose.msra.mxu0 0.0
        %1085 = vmatpush.xpose.msra.mxu0 0.0
        %1086 = vmatpush.xpose.msra.mxu0 0.0
        %1087 = vmatpush.xpose.msra.mxu0 0.0
        %1088 = vmatpush.xpose.msra.mxu0 0.0
        %1089 = vmatpush.xpose.msra.mxu0 0.0
        %1090 = vmatpush.xpose.msra.mxu0 0.0
        %1091 = vmatpush.xpose.msra.mxu0 0.0
        %1092 = vmatpush.xpose.msra.mxu0 0.0
        %1093 = vmatpush.xpose.msra.mxu0 0.0
        %1094 = vmatpush.xpose.msra.mxu0 %v1077
        %1095 = vmatmul.f32.gmra.mxu0 %v1075
        %v1096 = vpop.f32.mrf.mxu0
        %v1097 = vadd.f32 0.0, %v1096
        %1098 = vdwg.mxu0
        %v1099 = vsel %vm823, %v1097, -inf
        %1100 = vmax.xlane.f32.xlu0 %v1099
        %v1101 = vpop.xlane.xlu0 %1100
        %v1102 = vsub.f32 %v1097, %v1101
        %v1103 = vmul.f32 %v1102, 1.442695
        %v1104 = vpow.pop %v1103
        %v1105 = vsel %vm823, %v1104, 0.0
        %1106 = vadd.xlane.f32.xlu0 %v1105
        %v1107 = vpop.xlane.xlu0 %1106
        %v1108 = vrcp.pop %v1107
        %v1109 = vmul.f32 %v1104, %v1108
        %1110 = vrot.lane.b32.xlu0 %v794, 32
        %v1111 = vpop.permute.xlu0 %1110
        %v1114 = vsel %vm823, %v1109, 0
        %1116 = vmatpush.msra.mxu0 0.0
        %1117 = vmatpush.msra.mxu0 0.0
        %1118 = vmatpush.msra.mxu0 0.0
        %1119 = vmatpush.msra.mxu0 0.0
        %1120 = vmatpush.msra.mxu0 0.0
        %1121 = vmatpush.msra.mxu0 0.0
        %1122 = vmatpush.msra.mxu0 0.0
        %1123 = vmatpush.msra.mxu0 0.0
        %1124 = vmatpush.msra.mxu0 0.0
        %1125 = vmatpush.msra.mxu0 0.0
        %1126 = vmatpush.msra.mxu0 0.0
        %1127 = vmatpush.msra.mxu0 0.0
        %1128 = vmatpush.msra.mxu0 0.0
        %1129 = vmatpush.msra.mxu0 0.0
        %1130 = vmatpush.msra.mxu0 0.0
        %1131 = vmatpush.msra.mxu0 %v1111
        %1132 = vmatmul.f32.gmra.mxu0 %v1114
        %v1133 = vpop.f32.mrf.mxu0
        %v1134 = vadd.f32 0.0, %v1133
        %1135 = vdwg.mxu0
        %v1136 = vld [vmem:[#allocation11 + $0x60] sm:$0xff]
        %v1137 = vld [vmem:[#allocation11 + $0x68] sm:$0xff]
        %v1138 = vld [vmem:[#allocation11 + $0x70] sm:$0xff]
        %v1139 = vld [vmem:[#allocation11 + $0x78] sm:$0xff]
        %v1141 = vsel %vm796, %v1134, 0
        %1143 = vmatpush.msra.mxu0 0.0
        %1144 = vmatpush.msra.mxu0 0.0
        %1145 = vmatpush.msra.mxu0 0.0
        %1146 = vmatpush.msra.mxu0 0.0
        %1147 = vmatpush.msra.mxu0 0.0
        %1148 = vmatpush.msra.mxu0 0.0
        %1149 = vmatpush.msra.mxu0 0.0
        %1150 = vmatpush.msra.mxu0 0.0
        %1151 = vmatpush.msra.mxu0 0.0
        %1152 = vmatpush.msra.mxu0 0.0
        %1153 = vmatpush.msra.mxu0 0.0
        %1154 = vmatpush.msra.mxu0 0.0
        %1155 = vmatpush.msra.mxu0 %v1139
        %1156 = vmatpush.msra.mxu0 %v1138
        %1157 = vmatpush.msra.mxu0 %v1137
        %1158 = vmatpush.msra.mxu0 %v1136
        %1159 = vmatmul.f32.gmra.mxu0 %v1141
        %v1160 = vpop.f32.mrf.mxu0
        %v1161 = vadd.f32 0.0, %v1160
        %1162 = vdwg.mxu0
        %v1163 = vadd.f32 %v1070, %v1161
        %v1164 = vld [vmem:[%s7] sm:$0x1]
        %v1166 = vperm.slane %v1164, 0
        %v1168 = vadd.f32 %v1163, %v1166
        %v1169 = vadd.f32 %v675, %v1168
        %1170 = vadd.xlane.f32.xlu0 %v1169
        %v1171 = vpop.xlane.xlu0 %1170
        %v1172 = vrcp.pop 128.0
        %v1173 = vmul.f32 128.0, %v1172
        %v1174 = vsub.f32 1.0, %v1173
        %v1175 = vmul.f32 %v1172, %v1174
        %v1176 = vadd.f32 %v1172, %v1175
        %vm1177 = vweird.f32 %v1172
        %v1178 = vsel %vm1177, %v1172, %v1176
        %v1179 = vmul.f32 %v1171, %v1178
        %v1180 = vsub.f32 %v1169, %v1179
        %v1181 = vmul.f32 %v1180, %v1180
        %1182 = vadd.xlane.f32.xlu0 %v1181
        %v1183 = vpop.xlane.xlu0 %1182
        %v1184 = vmul.f32 %v1183, %v1178
        %v1185 = vadd.f32 %v1184, 1e-05
        %v1186 = vrsqrt.pop %v1185
        %v1187 = vmul.f32 %v1186, %v1185
        %v1188 = vmul.f32 %v1187, %v1186
        %v1189 = vmul.f32 0.5, %v1188
        %v1190 = vsub.f32 1.5, %v1189
        %v1191 = vmul.f32 %v1186, %v1190
        %vm1192 = vweird.f32 %v1185
        %vm1193 = vweird.f32 %v1186
        %vm1194 = vmor %vm1192, %vm1193
        %v1195 = vsel %vm1194, %v1186, %v1191
        %v1196 = vmul.f32 %v1180, %v1195
        %v1197 = vld [vmem:[%s12] sm:$0x1]
        %v1199 = vperm.slane %v1197, 0
        %v1201 = vmul.f32 %v1196, %v1199
        %v1202 = vld [vmem:[%s13] sm:$0x1]
        %v1204 = vperm.slane %v1202, 0
        %v1206 = vadd.f32 %v1201, %v1204
        %v1207 = vld [vmem:[#allocation13] sm:$0xff]
        %v1208 = vld [vmem:[#allocation13 + $0x8] sm:$0xff]
        %v1209 = vld [vmem:[#allocation13 + $0x10] sm:$0xff]
        %v1210 = vld [vmem:[#allocation13 + $0x18] sm:$0xff]
        %v1211 = vld [vmem:[#allocation13 + $0x20] sm:$0xff]
        %v1212 = vld [vmem:[#allocation13 + $0x28] sm:$0xff]
        %v1213 = vld [vmem:[#allocation13 + $0x30] sm:$0xff]
        %v1214 = vld [vmem:[#allocation13 + $0x38] sm:$0xff]
        %v1215 = vld [vmem:[#allocation13 + $0x40] sm:$0xff]
        %v1216 = vld [vmem:[#allocation13 + $0x48] sm:$0xff]
        %v1217 = vld [vmem:[#allocation13 + $0x50] sm:$0xff]
        %v1218 = vld [vmem:[#allocation13 + $0x58] sm:$0xff]
        %v1219 = vld [vmem:[#allocation13 + $0x60] sm:$0xff]
        %v1220 = vld [vmem:[#allocation13 + $0x68] sm:$0xff]
        %v1221 = vld [vmem:[#allocation13 + $0x70] sm:$0xff]
        %v1222 = vld [vmem:[#allocation13 + $0x78] sm:$0xff]
        %v1223 = vld [vmem:[#allocation13 + $0x80] sm:$0xff]
        %v1224 = vld [vmem:[#allocation13 + $0x88] sm:$0xff]
        %v1225 = vld [vmem:[#allocation13 + $0x90] sm:$0xff]
        %v1226 = vld [vmem:[#allocation13 + $0x98] sm:$0xff]
        %v1227 = vld [vmem:[#allocation13 + $0xa0] sm:$0xff]
        %v1228 = vld [vmem:[#allocation13 + $0xa8] sm:$0xff]
        %v1229 = vld [vmem:[#allocation13 + $0xb0] sm:$0xff]
        %v1230 = vld [vmem:[#allocation13 + $0xb8] sm:$0xff]
        %v1231 = vld [vmem:[#allocation13 + $0xc0] sm:$0xff]
        %v1232 = vld [vmem:[#allocation13 + $0xc8] sm:$0xff]
        %v1233 = vld [vmem:[#allocation13 + $0xd0] sm:$0xff]
        %v1234 = vld [vmem:[#allocation13 + $0xd8] sm:$0xff]
        %v1235 = vld [vmem:[#allocation13 + $0xe0] sm:$0xff]
        %v1236 = vld [vmem:[#allocation13 + $0xe8] sm:$0xff]
        %v1237 = vld [vmem:[#allocation13 + $0xf0] sm:$0xff]
        %v1238 = vld [vmem:[#allocation13 + $0xf8] sm:$0xff]
        %v1239 = vld [vmem:[%s9] sm:$0x3]
        %v1241 = vperm.slane %v1239, 0
        %v1242 = vperm.slane %v1239, 1
        %1245 = vmatpush.msra.mxu0 %v1237
        %1246 = vmatpush.msra.mxu0 %v1235
        %1247 = vmatpush.msra.mxu0 %v1233
        %1248 = vmatpush.msra.mxu0 %v1231
        %1249 = vmatpush.msra.mxu0 %v1229
        %1250 = vmatpush.msra.mxu0 %v1227
        %1251 = vmatpush.msra.mxu0 %v1225
        %1252 = vmatpush.msra.mxu0 %v1223
        %1253 = vmatpush.msra.mxu0 %v1221
        %1254 = vmatpush.msra.mxu0 %v1219
        %1255 = vmatpush.msra.mxu0 %v1217
        %1256 = vmatpush.msra.mxu0 %v1215
        %1257 = vmatpush.msra.mxu0 %v1213
        %1258 = vmatpush.msra.mxu0 %v1211
        %1259 = vmatpush.msra.mxu0 %v1209
        %1260 = vmatpush.msra.mxu0 %v1207
        %1261 = vmatmul.f32.gmra.mxu0 %v1206
        %v1262 = vpop.f32.mrf.mxu0
        %v1263 = vadd.f32 %v1241, %v1262
        %1264 = vdwg.mxu0
        %1265 = vmatpush.msra.mxu0 %v1238
        %1266 = vmatpush.msra.mxu0 %v1236
        %1267 = vmatpush.msra.mxu0 %v1234
        %1268 = vmatpush.msra.mxu0 %v1232
        %1269 = vmatpush.msra.mxu0 %v1230
        %1270 = vmatpush.msra.mxu0 %v1228
        %1271 = vmatpush.msra.mxu0 %v1226
        %1272 = vmatpush.msra.mxu0 %v1224
        %1273 = vmatpush.msra.mxu0 %v1222
        %1274 = vmatpush.msra.mxu0 %v1220
        %1275 = vmatpush.msra.mxu0 %v1218
        %1276 = vmatpush.msra.mxu0 %v1216
        %1277 = vmatpush.msra.mxu0 %v1214
        %1278 = vmatpush.msra.mxu0 %v1212
        %1279 = vmatpush.msra.mxu0 %v1210
        %1280 = vmatpush.msra.mxu0 %v1208
        %1281 = vmatmul.f32.gmra.mxu0 %v1206
        %v1282 = vpop.f32.mrf.mxu0
        %v1283 = vadd.f32 %v1242, %v1282
        %1284 = vdwg.mxu0
        %v1285 = vmax.f32 %v1263, 0.0
        %v1286 = vmax.f32 %v1283, 0.0
        %v1287 = vld [vmem:[#allocation14] sm:$0xff]
        %v1288 = vld [vmem:[#allocation14 + $0x8] sm:$0xff]
        %v1289 = vld [vmem:[#allocation14 + $0x10] sm:$0xff]
        %v1290 = vld [vmem:[#allocation14 + $0x18] sm:$0xff]
        %v1291 = vld [vmem:[#allocation14 + $0x20] sm:$0xff]
        %v1292 = vld [vmem:[#allocation14 + $0x28] sm:$0xff]
        %v1293 = vld [vmem:[#allocation14 + $0x30] sm:$0xff]
        %v1294 = vld [vmem:[#allocation14 + $0x38] sm:$0xff]
        %v1295 = vld [vmem:[#allocation14 + $0x40] sm:$0xff]
        %v1296 = vld [vmem:[#allocation14 + $0x48] sm:$0xff]
        %v1297 = vld [vmem:[#allocation14 + $0x50] sm:$0xff]
        %v1298 = vld [vmem:[#allocation14 + $0x58] sm:$0xff]
        %v1299 = vld [vmem:[#allocation14 + $0x60] sm:$0xff]
        %v1300 = vld [vmem:[#allocation14 + $0x68] sm:$0xff]
        %v1301 = vld [vmem:[#allocation14 + $0x70] sm:$0xff]
        %v1302 = vld [vmem:[#allocation14 + $0x78] sm:$0xff]
        %v1303 = vld [vmem:[#allocation14 + $0x80] sm:$0xff]
        %v1304 = vld [vmem:[#allocation14 + $0x88] sm:$0xff]
        %v1305 = vld [vmem:[#allocation14 + $0x90] sm:$0xff]
        %v1306 = vld [vmem:[#allocation14 + $0x98] sm:$0xff]
        %v1307 = vld [vmem:[#allocation14 + $0xa0] sm:$0xff]
        %v1308 = vld [vmem:[#allocation14 + $0xa8] sm:$0xff]
        %v1309 = vld [vmem:[#allocation14 + $0xb0] sm:$0xff]
        %v1310 = vld [vmem:[#allocation14 + $0xb8] sm:$0xff]
        %v1311 = vld [vmem:[#allocation14 + $0xc0] sm:$0xff]
        %v1312 = vld [vmem:[#allocation14 + $0xc8] sm:$0xff]
        %v1313 = vld [vmem:[#allocation14 + $0xd0] sm:$0xff]
        %v1314 = vld [vmem:[#allocation14 + $0xd8] sm:$0xff]
        %v1315 = vld [vmem:[#allocation14 + $0xe0] sm:$0xff]
        %v1316 = vld [vmem:[#allocation14 + $0xe8] sm:$0xff]
        %v1317 = vld [vmem:[#allocation14 + $0xf0] sm:$0xff]
        %v1318 = vld [vmem:[#allocation14 + $0xf8] sm:$0xff]
        %v1319 = vld [vmem:[%s11] sm:$0x1]
        %v1321 = vperm.slane %v1319, 0
        %1323 = vmatpush.msra.mxu0 %v1302
        %1324 = vmatpush.msra.mxu0 %v1301
        %1325 = vmatpush.msra.mxu0 %v1300
        %1326 = vmatpush.msra.mxu0 %v1299
        %1327 = vmatpush.msra.mxu0 %v1298
        %1328 = vmatpush.msra.mxu0 %v1297
        %1329 = vmatpush.msra.mxu0 %v1296
        %1330 = vmatpush.msra.mxu0 %v1295
        %1331 = vmatpush.msra.mxu0 %v1294
        %1332 = vmatpush.msra.mxu0 %v1293
        %1333 = vmatpush.msra.mxu0 %v1292
        %1334 = vmatpush.msra.mxu0 %v1291
        %1335 = vmatpush.msra.mxu0 %v1290
        %1336 = vmatpush.msra.mxu0 %v1289
        %1337 = vmatpush.msra.mxu0 %v1288
        %1338 = vmatpush.msra.mxu0 %v1287
        %1339 = vmatmul.f32.gmra.mxu0 %v1285
        %v1340 = vpop.f32.mrf.mxu0
        %v1341 = vadd.f32 %v1321, %v1340
        %1342 = vdwg.mxu0
        %1343 = vmatpush.msra.mxu0 %v1318
        %1344 = vmatpush.msra.mxu0 %v1317
        %1345 = vmatpush.msra.mxu0 %v1316
        %1346 = vmatpush.msra.mxu0 %v1315
        %1347 = vmatpush.msra.mxu0 %v1314
        %1348 = vmatpush.msra.mxu0 %v1313
        %1349 = vmatpush.msra.mxu0 %v1312
        %1350 = vmatpush.msra.mxu0 %v1311
        %1351 = vmatpush.msra.mxu0 %v1310
        %1352 = vmatpush.msra.mxu0 %v1309
        %1353 = vmatpush.msra.mxu0 %v1308
        %1354 = vmatpush.msra.mxu0 %v1307
        %1355 = vmatpush.msra.mxu0 %v1306
        %1356 = vmatpush.msra.mxu0 %v1305
        %1357 = vmatpush.msra.mxu0 %v1304
        %1358 = vmatpush.msra.mxu0 %v1303
        %1359 = vmatmul.f32.gmra.mxu0 %v1286
        %v1360 = vpop.f32.mrf.mxu0
        %v1361 = vadd.f32 %v1341, %v1360
        %1362 = vdwg.mxu0
        %v1363 = vadd.f32 %v1206, %v1361
        %1364 = vadd.xlane.f32.xlu0 %v1363
        %v1365 = vpop.xlane.xlu0 %1364
        %v1366 = vmul.f32 %v1365, %v1178
        %v1367 = vsub.f32 %v1363, %v1366
        %v1368 = vmul.f32 %v1367, %v1367
        %1369 = vadd.xlane.f32.xlu0 %v1368
        %v1370 = vpop.xlane.xlu0 %1369
        %v1371 = vmul.f32 %v1370, %v1178
        %v1372 = vadd.f32 %v1371, 1e-05
        %v1373 = vrsqrt.pop %v1372
        %v1374 = vmul.f32 %v1373, %v1372
        %v1375 = vmul.f32 %v1374, %v1373
        %v1376 = vmul.f32 0.5, %v1375
        %v1377 = vsub.f32 1.5, %v1376
        %v1378 = vmul.f32 %v1373, %v1377
        %vm1379 = vweird.f32 %v1372
        %vm1380 = vweird.f32 %v1373
        %vm1381 = vmor %vm1379, %vm1380
        %v1382 = vsel %vm1381, %v1373, %v1378
        %v1383 = vmul.f32 %v1367, %v1382
        %v1384 = vld [vmem:[%s14] sm:$0x1]
        %v1386 = vperm.slane %v1384, 0
        %v1388 = vmul.f32 %v1383, %v1386
        %v1389 = vld [vmem:[%s15] sm:$0x1]
        %v1391 = vperm.slane %v1389, 0
        %v1393 = vadd.f32 %v1388, %v1391
        %1394 = vst [vmem:[%s674] sm:$0xff] %v1393
        %s1395 = sand.u32 %s393, 1
        %s1396 = scalar_lea.sflag [#allocation4], %s1395
        %s1397 = sand.u32 %s393, 1
        %s1398 = smul.addr %s1397, 8
        %s1399 = scalar_lea.vmem [#allocation16], %s1398
        // Predicated region
        $region117: #{tpu_custom_call.1} parent=83 // pred_check
          %p1400 = pneg %p403
        $region118: #{tpu_custom_call.1} parent=83 // pred_check_branch
          %1402 = sbr.rel (%p1400) target = $region120
        $region119: #{tpu_custom_call.1} parent=83 // pred_region
          %1404 = vsyncadd %s1396, 0
          %s1405 = smul.addr %s39, 8
          %s1406 = scalar_lea.hbm %s16, %s1405
          %s1408 = sshll.u32 %s1399, 4
          %s1409 = int_to_ptr.vmem [resolvable:$true] %s1408
          %s1410 = sshll.u32 %s1406, 4
          %s1411 = int_to_ptr.hbm [resolvable:$true] %s1410
          %1413 = dma.vmem_to_hbm [thread:$0]  %s1409, 128, %s1411, %s1396
        $region120: #{tpu_custom_call.1} parent=83 // pred_fallthru
          _
      $region84: #{tpu_custom_call.1} parent=5 // pred_fallthru
        _
      %p1414 = scmp.le.s32.totalorder 2, %s34
      // Predicated region
      $region121: #{tpu_custom_call.1} parent=5 // pred_check
        %p1415 = pneg %p1414
      $region122: #{tpu_custom_call.1} parent=5 // pred_check_branch
        %1417 = sbr.rel (%p1415) target = $region124
      $region123: #{tpu_custom_call.1} parent=5 // pred_region
        %s1418 = ssub.s32 %s34, 2
        // Predicated region
        $region125: #{tpu_custom_call.1} parent=123 // pred_check
          %p1419 = pneg %p409
        $region126: #{tpu_custom_call.1} parent=123 // pred_check_branch
          %1421 = sbr.rel (%p1419) target = $region128
        $region127: #{tpu_custom_call.1} parent=123 // pred_region
          %s1422 = sand.u32 %s394, 1
          %s1423 = scalar_lea.sflag [#allocation4], %s1422
          %s1424 = sand.u32 %s394, 1
          %s1425 = smul.addr %s1424, 8
          %s1426 = scalar_lea.vmem [#allocation16], %s1425
          %1428 = dma.done %s1423, 128
        $region128: #{tpu_custom_call.1} parent=123 // pred_fallthru
          _
      $region124: #{tpu_custom_call.1} parent=5 // pred_fallthru
        _
    $region6: #{tpu_custom_call.1} parent=1 // loop_footer
      %s38 = sadd.s32 1, %s34
    $region7: #{tpu_custom_call.1} parent=1 // loop_footer_branch
      %33 = sbr.rel target = $region3
    $region8: #{tpu_custom_call.1} parent=1 // loop_exit
      _
    %1429 = vsyncpa [#allocation3], 1
    %s1430 = scalar_lea.sflag [#allocation3], 1
    %1431 = vsyncpa %s1430, 1
    %1432 = vsyncpa [#allocation6], 1
    %s1433 = scalar_lea.sflag [#allocation6], 1
    %1434 = vsyncpa %s1433, 1
    %1435 = vsyncpa [#allocation9], 1
    %1436 = vsyncpa [#allocation12], 1
    %1437 = vsyncpa [#allocation15], 1
    %1438 = vsyncpa [#allocation4], 1
    %s1439 = scalar_lea.sflag [#allocation4], 1
    %1440 = vsyncpa %s1439, 1

</llo_original>
